<compile_context>
chip_gen: v7x
topology: tpu7x:2x2x1
jax: 0.10.0
libtpu: 0.0.40
codegen_flags: <defaults>
</compile_context>

<pallas_src>
import jax
import jax.numpy as jnp
from jax.experimental import pallas as pl
from jax.experimental.pallas import tpu as pltpu

EPS = 1e-5

LAYER_DIMS = ((1, 32, 7), (32, 64, 3), (64, 128, 3), (128, 256, 3), (256, 512, 3))
POOLS = ("max2", "none", "none", "none", "adapt4")


def _conv_bn_relu(a, w_ref, s_ref, t_ref):
    """a: (L_in, C_in) f32 value; w_ref: (K, C_in, C_out) ref. -> (L_out, C_out)."""
    L_in, C_in = a.shape
    K, _, C_out = w_ref.shape
    L_out = L_in - K + 1
    acc = jnp.zeros((L_out, C_out), jnp.float32)
    for k in range(K):
        xs = a[k:k + L_out, :]
        if C_in == 1:
            # Degenerate contraction dim: VPU broadcast multiply-add.
            acc = acc + xs * w_ref[k]
        else:
            acc = acc + jnp.dot(xs, w_ref[k], preferred_element_type=jnp.float32)
    # Folded BatchNorm (eval) + conv bias, then ReLU.
    return jnp.maximum(acc * s_ref[...] + t_ref[...], 0.0)


def _fused_kernel(x_ref,
                  w1_ref, s1_ref, t1_ref,
                  w2_ref, s2_ref, t2_ref,
                  w3_ref, s3_ref, t3_ref,
                  w4_ref, s4_ref, t4_ref,
                  w5_ref, s5_ref, t5_ref,
                  o_ref, pool_scr):
    # ---- layer 1: Conv1d(1,32,7) + BN + ReLU + MaxPool1d(2,2) ----
    a = _conv_bn_relu(x_ref[0], w1_ref, s1_ref, t1_ref)          # (58, 32)
    pool_scr[...] = a
    half = a.shape[0] // 2
    a = jnp.maximum(pool_scr[pl.ds(0, half, stride=2), :],        # even rows
                    pool_scr[pl.ds(1, half, stride=2), :])        # odd rows

    # ---- layers 2..5: Conv1d(k=3) + BN + ReLU ----
    a = _conv_bn_relu(a, w2_ref, s2_ref, t2_ref)                  # (27, 64)
    a = _conv_bn_relu(a, w3_ref, s3_ref, t3_ref)                  # (25, 128)
    a = _conv_bn_relu(a, w4_ref, s4_ref, t4_ref)                  # (23, 256)
    a = _conv_bn_relu(a, w5_ref, s5_ref, t5_ref)                  # (21, 512)

    # ---- AdaptiveMaxPool1d(4): masked sublane max-reductions ----
    L5 = a.shape[0]
    rows = jax.lax.broadcasted_iota(jnp.int32, a.shape, 0)
    bins = []
    for i in range(4):
        lo = (i * L5) // 4
        hi = -((-(i + 1) * L5) // 4)
        mask = (rows >= lo) & (rows < hi)
        bins.append(jnp.max(jnp.where(mask, a, -jnp.inf), axis=0, keepdims=True))
    o_ref[...] = jnp.concatenate(bins, axis=0)[None].astype(o_ref.dtype)


def fused_forward(x_nwc, prepared):
    """x_nwc: (B, L_in, 1); prepared: 5 tuples (w_kio, scale(1,C), shift(1,C))."""
    B, L_in, C_in = x_nwc.shape
    w1 = prepared[0][0]
    K1, _, C1 = w1.shape
    L1 = L_in - K1 + 1
    assert L1 % 2 == 0, "MaxPool1d(2,2) assumes an even layer-1 conv length"
    C_out = prepared[-1][0].shape[2]

    flat = [x_nwc]
    for p in prepared:
        flat.extend(p)

    in_specs = [pl.BlockSpec((1, L_in, C_in), lambda b: (b, 0, 0))]
    for arr in flat[1:]:
        # Constant block index -> DMA'd once, stays resident in VMEM.
        in_specs.append(pl.BlockSpec(arr.shape, lambda b, n=arr.ndim: (0,) * n))

    out = pl.pallas_call(
        _fused_kernel,
        out_shape=jax.ShapeDtypeStruct((B, 4, C_out), jnp.float32),
        grid=(B,),
        in_specs=in_specs,
        out_specs=pl.BlockSpec((1, 4, C_out), lambda b: (b, 0, 0)),
        scratch_shapes=[pltpu.VMEM((L1, C1), jnp.float32)],
        compiler_params=pltpu.CompilerParams(
            dimension_semantics=("parallel",)),
    )(*flat)
    return out  # (B, 4, C_out)


def prepare_params(params):
    """One-time prep: fold BN into scale/shift, transpose weights to (K,Cin,Cout)."""
    prepped = []
    for (w, b, gamma, beta, mean, var) in params:
        scale = gamma / jnp.sqrt(var + EPS)
        shift = (b - mean) * scale + beta
        w_kio = jnp.transpose(w, (2, 1, 0))      # (Cout,Cin,K) -> (K,Cin,Cout)
        prepped.append((w_kio, scale.reshape(1, -1), shift.reshape(1, -1)))
    return prepped


@jax.jit
def feature_extractor(x_ncw, prepared):
    B = x_ncw.shape[0]
    x_nwc = jnp.transpose(x_ncw, (0, 2, 1))      # NCW -> NWC
    out = fused_forward(x_nwc, prepared)         # (B, 4, 512)
    # Match torch Flatten over (B, 512, 4).
    return jnp.transpose(out, (0, 2, 1)).reshape(B, -1)


def init_params(key):
    params = []
    for (cin, cout, k) in LAYER_DIMS:
        key, kw, kb, kg, kbt, km, kv = jax.random.split(key, 7)
        w = 0.1 * jax.random.normal(kw, (cout, cin, k), jnp.float32)  # (Cout,Cin,K)
        b = 0.01 * jax.random.normal(kb, (cout,), jnp.float32)
        gamma = 1.0 + 0.1 * jax.random.normal(kg, (cout,), jnp.float32)
        beta = 0.1 * jax.random.normal(kbt, (cout,), jnp.float32)
        mean = 0.05 * jax.random.normal(km, (cout,), jnp.float32)
        var = 1.0 + 0.1 * jax.random.uniform(kv, (cout,), jnp.float32)
        params.append((w, b, gamma, beta, mean, var))
    return params


def ref_forward(x_ncw, params):
    a = x_ncw
    for (w, b, g, bt, mu, var), pool in zip(params, POOLS):
        y = jax.lax.conv_general_dilated(
            a, w, (1,), "VALID", dimension_numbers=("NCH", "OIH", "NCH"))
        y = y + b[None, :, None]
        y = (y - mu[None, :, None]) * (g / jnp.sqrt(var + EPS))[None, :, None] \
            + bt[None, :, None]
        y = jnp.maximum(y, 0.0)
        if pool == "max2":
            B_, C_, L_ = y.shape
            Lp = L_ // 2
            y = y[:, :, :2 * Lp].reshape(B_, C_, Lp, 2).max(-1)
        elif pool == "adapt4":
            B_, C_, L_ = y.shape
            bins = []
            for i in range(4):
                lo = (i * L_) // 4
                hi = -((-(i + 1) * L_) // 4)
                bins.append(y[:, :, lo:hi].max(-1, keepdims=True))
            y = jnp.concatenate(bins, -1)
        a = y
    return a.reshape(a.shape[0], -1)


if __name__ == "__main__":
    key = jax.random.PRNGKey(0)
    kx, kp = jax.random.split(key)
    B, C_in, L = 2, 1, 64
    x = jax.random.normal(kx, (B, C_in, L), jnp.float32)  # PyTorch NCW input
    params = init_params(kp)
    prepared = prepare_params(params)

    out = feature_extractor(x, prepared)
    out = jax.block_until_ready(out)
    assert out.shape == (B, 2048), out.shape

    ref = ref_forward(x, params)
    assert jnp.allclose(out, ref, rtol=1e-4, atol=1e-4), \
        float(jnp.max(jnp.abs(out - ref)))
    print("KERNEL_OK")
</pallas_src>

<mosaic_0001>
module attributes {stable_mosaic.version = 11 : i64} {
  func.func @_fused_kernel(%arg0: i32, %arg1: memref<1x64x1xf32, #tpu.memory_space<vmem>>, %arg2: memref<7x1x32xf32, #tpu.memory_space<vmem>>, %arg3: memref<1x32xf32, #tpu.memory_space<vmem>>, %arg4: memref<1x32xf32, #tpu.memory_space<vmem>>, %arg5: memref<3x32x64xf32, #tpu.memory_space<vmem>>, %arg6: memref<1x64xf32, #tpu.memory_space<vmem>>, %arg7: memref<1x64xf32, #tpu.memory_space<vmem>>, %arg8: memref<3x64x128xf32, #tpu.memory_space<vmem>>, %arg9: memref<1x128xf32, #tpu.memory_space<vmem>>, %arg10: memref<1x128xf32, #tpu.memory_space<vmem>>, %arg11: memref<3x128x256xf32, #tpu.memory_space<vmem>>, %arg12: memref<1x256xf32, #tpu.memory_space<vmem>>, %arg13: memref<1x256xf32, #tpu.memory_space<vmem>>, %arg14: memref<3x256x512xf32, #tpu.memory_space<vmem>>, %arg15: memref<1x512xf32, #tpu.memory_space<vmem>>, %arg16: memref<1x512xf32, #tpu.memory_space<vmem>>, %arg17: memref<1x4x512xf32, #tpu.memory_space<vmem>>, %arg18: memref<58x32xf32, #tpu.memory_space<vmem>>) attributes {dimension_semantics = [#tpu.dimension_semantics<parallel>], iteration_bounds = array<i64: 2>, scalar_prefetch = 0 : i64, scratch_operands = 1 : i64, tpu.core_type = #tpu.core_type<tc>, window_params = [{transform_indices = @transform_0, window_bounds = array<i64: 1, 64, 1>}, {pipeline_mode = #tpu.pipeline_mode<synchronous>, transform_indices = @transform_1, window_bounds = array<i64: 7, 1, 32>}, {pipeline_mode = #tpu.pipeline_mode<synchronous>, transform_indices = @transform_2, window_bounds = array<i64: 1, 32>}, {pipeline_mode = #tpu.pipeline_mode<synchronous>, transform_indices = @transform_3, window_bounds = array<i64: 1, 32>}, {pipeline_mode = #tpu.pipeline_mode<synchronous>, transform_indices = @transform_4, window_bounds = array<i64: 3, 32, 64>}, {pipeline_mode = #tpu.pipeline_mode<synchronous>, transform_indices = @transform_5, window_bounds = array<i64: 1, 64>}, {pipeline_mode = #tpu.pipeline_mode<synchronous>, transform_indices = @transform_6, window_bounds = array<i64: 1, 64>}, {pipeline_mode = #tpu.pipeline_mode<synchronous>, transform_indices = @transform_7, window_bounds = array<i64: 3, 64, 128>}, {pipeline_mode = #tpu.pipeline_mode<synchronous>, transform_indices = @transform_8, window_bounds = array<i64: 1, 128>}, {pipeline_mode = #tpu.pipeline_mode<synchronous>, transform_indices = @transform_9, window_bounds = array<i64: 1, 128>}, {pipeline_mode = #tpu.pipeline_mode<synchronous>, transform_indices = @transform_10, window_bounds = array<i64: 3, 128, 256>}, {pipeline_mode = #tpu.pipeline_mode<synchronous>, transform_indices = @transform_11, window_bounds = array<i64: 1, 256>}, {pipeline_mode = #tpu.pipeline_mode<synchronous>, transform_indices = @transform_12, window_bounds = array<i64: 1, 256>}, {pipeline_mode = #tpu.pipeline_mode<synchronous>, transform_indices = @transform_13, window_bounds = array<i64: 3, 256, 512>}, {pipeline_mode = #tpu.pipeline_mode<synchronous>, transform_indices = @transform_14, window_bounds = array<i64: 1, 512>}, {pipeline_mode = #tpu.pipeline_mode<synchronous>, transform_indices = @transform_15, window_bounds = array<i64: 1, 512>}, {transform_indices = @transform_16, window_bounds = array<i64: 1, 4, 512>}]} {
    %c0 = arith.constant 0 : index
    %c0_0 = arith.constant 0 : index
    %c0_1 = arith.constant 0 : index
    %0 = vector.load %arg1[%c0, %c0_0, %c0_1] : memref<1x64x1xf32, #tpu.memory_space<vmem>>, vector<1x64x1xf32>
    %1 = vector.shape_cast %0 : vector<1x64x1xf32> to vector<64x1xf32>
    %cst = arith.constant 0.000000e+00 : f32
    %2 = vector.broadcast %cst : f32 to vector<58x32xf32>
    %3 = vector.extract_strided_slice %1 {offsets = [0, 0], sizes = [58, 1], strides = [1, 1]} : vector<64x1xf32> to vector<58x1xf32>
    %c0_2 = arith.constant 0 : index
    %c0_3 = arith.constant 0 : index
    %c0_4 = arith.constant 0 : index
    %4 = vector.load %arg2[%c0_2, %c0_3, %c0_4] : memref<7x1x32xf32, #tpu.memory_space<vmem>>, vector<1x1x32xf32>
    %5 = vector.shape_cast %4 : vector<1x1x32xf32> to vector<1x32xf32>
    %6 = vector.broadcast %3 : vector<58x1xf32> to vector<58x32xf32>
    %7 = vector.broadcast %5 : vector<1x32xf32> to vector<58x32xf32>
    %8 = arith.mulf %6, %7 : vector<58x32xf32>
    %9 = arith.addf %2, %8 : vector<58x32xf32>
    %10 = vector.extract_strided_slice %1 {offsets = [1, 0], sizes = [58, 1], strides = [1, 1]} : vector<64x1xf32> to vector<58x1xf32>
    %c1 = arith.constant 1 : index
    %c0_5 = arith.constant 0 : index
    %c0_6 = arith.constant 0 : index
    %11 = vector.load %arg2[%c1, %c0_5, %c0_6] : memref<7x1x32xf32, #tpu.memory_space<vmem>>, vector<1x1x32xf32>
    %12 = vector.shape_cast %11 : vector<1x1x32xf32> to vector<1x32xf32>
    %13 = vector.broadcast %10 : vector<58x1xf32> to vector<58x32xf32>
    %14 = vector.broadcast %12 : vector<1x32xf32> to vector<58x32xf32>
    %15 = arith.mulf %13, %14 : vector<58x32xf32>
    %16 = arith.addf %9, %15 : vector<58x32xf32>
    %17 = vector.extract_strided_slice %1 {offsets = [2, 0], sizes = [58, 1], strides = [1, 1]} : vector<64x1xf32> to vector<58x1xf32>
    %c2 = arith.constant 2 : index
    %c0_7 = arith.constant 0 : index
    %c0_8 = arith.constant 0 : index
    %18 = vector.load %arg2[%c2, %c0_7, %c0_8] : memref<7x1x32xf32, #tpu.memory_space<vmem>>, vector<1x1x32xf32>
    %19 = vector.shape_cast %18 : vector<1x1x32xf32> to vector<1x32xf32>
    %20 = vector.broadcast %17 : vector<58x1xf32> to vector<58x32xf32>
    %21 = vector.broadcast %19 : vector<1x32xf32> to vector<58x32xf32>
    %22 = arith.mulf %20, %21 : vector<58x32xf32>
    %23 = arith.addf %16, %22 : vector<58x32xf32>
    %24 = vector.extract_strided_slice %1 {offsets = [3, 0], sizes = [58, 1], strides = [1, 1]} : vector<64x1xf32> to vector<58x1xf32>
    %c3 = arith.constant 3 : index
    %c0_9 = arith.constant 0 : index
    %c0_10 = arith.constant 0 : index
    %25 = vector.load %arg2[%c3, %c0_9, %c0_10] : memref<7x1x32xf32, #tpu.memory_space<vmem>>, vector<1x1x32xf32>
    %26 = vector.shape_cast %25 : vector<1x1x32xf32> to vector<1x32xf32>
    %27 = vector.broadcast %24 : vector<58x1xf32> to vector<58x32xf32>
    %28 = vector.broadcast %26 : vector<1x32xf32> to vector<58x32xf32>
    %29 = arith.mulf %27, %28 : vector<58x32xf32>
    %30 = arith.addf %23, %29 : vector<58x32xf32>
    %31 = vector.extract_strided_slice %1 {offsets = [4, 0], sizes = [58, 1], strides = [1, 1]} : vector<64x1xf32> to vector<58x1xf32>
    %c4 = arith.constant 4 : index
    %c0_11 = arith.constant 0 : index
    %c0_12 = arith.constant 0 : index
    %32 = vector.load %arg2[%c4, %c0_11, %c0_12] : memref<7x1x32xf32, #tpu.memory_space<vmem>>, vector<1x1x32xf32>
    %33 = vector.shape_cast %32 : vector<1x1x32xf32> to vector<1x32xf32>
    %34 = vector.broadcast %31 : vector<58x1xf32> to vector<58x32xf32>
    %35 = vector.broadcast %33 : vector<1x32xf32> to vector<58x32xf32>
    %36 = arith.mulf %34, %35 : vector<58x32xf32>
    %37 = arith.addf %30, %36 : vector<58x32xf32>
    %38 = vector.extract_strided_slice %1 {offsets = [5, 0], sizes = [58, 1], strides = [1, 1]} : vector<64x1xf32> to vector<58x1xf32>
    %c5 = arith.constant 5 : index
    %c0_13 = arith.constant 0 : index
    %c0_14 = arith.constant 0 : index
    %39 = vector.load %arg2[%c5, %c0_13, %c0_14] : memref<7x1x32xf32, #tpu.memory_space<vmem>>, vector<1x1x32xf32>
    %40 = vector.shape_cast %39 : vector<1x1x32xf32> to vector<1x32xf32>
    %41 = vector.broadcast %38 : vector<58x1xf32> to vector<58x32xf32>
    %42 = vector.broadcast %40 : vector<1x32xf32> to vector<58x32xf32>
    %43 = arith.mulf %41, %42 : vector<58x32xf32>
    %44 = arith.addf %37, %43 : vector<58x32xf32>
    %45 = vector.extract_strided_slice %1 {offsets = [6, 0], sizes = [58, 1], strides = [1, 1]} : vector<64x1xf32> to vector<58x1xf32>
    %c6 = arith.constant 6 : index
    %c0_15 = arith.constant 0 : index
    %c0_16 = arith.constant 0 : index
    %46 = vector.load %arg2[%c6, %c0_15, %c0_16] : memref<7x1x32xf32, #tpu.memory_space<vmem>>, vector<1x1x32xf32>
    %47 = vector.shape_cast %46 : vector<1x1x32xf32> to vector<1x32xf32>
    %48 = vector.broadcast %45 : vector<58x1xf32> to vector<58x32xf32>
    %49 = vector.broadcast %47 : vector<1x32xf32> to vector<58x32xf32>
    %50 = arith.mulf %48, %49 : vector<58x32xf32>
    %51 = arith.addf %44, %50 : vector<58x32xf32>
    %c0_17 = arith.constant 0 : index
    %c0_18 = arith.constant 0 : index
    %52 = vector.load %arg3[%c0_17, %c0_18] : memref<1x32xf32, #tpu.memory_space<vmem>>, vector<1x32xf32>
    %53 = vector.broadcast %52 : vector<1x32xf32> to vector<58x32xf32>
    %54 = arith.mulf %51, %53 : vector<58x32xf32>
    %c0_19 = arith.constant 0 : index
    %c0_20 = arith.constant 0 : index
    %55 = vector.load %arg4[%c0_19, %c0_20] : memref<1x32xf32, #tpu.memory_space<vmem>>, vector<1x32xf32>
    %56 = vector.broadcast %55 : vector<1x32xf32> to vector<58x32xf32>
    %57 = arith.addf %54, %56 : vector<58x32xf32>
    %cst_21 = arith.constant 0.000000e+00 : f32
    %58 = vector.broadcast %cst_21 : f32 to vector<58x32xf32>
    %59 = arith.maximumf %57, %58 : vector<58x32xf32>
    %c0_22 = arith.constant 0 : index
    %c0_23 = arith.constant 0 : index
    %60 = vector.load %arg18[%c0_22, %c0_23] : memref<58x32xf32, #tpu.memory_space<vmem>>, vector<58x32xf32>
    tpu.vector_store %arg18[%c0_22, %c0_23], %59 {strides = array<i32>} : memref<58x32xf32, #tpu.memory_space<vmem>>, vector<58x32xf32>,
    %c0_24 = arith.constant 0 : index
    %c0_25 = arith.constant 0 : index
    %61 = tpu.strided_load %arg18[%c0_24, %c0_25] {strides = array<i32: 2, 1>} : memref<58x32xf32, #tpu.memory_space<vmem>>, vector<29x32xf32>
    %c1_26 = arith.constant 1 : index
    %c0_27 = arith.constant 0 : index
    %62 = tpu.strided_load %arg18[%c1_26, %c0_27] {strides = array<i32: 2, 1>} : memref<58x32xf32, #tpu.memory_space<vmem>>, vector<29x32xf32>
    %63 = arith.maximumf %61, %62 : vector<29x32xf32>
    %cst_28 = arith.constant 0.000000e+00 : f32
    %64 = vector.broadcast %cst_28 : f32 to vector<27x64xf32>
    %65 = vector.extract_strided_slice %63 {offsets = [0, 0], sizes = [27, 32], strides = [1, 1]} : vector<29x32xf32> to vector<27x32xf32>
    %c0_29 = arith.constant 0 : index
    %c0_30 = arith.constant 0 : index
    %c0_31 = arith.constant 0 : index
    %66 = vector.load %arg5[%c0_29, %c0_30, %c0_31] : memref<3x32x64xf32, #tpu.memory_space<vmem>>, vector<1x32x64xf32>
    %67 = vector.shape_cast %66 : vector<1x32x64xf32> to vector<32x64xf32>
    %cst_32 = arith.constant dense<0.000000e+00> : vector<27x64xf32>
    %68 = tpu.matmul %65, %67, %cst_32 {dimension_numbers = #tpu.dot_dimension_numbers<[1], [0], [0], [1], [0, 0, 1, 1], [], []>} : vector<27x32xf32>, vector<32x64xf32>, vector<27x64xf32> -> vector<27x64xf32>
    %69 = arith.addf %64, %68 : vector<27x64xf32>
    %70 = vector.extract_strided_slice %63 {offsets = [1, 0], sizes = [27, 32], strides = [1, 1]} : vector<29x32xf32> to vector<27x32xf32>
    %c1_33 = arith.constant 1 : index
    %c0_34 = arith.constant 0 : index
    %c0_35 = arith.constant 0 : index
    %71 = vector.load %arg5[%c1_33, %c0_34, %c0_35] : memref<3x32x64xf32, #tpu.memory_space<vmem>>, vector<1x32x64xf32>
    %72 = vector.shape_cast %71 : vector<1x32x64xf32> to vector<32x64xf32>
    %cst_36 = arith.constant dense<0.000000e+00> : vector<27x64xf32>
    %73 = tpu.matmul %70, %72, %cst_36 {dimension_numbers = #tpu.dot_dimension_numbers<[1], [0], [0], [1], [0, 0, 1, 1], [], []>} : vector<27x32xf32>, vector<32x64xf32>, vector<27x64xf32> -> vector<27x64xf32>
    %74 = arith.addf %69, %73 : vector<27x64xf32>
    %75 = vector.extract_strided_slice %63 {offsets = [2, 0], sizes = [27, 32], strides = [1, 1]} : vector<29x32xf32> to vector<27x32xf32>
    %c2_37 = arith.constant 2 : index
    %c0_38 = arith.constant 0 : index
    %c0_39 = arith.constant 0 : index
    %76 = vector.load %arg5[%c2_37, %c0_38, %c0_39] : memref<3x32x64xf32, #tpu.memory_space<vmem>>, vector<1x32x64xf32>
    %77 = vector.shape_cast %76 : vector<1x32x64xf32> to vector<32x64xf32>
    %cst_40 = arith.constant dense<0.000000e+00> : vector<27x64xf32>
    %78 = tpu.matmul %75, %77, %cst_40 {dimension_numbers = #tpu.dot_dimension_numbers<[1], [0], [0], [1], [0, 0, 1, 1], [], []>} : vector<27x32xf32>, vector<32x64xf32>, vector<27x64xf32> -> vector<27x64xf32>
    %79 = arith.addf %74, %78 : vector<27x64xf32>
    %c0_41 = arith.constant 0 : index
    %c0_42 = arith.constant 0 : index
    %80 = vector.load %arg6[%c0_41, %c0_42] : memref<1x64xf32, #tpu.memory_space<vmem>>, vector<1x64xf32>
    %81 = vector.broadcast %80 : vector<1x64xf32> to vector<27x64xf32>
    %82 = arith.mulf %79, %81 : vector<27x64xf32>
    %c0_43 = arith.constant 0 : index
    %c0_44 = arith.constant 0 : index
    %83 = vector.load %arg7[%c0_43, %c0_44] : memref<1x64xf32, #tpu.memory_space<vmem>>, vector<1x64xf32>
    %84 = vector.broadcast %83 : vector<1x64xf32> to vector<27x64xf32>
    %85 = arith.addf %82, %84 : vector<27x64xf32>
    %cst_45 = arith.constant 0.000000e+00 : f32
    %86 = vector.broadcast %cst_45 : f32 to vector<27x64xf32>
    %87 = arith.maximumf %85, %86 : vector<27x64xf32>
    %cst_46 = arith.constant 0.000000e+00 : f32
    %88 = vector.broadcast %cst_46 : f32 to vector<25x128xf32>
    %89 = vector.extract_strided_slice %87 {offsets = [0, 0], sizes = [25, 64], strides = [1, 1]} : vector<27x64xf32> to vector<25x64xf32>
    %c0_47 = arith.constant 0 : index
    %c0_48 = arith.constant 0 : index
    %c0_49 = arith.constant 0 : index
    %90 = vector.load %arg8[%c0_47, %c0_48, %c0_49] : memref<3x64x128xf32, #tpu.memory_space<vmem>>, vector<1x64x128xf32>
    %91 = vector.shape_cast %90 : vector<1x64x128xf32> to vector<64x128xf32>
    %cst_50 = arith.constant dense<0.000000e+00> : vector<25x128xf32>
    %92 = tpu.matmul %89, %91, %cst_50 {dimension_numbers = #tpu.dot_dimension_numbers<[1], [0], [0], [1], [0, 0, 1, 1], [], []>} : vector<25x64xf32>, vector<64x128xf32>, vector<25x128xf32> -> vector<25x128xf32>
    %93 = arith.addf %88, %92 : vector<25x128xf32>
    %94 = vector.extract_strided_slice %87 {offsets = [1, 0], sizes = [25, 64], strides = [1, 1]} : vector<27x64xf32> to vector<25x64xf32>
    %c1_51 = arith.constant 1 : index
    %c0_52 = arith.constant 0 : index
    %c0_53 = arith.constant 0 : index
    %95 = vector.load %arg8[%c1_51, %c0_52, %c0_53] : memref<3x64x128xf32, #tpu.memory_space<vmem>>, vector<1x64x128xf32>
    %96 = vector.shape_cast %95 : vector<1x64x128xf32> to vector<64x128xf32>
    %cst_54 = arith.constant dense<0.000000e+00> : vector<25x128xf32>
    %97 = tpu.matmul %94, %96, %cst_54 {dimension_numbers = #tpu.dot_dimension_numbers<[1], [0], [0], [1], [0, 0, 1, 1], [], []>} : vector<25x64xf32>, vector<64x128xf32>, vector<25x128xf32> -> vector<25x128xf32>
    %98 = arith.addf %93, %97 : vector<25x128xf32>
    %99 = vector.extract_strided_slice %87 {offsets = [2, 0], sizes = [25, 64], strides = [1, 1]} : vector<27x64xf32> to vector<25x64xf32>
    %c2_55 = arith.constant 2 : index
    %c0_56 = arith.constant 0 : index
    %c0_57 = arith.constant 0 : index
    %100 = vector.load %arg8[%c2_55, %c0_56, %c0_57] : memref<3x64x128xf32, #tpu.memory_space<vmem>>, vector<1x64x128xf32>
    %101 = vector.shape_cast %100 : vector<1x64x128xf32> to vector<64x128xf32>
    %cst_58 = arith.constant dense<0.000000e+00> : vector<25x128xf32>
    %102 = tpu.matmul %99, %101, %cst_58 {dimension_numbers = #tpu.dot_dimension_numbers<[1], [0], [0], [1], [0, 0, 1, 1], [], []>} : vector<25x64xf32>, vector<64x128xf32>, vector<25x128xf32> -> vector<25x128xf32>
    %103 = arith.addf %98, %102 : vector<25x128xf32>
    %c0_59 = arith.constant 0 : index
    %c0_60 = arith.constant 0 : index
    %104 = vector.load %arg9[%c0_59, %c0_60] : memref<1x128xf32, #tpu.memory_space<vmem>>, vector<1x128xf32>
    %105 = vector.broadcast %104 : vector<1x128xf32> to vector<25x128xf32>
    %106 = arith.mulf %103, %105 : vector<25x128xf32>
    %c0_61 = arith.constant 0 : index
    %c0_62 = arith.constant 0 : index
    %107 = vector.load %arg10[%c0_61, %c0_62] : memref<1x128xf32, #tpu.memory_space<vmem>>, vector<1x128xf32>
    %108 = vector.broadcast %107 : vector<1x128xf32> to vector<25x128xf32>
    %109 = arith.addf %106, %108 : vector<25x128xf32>
    %cst_63 = arith.constant 0.000000e+00 : f32
    %110 = vector.broadcast %cst_63 : f32 to vector<25x128xf32>
    %111 = arith.maximumf %109, %110 : vector<25x128xf32>
    %cst_64 = arith.constant 0.000000e+00 : f32
    %112 = vector.broadcast %cst_64 : f32 to vector<23x256xf32>
    %113 = vector.extract_strided_slice %111 {offsets = [0, 0], sizes = [23, 128], strides = [1, 1]} : vector<25x128xf32> to vector<23x128xf32>
    %c0_65 = arith.constant 0 : index
    %c0_66 = arith.constant 0 : index
    %c0_67 = arith.constant 0 : index
    %114 = vector.load %arg11[%c0_65, %c0_66, %c0_67] : memref<3x128x256xf32, #tpu.memory_space<vmem>>, vector<1x128x256xf32>
    %115 = vector.shape_cast %114 : vector<1x128x256xf32> to vector<128x256xf32>
    %cst_68 = arith.constant dense<0.000000e+00> : vector<23x256xf32>
    %116 = tpu.matmul %113, %115, %cst_68 {dimension_numbers = #tpu.dot_dimension_numbers<[1], [0], [0], [1], [0, 0, 1, 1], [], []>} : vector<23x128xf32>, vector<128x256xf32>, vector<23x256xf32> -> vector<23x256xf32>
    %117 = arith.addf %112, %116 : vector<23x256xf32>
    %118 = vector.extract_strided_slice %111 {offsets = [1, 0], sizes = [23, 128], strides = [1, 1]} : vector<25x128xf32> to vector<23x128xf32>
    %c1_69 = arith.constant 1 : index
    %c0_70 = arith.constant 0 : index
    %c0_71 = arith.constant 0 : index
    %119 = vector.load %arg11[%c1_69, %c0_70, %c0_71] : memref<3x128x256xf32, #tpu.memory_space<vmem>>, vector<1x128x256xf32>
    %120 = vector.shape_cast %119 : vector<1x128x256xf32> to vector<128x256xf32>
    %cst_72 = arith.constant dense<0.000000e+00> : vector<23x256xf32>
    %121 = tpu.matmul %118, %120, %cst_72 {dimension_numbers = #tpu.dot_dimension_numbers<[1], [0], [0], [1], [0, 0, 1, 1], [], []>} : vector<23x128xf32>, vector<128x256xf32>, vector<23x256xf32> -> vector<23x256xf32>
    %122 = arith.addf %117, %121 : vector<23x256xf32>
    %123 = vector.extract_strided_slice %111 {offsets = [2, 0], sizes = [23, 128], strides = [1, 1]} : vector<25x128xf32> to vector<23x128xf32>
    %c2_73 = arith.constant 2 : index
    %c0_74 = arith.constant 0 : index
    %c0_75 = arith.constant 0 : index
    %124 = vector.load %arg11[%c2_73, %c0_74, %c0_75] : memref<3x128x256xf32, #tpu.memory_space<vmem>>, vector<1x128x256xf32>
    %125 = vector.shape_cast %124 : vector<1x128x256xf32> to vector<128x256xf32>
    %cst_76 = arith.constant dense<0.000000e+00> : vector<23x256xf32>
    %126 = tpu.matmul %123, %125, %cst_76 {dimension_numbers = #tpu.dot_dimension_numbers<[1], [0], [0], [1], [0, 0, 1, 1], [], []>} : vector<23x128xf32>, vector<128x256xf32>, vector<23x256xf32> -> vector<23x256xf32>
    %127 = arith.addf %122, %126 : vector<23x256xf32>
    %c0_77 = arith.constant 0 : index
    %c0_78 = arith.constant 0 : index
    %128 = vector.load %arg12[%c0_77, %c0_78] : memref<1x256xf32, #tpu.memory_space<vmem>>, vector<1x256xf32>
    %129 = vector.broadcast %128 : vector<1x256xf32> to vector<23x256xf32>
    %130 = arith.mulf %127, %129 : vector<23x256xf32>
    %c0_79 = arith.constant 0 : index
    %c0_80 = arith.constant 0 : index
    %131 = vector.load %arg13[%c0_79, %c0_80] : memref<1x256xf32, #tpu.memory_space<vmem>>, vector<1x256xf32>
    %132 = vector.broadcast %131 : vector<1x256xf32> to vector<23x256xf32>
    %133 = arith.addf %130, %132 : vector<23x256xf32>
    %cst_81 = arith.constant 0.000000e+00 : f32
    %134 = vector.broadcast %cst_81 : f32 to vector<23x256xf32>
    %135 = arith.maximumf %133, %134 : vector<23x256xf32>
    %cst_82 = arith.constant 0.000000e+00 : f32
    %136 = vector.broadcast %cst_82 : f32 to vector<21x512xf32>
    %137 = vector.extract_strided_slice %135 {offsets = [0, 0], sizes = [21, 256], strides = [1, 1]} : vector<23x256xf32> to vector<21x256xf32>
    %c0_83 = arith.constant 0 : index
    %c0_84 = arith.constant 0 : index
    %c0_85 = arith.constant 0 : index
    %138 = vector.load %arg14[%c0_83, %c0_84, %c0_85] : memref<3x256x512xf32, #tpu.memory_space<vmem>>, vector<1x256x512xf32>
    %139 = vector.shape_cast %138 : vector<1x256x512xf32> to vector<256x512xf32>
    %cst_86 = arith.constant dense<0.000000e+00> : vector<21x512xf32>
    %140 = tpu.matmul %137, %139, %cst_86 {dimension_numbers = #tpu.dot_dimension_numbers<[1], [0], [0], [1], [0, 0, 1, 1], [], []>} : vector<21x256xf32>, vector<256x512xf32>, vector<21x512xf32> -> vector<21x512xf32>
    %141 = arith.addf %136, %140 : vector<21x512xf32>
    %142 = vector.extract_strided_slice %135 {offsets = [1, 0], sizes = [21, 256], strides = [1, 1]} : vector<23x256xf32> to vector<21x256xf32>
    %c1_87 = arith.constant 1 : index
    %c0_88 = arith.constant 0 : index
    %c0_89 = arith.constant 0 : index
    %143 = vector.load %arg14[%c1_87, %c0_88, %c0_89] : memref<3x256x512xf32, #tpu.memory_space<vmem>>, vector<1x256x512xf32>
    %144 = vector.shape_cast %143 : vector<1x256x512xf32> to vector<256x512xf32>
    %cst_90 = arith.constant dense<0.000000e+00> : vector<21x512xf32>
    %145 = tpu.matmul %142, %144, %cst_90 {dimension_numbers = #tpu.dot_dimension_numbers<[1], [0], [0], [1], [0, 0, 1, 1], [], []>} : vector<21x256xf32>, vector<256x512xf32>, vector<21x512xf32> -> vector<21x512xf32>
    %146 = arith.addf %141, %145 : vector<21x512xf32>
    %147 = vector.extract_strided_slice %135 {offsets = [2, 0], sizes = [21, 256], strides = [1, 1]} : vector<23x256xf32> to vector<21x256xf32>
    %c2_91 = arith.constant 2 : index
    %c0_92 = arith.constant 0 : index
    %c0_93 = arith.constant 0 : index
    %148 = vector.load %arg14[%c2_91, %c0_92, %c0_93] : memref<3x256x512xf32, #tpu.memory_space<vmem>>, vector<1x256x512xf32>
    %149 = vector.shape_cast %148 : vector<1x256x512xf32> to vector<256x512xf32>
    %cst_94 = arith.constant dense<0.000000e+00> : vector<21x512xf32>
    %150 = tpu.matmul %147, %149, %cst_94 {dimension_numbers = #tpu.dot_dimension_numbers<[1], [0], [0], [1], [0, 0, 1, 1], [], []>} : vector<21x256xf32>, vector<256x512xf32>, vector<21x512xf32> -> vector<21x512xf32>
    %151 = arith.addf %146, %150 : vector<21x512xf32>
    %c0_95 = arith.constant 0 : index
    %c0_96 = arith.constant 0 : index
    %152 = vector.load %arg15[%c0_95, %c0_96] : memref<1x512xf32, #tpu.memory_space<vmem>>, vector<1x512xf32>
    %153 = vector.broadcast %152 : vector<1x512xf32> to vector<21x512xf32>
    %154 = arith.mulf %151, %153 : vector<21x512xf32>
    %c0_97 = arith.constant 0 : index
    %c0_98 = arith.constant 0 : index
    %155 = vector.load %arg16[%c0_97, %c0_98] : memref<1x512xf32, #tpu.memory_space<vmem>>, vector<1x512xf32>
    %156 = vector.broadcast %155 : vector<1x512xf32> to vector<21x512xf32>
    %157 = arith.addf %154, %156 : vector<21x512xf32>
    %cst_99 = arith.constant 0.000000e+00 : f32
    %158 = vector.broadcast %cst_99 : f32 to vector<21x512xf32>
    %159 = arith.maximumf %157, %158 : vector<21x512xf32>
    %160 = tpu.iota {dimensions = array<i32: 0>} : vector<21x512xi32>
    %c0_i32 = arith.constant 0 : i32
    %161 = vector.broadcast %c0_i32 : i32 to vector<21x512xi32>
    %162 = arith.cmpi sge, %160, %161 : vector<21x512xi32>
    %c6_i32 = arith.constant 6 : i32
    %163 = vector.broadcast %c6_i32 : i32 to vector<21x512xi32>
    %164 = arith.cmpi slt, %160, %163 : vector<21x512xi32>
    %165 = arith.andi %162, %164 : vector<21x512xi1>
    %cst_100 = arith.constant 0xFF800000 : f32
    %166 = vector.broadcast %cst_100 : f32 to vector<21x512xf32>
    %167 = arith.select %165, %159, %166 : vector<21x512xi1>, vector<21x512xf32>
    %cst_101 = arith.constant dense<0xFF800000> : vector<512xf32>
    %168 = vector.multi_reduction <maximumf>, %167, %cst_101 [0] : vector<21x512xf32> to vector<512xf32>
    %169 = vector.shape_cast %168 : vector<512xf32> to vector<1x512xf32>
    %c5_i32 = arith.constant 5 : i32
    %170 = vector.broadcast %c5_i32 : i32 to vector<21x512xi32>
    %171 = arith.cmpi sge, %160, %170 : vector<21x512xi32>
    %c11_i32 = arith.constant 11 : i32
    %172 = vector.broadcast %c11_i32 : i32 to vector<21x512xi32>
    %173 = arith.cmpi slt, %160, %172 : vector<21x512xi32>
    %174 = arith.andi %171, %173 : vector<21x512xi1>
    %cst_102 = arith.constant 0xFF800000 : f32
    %175 = vector.broadcast %cst_102 : f32 to vector<21x512xf32>
    %176 = arith.select %174, %159, %175 : vector<21x512xi1>, vector<21x512xf32>
    %cst_103 = arith.constant dense<0xFF800000> : vector<512xf32>
    %177 = vector.multi_reduction <maximumf>, %176, %cst_103 [0] : vector<21x512xf32> to vector<512xf32>
    %178 = vector.shape_cast %177 : vector<512xf32> to vector<1x512xf32>
    %c10_i32 = arith.constant 10 : i32
    %179 = vector.broadcast %c10_i32 : i32 to vector<21x512xi32>
    %180 = arith.cmpi sge, %160, %179 : vector<21x512xi32>
    %c16_i32 = arith.constant 16 : i32
    %181 = vector.broadcast %c16_i32 : i32 to vector<21x512xi32>
    %182 = arith.cmpi slt, %160, %181 : vector<21x512xi32>
    %183 = arith.andi %180, %182 : vector<21x512xi1>
    %cst_104 = arith.constant 0xFF800000 : f32
    %184 = vector.broadcast %cst_104 : f32 to vector<21x512xf32>
    %185 = arith.select %183, %159, %184 : vector<21x512xi1>, vector<21x512xf32>
    %cst_105 = arith.constant dense<0xFF800000> : vector<512xf32>
    %186 = vector.multi_reduction <maximumf>, %185, %cst_105 [0] : vector<21x512xf32> to vector<512xf32>
    %187 = vector.shape_cast %186 : vector<512xf32> to vector<1x512xf32>
    %c15_i32 = arith.constant 15 : i32
    %188 = vector.broadcast %c15_i32 : i32 to vector<21x512xi32>
    %189 = arith.cmpi sge, %160, %188 : vector<21x512xi32>
    %c21_i32 = arith.constant 21 : i32
    %190 = vector.broadcast %c21_i32 : i32 to vector<21x512xi32>
    %191 = arith.cmpi slt, %160, %190 : vector<21x512xi32>
    %192 = arith.andi %189, %191 : vector<21x512xi1>
    %cst_106 = arith.constant 0xFF800000 : f32
    %193 = vector.broadcast %cst_106 : f32 to vector<21x512xf32>
    %194 = arith.select %192, %159, %193 : vector<21x512xi1>, vector<21x512xf32>
    %cst_107 = arith.constant dense<0xFF800000> : vector<512xf32>
    %195 = vector.multi_reduction <maximumf>, %194, %cst_107 [0] : vector<21x512xf32> to vector<512xf32>
    %196 = vector.shape_cast %195 : vector<512xf32> to vector<1x512xf32>
    %197 = tpu.concatenate %169, %178, %187, %196 in 0 : vector<1x512xf32>, vector<1x512xf32>, vector<1x512xf32>, vector<1x512xf32> -> vector<4x512xf32>
    %198 = vector.shape_cast %197 : vector<4x512xf32> to vector<1x4x512xf32>
    %c0_108 = arith.constant 0 : index
    %c0_109 = arith.constant 0 : index
    %c0_110 = arith.constant 0 : index
    %199 = vector.load %arg17[%c0_108, %c0_109, %c0_110] : memref<1x4x512xf32, #tpu.memory_space<vmem>>, vector<1x4x512xf32>
    tpu.vector_store %arg17[%c0_108, %c0_109, %c0_110], %198 {strides = array<i32>} : memref<1x4x512xf32, #tpu.memory_space<vmem>>, vector<1x4x512xf32>,
    return
  }
  func.func @transform_0(%arg0: i32) -> (i32, i32, i32) {
    %c0_i32 = arith.constant 0 : i32
    %c0_i32_0 = arith.constant 0 : i32
    %c0_i32_1 = arith.constant 0 : i32
    return %arg0, %c0_i32, %c0_i32_0 : i32, i32, i32
  }
  func.func @transform_1(%arg0: i32) -> (i32, i32, i32) {
    %c0_i32 = arith.constant 0 : i32
    %c0_i32_0 = arith.constant 0 : i32
    %c0_i32_1 = arith.constant 0 : i32
    %c0_i32_2 = arith.constant 0 : i32
    return %c0_i32, %c0_i32_0, %c0_i32_1 : i32, i32, i32
  }
  func.func @transform_2(%arg0: i32) -> (i32, i32) {
    %c0_i32 = arith.constant 0 : i32
    %c0_i32_0 = arith.constant 0 : i32
    %c0_i32_1 = arith.constant 0 : i32
    return %c0_i32, %c0_i32_0 : i32, i32
  }
  func.func @transform_3(%arg0: i32) -> (i32, i32) {
    %c0_i32 = arith.constant 0 : i32
    %c0_i32_0 = arith.constant 0 : i32
    %c0_i32_1 = arith.constant 0 : i32
    return %c0_i32, %c0_i32_0 : i32, i32
  }
  func.func @transform_4(%arg0: i32) -> (i32, i32, i32) {
    %c0_i32 = arith.constant 0 : i32
    %c0_i32_0 = arith.constant 0 : i32
    %c0_i32_1 = arith.constant 0 : i32
    %c0_i32_2 = arith.constant 0 : i32
    return %c0_i32, %c0_i32_0, %c0_i32_1 : i32, i32, i32
  }
  func.func @transform_5(%arg0: i32) -> (i32, i32) {
    %c0_i32 = arith.constant 0 : i32
    %c0_i32_0 = arith.constant 0 : i32
    %c0_i32_1 = arith.constant 0 : i32
    return %c0_i32, %c0_i32_0 : i32, i32
  }
  func.func @transform_6(%arg0: i32) -> (i32, i32) {
    %c0_i32 = arith.constant 0 : i32
    %c0_i32_0 = arith.constant 0 : i32
    %c0_i32_1 = arith.constant 0 : i32
    return %c0_i32, %c0_i32_0 : i32, i32
  }
  func.func @transform_7(%arg0: i32) -> (i32, i32, i32) {
    %c0_i32 = arith.constant 0 : i32
    %c0_i32_0 = arith.constant 0 : i32
    %c0_i32_1 = arith.constant 0 : i32
    %c0_i32_2 = arith.constant 0 : i32
    return %c0_i32, %c0_i32_0, %c0_i32_1 : i32, i32, i32
  }
  func.func @transform_8(%arg0: i32) -> (i32, i32) {
    %c0_i32 = arith.constant 0 : i32
    %c0_i32_0 = arith.constant 0 : i32
    %c0_i32_1 = arith.constant 0 : i32
    return %c0_i32, %c0_i32_0 : i32, i32
  }
  func.func @transform_9(%arg0: i32) -> (i32, i32) {
    %c0_i32 = arith.constant 0 : i32
    %c0_i32_0 = arith.constant 0 : i32
    %c0_i32_1 = arith.constant 0 : i32
    return %c0_i32, %c0_i32_0 : i32, i32
  }
  func.func @transform_10(%arg0: i32) -> (i32, i32, i32) {
    %c0_i32 = arith.constant 0 : i32
    %c0_i32_0 = arith.constant 0 : i32
    %c0_i32_1 = arith.constant 0 : i32
    %c0_i32_2 = arith.constant 0 : i32
    return %c0_i32, %c0_i32_0, %c0_i32_1 : i32, i32, i32
  }
  func.func @transform_11(%arg0: i32) -> (i32, i32) {
    %c0_i32 = arith.constant 0 : i32
    %c0_i32_0 = arith.constant 0 : i32
    %c0_i32_1 = arith.constant 0 : i32
    return %c0_i32, %c0_i32_0 : i32, i32
  }
  func.func @transform_12(%arg0: i32) -> (i32, i32) {
    %c0_i32 = arith.constant 0 : i32
    %c0_i32_0 = arith.constant 0 : i32
    %c0_i32_1 = arith.constant 0 : i32
    return %c0_i32, %c0_i32_0 : i32, i32
  }
  func.func @transform_13(%arg0: i32) -> (i32, i32, i32) {
    %c0_i32 = arith.constant 0 : i32
    %c0_i32_0 = arith.constant 0 : i32
    %c0_i32_1 = arith.constant 0 : i32
    %c0_i32_2 = arith.constant 0 : i32
    return %c0_i32, %c0_i32_0, %c0_i32_1 : i32, i32, i32
  }
  func.func @transform_14(%arg0: i32) -> (i32, i32) {
    %c0_i32 = arith.constant 0 : i32
    %c0_i32_0 = arith.constant 0 : i32
    %c0_i32_1 = arith.constant 0 : i32
    return %c0_i32, %c0_i32_0 : i32, i32
  }
  func.func @transform_15(%arg0: i32) -> (i32, i32) {
    %c0_i32 = arith.constant 0 : i32
    %c0_i32_0 = arith.constant 0 : i32
    %c0_i32_1 = arith.constant 0 : i32
    return %c0_i32, %c0_i32_0 : i32, i32
  }
  func.func @transform_16(%arg0: i32) -> (i32, i32, i32) {
    %c0_i32 = arith.constant 0 : i32
    %c0_i32_0 = arith.constant 0 : i32
    %c0_i32_1 = arith.constant 0 : i32
    return %arg0, %c0_i32, %c0_i32_0 : i32, i32, i32
  }
}

</mosaic_0001>

<llo_original>
// kernel: feature_extractor.1
$region0: #{feature_extractor.1}
  #allocation0 [shape = 'u32[]', space=smem, size = 0x4, offset = 0x4, fixed_abs, tag = 'smem constant byte address 0x4 - core index']
  #allocation1 [shape = 'u32[144,128]{1,0:T(1,128)}', space=vmem, size = 0x12000, scoped, tag = 'internal scratch']
  #allocation2 [shape = 'f32[58,32]{1,0:T(8,128)}', space=vmem, size = 0x8000, scoped, tag = 'scratch operand']
  %s0 = inlined_call_operand.vmem [shape: f32[2,64,1], index: 0, kind: input, shape index: {}]
  %s1 = inlined_call_operand.hbm [shape: f32[7,1,32], index: 1, kind: input, shape index: {}]
  %s2 = inlined_call_operand.hbm [shape: f32[1,32], index: 2, kind: input, shape index: {}]
  %s3 = inlined_call_operand.hbm [shape: f32[1,32], index: 3, kind: input, shape index: {}]
  %s4 = inlined_call_operand.hbm [shape: f32[3,32,64], index: 4, kind: input, shape index: {}]
  %s5 = inlined_call_operand.hbm [shape: f32[1,64], index: 5, kind: input, shape index: {}]
  %s6 = inlined_call_operand.hbm [shape: f32[1,64], index: 6, kind: input, shape index: {}]
  %s7 = inlined_call_operand.hbm [shape: f32[3,64,128], index: 7, kind: input, shape index: {}]
  %s8 = inlined_call_operand.hbm [shape: f32[1,128], index: 8, kind: input, shape index: {}]
  %s9 = inlined_call_operand.hbm [shape: f32[1,128], index: 9, kind: input, shape index: {}]
  %s10 = inlined_call_operand.hbm [shape: f32[3,128,256], index: 10, kind: input, shape index: {}]
  %s11 = inlined_call_operand.hbm [shape: f32[1,256], index: 11, kind: input, shape index: {}]
  %s12 = inlined_call_operand.hbm [shape: f32[1,256], index: 12, kind: input, shape index: {}]
  %s13 = inlined_call_operand.hbm [shape: f32[3,256,512], index: 13, kind: input, shape index: {}]
  %s14 = inlined_call_operand.hbm [shape: f32[1,512], index: 14, kind: input, shape index: {}]
  %s15 = inlined_call_operand.hbm [shape: f32[1,512], index: 15, kind: input, shape index: {}]
  %s16 = inlined_call_operand.vmem [shape: f32[2,4,512], index: 16, kind: output, shape index: {}]
  %s17 = sld [smem:[#allocation0]]
  $region157: #{feature_extractor.1} parent=0
    _
  %s19 = ssub.s32 1, %s17
  %s20 = scalar_select 0, %s19, %s17
  $region1: #{feature_extractor.1} parent=0
    #allocation3 [shape = 'u8[3584]{0}', space=vmem, size = 0x1000, scoped, tag = 'input window, operand 1, single buffered']
    #allocation4 [shape = 's32[2]{0}', space=sflag, size = 0x8, scoped, tag = 'scoped memory for feature_extractor.1']
    #allocation5 [shape = 'u8[512]{0}', space=vmem, size = 0x400, scoped, tag = 'input window, operand 2, single buffered']
    #allocation6 [shape = 's32[1]{0}', space=sflag, size = 0x4, scoped, tag = 'scoped memory for feature_extractor.1']
    #allocation7 [shape = 'u8[512]{0}', space=vmem, size = 0x400, scoped, tag = 'input window, operand 3, single buffered']
    #allocation8 [shape = 'u8[49152]{0}', space=vmem, size = 0xc000, scoped, tag = 'input window, operand 4, single buffered']
    #allocation9 [shape = 's32[1]{0}', space=sflag, size = 0x4, scoped, tag = 'scoped memory for feature_extractor.1']
    #allocation10 [shape = 'u8[512]{0}', space=vmem, size = 0x400, scoped, tag = 'input window, operand 5, single buffered']
    #allocation11 [shape = 'u8[512]{0}', space=vmem, size = 0x400, scoped, tag = 'input window, operand 6, single buffered']
    #allocation12 [shape = 's32[1]{0}', space=sflag, size = 0x4, scoped, tag = 'scoped memory for feature_extractor.1']
    #allocation13 [shape = 'u8[98304]{0}', space=vmem, size = 0x18000, scoped, tag = 'input window, operand 7, single buffered']
    #allocation14 [shape = 'u8[512]{0}', space=vmem, size = 0x400, scoped, tag = 'input window, operand 8, single buffered']
    #allocation15 [shape = 's32[1]{0}', space=sflag, size = 0x4, scoped, tag = 'scoped memory for feature_extractor.1']
    #allocation16 [shape = 'u8[512]{0}', space=vmem, size = 0x400, scoped, tag = 'input window, operand 9, single buffered']
    #allocation17 [shape = 'u8[393216]{0}', space=vmem, size = 0x60000, scoped, tag = 'input window, operand 10, single buffered']
    #allocation18 [shape = 's32[1]{0}', space=sflag, size = 0x4, scoped, tag = 'scoped memory for feature_extractor.1']
    #allocation19 [shape = 'u8[1024]{0}', space=vmem, size = 0x400, scoped, tag = 'input window, operand 11, single buffered']
    #allocation20 [shape = 'u8[1024]{0}', space=vmem, size = 0x400, scoped, tag = 'input window, operand 12, single buffered']
    #allocation21 [shape = 's32[1]{0}', space=sflag, size = 0x4, scoped, tag = 'scoped memory for feature_extractor.1']
    #allocation22 [shape = 'u8[1572864]{0}', space=vmem, size = 0x180000, scoped, tag = 'input window, operand 13, single buffered']
    #allocation23 [shape = 'u8[2048]{0}', space=vmem, size = 0x800, scoped, tag = 'input window, operand 14, single buffered']
    #allocation24 [shape = 's32[1]{0}', space=sflag, size = 0x4, scoped, tag = 'scoped memory for feature_extractor.1']
    #allocation25 [shape = 'u8[2048]{0}', space=vmem, size = 0x800, scoped, tag = 'input window, operand 15, single buffered']
    %21 = vsyncpa [#allocation4], 0
    %22 = vsyncpa [#allocation6], 0
    %23 = vsyncpa [#allocation9], 0
    %24 = vsyncpa [#allocation12], 0
    %25 = vsyncpa [#allocation15], 0
    %26 = vsyncpa [#allocation18], 0
    %27 = vsyncpa [#allocation21], 0
    %28 = vsyncpa [#allocation24], 0
    loop: start=0, step=1, limit=4
    $region2: #{feature_extractor.1} parent=1 // loop_pre_header
      _
    $region3: #{feature_extractor.1} parent=1 // loop_header
      %s30 = sphi 0, %s34
      %p31 = scmp.ge.s32.totalorder %s30, 4
      %s40 = sphi 0, %s42
      %s43 = sphi 0, %s40
      %s44 = sphi 0, %s43
      %s60 = sphi 0, %s44
      %s64 = sphi 0, %s64
      %s66 = sphi 0, %s64
      %s67 = sphi 0, %s66
      %s81 = sphi 0, %s67
      %s85 = sphi 0, %s85
      %s87 = sphi 0, %s85
      %s88 = sphi 0, %s87
      %s102 = sphi 0, %s88
      %s106 = sphi 0, %s106
      %s108 = sphi 0, %s106
      %s109 = sphi 0, %s108
      %s123 = sphi 0, %s109
      %s127 = sphi 0, %s127
      %s129 = sphi 0, %s127
      %s130 = sphi 0, %s129
      %s144 = sphi 0, %s130
      %s148 = sphi 0, %s148
      %s150 = sphi 0, %s148
      %s151 = sphi 0, %s150
      %s165 = sphi 0, %s151
      %s169 = sphi 0, %s169
      %s171 = sphi 0, %s169
      %s172 = sphi 0, %s171
      %s186 = sphi 0, %s172
      %s190 = sphi 0, %s190
      %s192 = sphi 0, %s190
      %s193 = sphi 0, %s192
      %s207 = sphi 0, %s193
      %s211 = sphi 0, %s211
      %s213 = sphi 0, %s211
      %s214 = sphi 0, %s213
      %s228 = sphi 0, %s214
      %s232 = sphi 0, %s232
      %s234 = sphi 0, %s232
      %s235 = sphi 0, %s234
      %s249 = sphi 0, %s235
      %s253 = sphi 0, %s253
      %s255 = sphi 0, %s253
      %s256 = sphi 0, %s255
      %s270 = sphi 0, %s256
      %s274 = sphi 0, %s274
      %s276 = sphi 0, %s274
      %s277 = sphi 0, %s276
      %s291 = sphi 0, %s277
      %s295 = sphi 0, %s295
      %s297 = sphi 0, %s295
      %s298 = sphi 0, %s297
      %s312 = sphi 0, %s298
      %s316 = sphi 0, %s316
      %s318 = sphi 0, %s316
      %s319 = sphi 0, %s318
      %s333 = sphi 0, %s319
      %s337 = sphi 0, %s337
      %s339 = sphi 0, %s337
      %s340 = sphi 0, %s339
      %s354 = sphi 0, %s340
      %s358 = sphi 0, %s358
      %s360 = sphi 0, %s358
      %s361 = sphi 0, %s360
      %s375 = sphi 0, %s361
      %s381 = sphi 0, %s383
      %s384 = sphi 0, %s381
      %s385 = sphi 0, %s384
      %s401 = sphi 0, %s385
    $region4: #{feature_extractor.1} parent=1 // loop_header_branch
      %33 = sbr.rel (%p31) target = $region8
    $region5: #{feature_extractor.1} parent=1 // loop_body
      %s35 = ssub.s32 %s30, 1
      %s36 = ssub.s32 %s30, 2
      %s37 = sadd.s32 %s30, 1
      %s38 = ssub.s32 %s30, %s37
      %p39 = scmp.eq.s32.totalorder %s38, 0
      %s41 = sadd.s32 %s40, 1
      %s42 = scalar_select %p39, %s40, %s41
      %p45 = pneg %p39
      %p46 = scmp.eq.s32.totalorder %s30, 1
      %p47 = por %p45, %p46
      %p48 = scmp.ne.s32.totalorder %s40, %s43
      %p49 = scmp.eq.s32.totalorder %s30, 0
      %p50 = por %p48, %p49
      %p51 = scmp.ne.s32.totalorder %s40, %s43
      %p52 = scmp.eq.s32.totalorder %s35, 1
      %p53 = por %p51, %p52
      %p54 = scmp.ne.s32.totalorder %s43, %s44
      %p55 = scmp.eq.s32.totalorder %s35, 0
      %p56 = por %p54, %p55
      %p57 = scmp.ne.s32.totalorder %s43, %s44
      %p58 = scmp.eq.s32.totalorder %s36, 1
      %p59 = por %p57, %p58
      %p61 = scmp.ne.s32.totalorder %s44, %s60
      %p62 = scmp.eq.s32.totalorder %s36, 0
      %p63 = por %p61, %p62
      %s65 = sadd.s32 %s64, 1
      %p68 = scmp.eq.s32.totalorder %s30, 1
      %p69 = scmp.ne.s32.totalorder %s64, %s66
      %p70 = scmp.eq.s32.totalorder %s30, 0
      %p71 = por %p69, %p70
      %p72 = scmp.ne.s32.totalorder %s64, %s66
      %p73 = scmp.eq.s32.totalorder %s35, 1
      %p74 = por %p72, %p73
      %p75 = scmp.ne.s32.totalorder %s66, %s67
      %p76 = scmp.eq.s32.totalorder %s35, 0
      %p77 = por %p75, %p76
      %p78 = scmp.ne.s32.totalorder %s66, %s67
      %p79 = scmp.eq.s32.totalorder %s36, 1
      %p80 = por %p78, %p79
      %p82 = scmp.ne.s32.totalorder %s67, %s81
      %p83 = scmp.eq.s32.totalorder %s36, 0
      %p84 = por %p82, %p83
      %s86 = sadd.s32 %s85, 1
      %p89 = scmp.eq.s32.totalorder %s30, 1
      %p90 = scmp.ne.s32.totalorder %s85, %s87
      %p91 = scmp.eq.s32.totalorder %s30, 0
      %p92 = por %p90, %p91
      %p93 = scmp.ne.s32.totalorder %s85, %s87
      %p94 = scmp.eq.s32.totalorder %s35, 1
      %p95 = por %p93, %p94
      %p96 = scmp.ne.s32.totalorder %s87, %s88
      %p97 = scmp.eq.s32.totalorder %s35, 0
      %p98 = por %p96, %p97
      %p99 = scmp.ne.s32.totalorder %s87, %s88
      %p100 = scmp.eq.s32.totalorder %s36, 1
      %p101 = por %p99, %p100
      %p103 = scmp.ne.s32.totalorder %s88, %s102
      %p104 = scmp.eq.s32.totalorder %s36, 0
      %p105 = por %p103, %p104
      %s107 = sadd.s32 %s106, 1
      %p110 = scmp.eq.s32.totalorder %s30, 1
      %p111 = scmp.ne.s32.totalorder %s106, %s108
      %p112 = scmp.eq.s32.totalorder %s30, 0
      %p113 = por %p111, %p112
      %p114 = scmp.ne.s32.totalorder %s106, %s108
      %p115 = scmp.eq.s32.totalorder %s35, 1
      %p116 = por %p114, %p115
      %p117 = scmp.ne.s32.totalorder %s108, %s109
      %p118 = scmp.eq.s32.totalorder %s35, 0
      %p119 = por %p117, %p118
      %p120 = scmp.ne.s32.totalorder %s108, %s109
      %p121 = scmp.eq.s32.totalorder %s36, 1
      %p122 = por %p120, %p121
      %p124 = scmp.ne.s32.totalorder %s109, %s123
      %p125 = scmp.eq.s32.totalorder %s36, 0
      %p126 = por %p124, %p125
      %s128 = sadd.s32 %s127, 1
      %p131 = scmp.eq.s32.totalorder %s30, 1
      %p132 = scmp.ne.s32.totalorder %s127, %s129
      %p133 = scmp.eq.s32.totalorder %s30, 0
      %p134 = por %p132, %p133
      %p135 = scmp.ne.s32.totalorder %s127, %s129
      %p136 = scmp.eq.s32.totalorder %s35, 1
      %p137 = por %p135, %p136
      %p138 = scmp.ne.s32.totalorder %s129, %s130
      %p139 = scmp.eq.s32.totalorder %s35, 0
      %p140 = por %p138, %p139
      %p141 = scmp.ne.s32.totalorder %s129, %s130
      %p142 = scmp.eq.s32.totalorder %s36, 1
      %p143 = por %p141, %p142
      %p145 = scmp.ne.s32.totalorder %s130, %s144
      %p146 = scmp.eq.s32.totalorder %s36, 0
      %p147 = por %p145, %p146
      %s149 = sadd.s32 %s148, 1
      %p152 = scmp.eq.s32.totalorder %s30, 1
      %p153 = scmp.ne.s32.totalorder %s148, %s150
      %p154 = scmp.eq.s32.totalorder %s30, 0
      %p155 = por %p153, %p154
      %p156 = scmp.ne.s32.totalorder %s148, %s150
      %p157 = scmp.eq.s32.totalorder %s35, 1
      %p158 = por %p156, %p157
      %p159 = scmp.ne.s32.totalorder %s150, %s151
      %p160 = scmp.eq.s32.totalorder %s35, 0
      %p161 = por %p159, %p160
      %p162 = scmp.ne.s32.totalorder %s150, %s151
      %p163 = scmp.eq.s32.totalorder %s36, 1
      %p164 = por %p162, %p163
      %p166 = scmp.ne.s32.totalorder %s151, %s165
      %p167 = scmp.eq.s32.totalorder %s36, 0
      %p168 = por %p166, %p167
      %s170 = sadd.s32 %s169, 1
      %p173 = scmp.eq.s32.totalorder %s30, 1
      %p174 = scmp.ne.s32.totalorder %s169, %s171
      %p175 = scmp.eq.s32.totalorder %s30, 0
      %p176 = por %p174, %p175
      %p177 = scmp.ne.s32.totalorder %s169, %s171
      %p178 = scmp.eq.s32.totalorder %s35, 1
      %p179 = por %p177, %p178
      %p180 = scmp.ne.s32.totalorder %s171, %s172
      %p181 = scmp.eq.s32.totalorder %s35, 0
      %p182 = por %p180, %p181
      %p183 = scmp.ne.s32.totalorder %s171, %s172
      %p184 = scmp.eq.s32.totalorder %s36, 1
      %p185 = por %p183, %p184
      %p187 = scmp.ne.s32.totalorder %s172, %s186
      %p188 = scmp.eq.s32.totalorder %s36, 0
      %p189 = por %p187, %p188
      %s191 = sadd.s32 %s190, 1
      %p194 = scmp.eq.s32.totalorder %s30, 1
      %p195 = scmp.ne.s32.totalorder %s190, %s192
      %p196 = scmp.eq.s32.totalorder %s30, 0
      %p197 = por %p195, %p196
      %p198 = scmp.ne.s32.totalorder %s190, %s192
      %p199 = scmp.eq.s32.totalorder %s35, 1
      %p200 = por %p198, %p199
      %p201 = scmp.ne.s32.totalorder %s192, %s193
      %p202 = scmp.eq.s32.totalorder %s35, 0
      %p203 = por %p201, %p202
      %p204 = scmp.ne.s32.totalorder %s192, %s193
      %p205 = scmp.eq.s32.totalorder %s36, 1
      %p206 = por %p204, %p205
      %p208 = scmp.ne.s32.totalorder %s193, %s207
      %p209 = scmp.eq.s32.totalorder %s36, 0
      %p210 = por %p208, %p209
      %s212 = sadd.s32 %s211, 1
      %p215 = scmp.eq.s32.totalorder %s30, 1
      %p216 = scmp.ne.s32.totalorder %s211, %s213
      %p217 = scmp.eq.s32.totalorder %s30, 0
      %p218 = por %p216, %p217
      %p219 = scmp.ne.s32.totalorder %s211, %s213
      %p220 = scmp.eq.s32.totalorder %s35, 1
      %p221 = por %p219, %p220
      %p222 = scmp.ne.s32.totalorder %s213, %s214
      %p223 = scmp.eq.s32.totalorder %s35, 0
      %p224 = por %p222, %p223
      %p225 = scmp.ne.s32.totalorder %s213, %s214
      %p226 = scmp.eq.s32.totalorder %s36, 1
      %p227 = por %p225, %p226
      %p229 = scmp.ne.s32.totalorder %s214, %s228
      %p230 = scmp.eq.s32.totalorder %s36, 0
      %p231 = por %p229, %p230
      %s233 = sadd.s32 %s232, 1
      %p236 = scmp.eq.s32.totalorder %s30, 1
      %p237 = scmp.ne.s32.totalorder %s232, %s234
      %p238 = scmp.eq.s32.totalorder %s30, 0
      %p239 = por %p237, %p238
      %p240 = scmp.ne.s32.totalorder %s232, %s234
      %p241 = scmp.eq.s32.totalorder %s35, 1
      %p242 = por %p240, %p241
      %p243 = scmp.ne.s32.totalorder %s234, %s235
      %p244 = scmp.eq.s32.totalorder %s35, 0
      %p245 = por %p243, %p244
      %p246 = scmp.ne.s32.totalorder %s234, %s235
      %p247 = scmp.eq.s32.totalorder %s36, 1
      %p248 = por %p246, %p247
      %p250 = scmp.ne.s32.totalorder %s235, %s249
      %p251 = scmp.eq.s32.totalorder %s36, 0
      %p252 = por %p250, %p251
      %s254 = sadd.s32 %s253, 1
      %p257 = scmp.eq.s32.totalorder %s30, 1
      %p258 = scmp.ne.s32.totalorder %s253, %s255
      %p259 = scmp.eq.s32.totalorder %s30, 0
      %p260 = por %p258, %p259
      %p261 = scmp.ne.s32.totalorder %s253, %s255
      %p262 = scmp.eq.s32.totalorder %s35, 1
      %p263 = por %p261, %p262
      %p264 = scmp.ne.s32.totalorder %s255, %s256
      %p265 = scmp.eq.s32.totalorder %s35, 0
      %p266 = por %p264, %p265
      %p267 = scmp.ne.s32.totalorder %s255, %s256
      %p268 = scmp.eq.s32.totalorder %s36, 1
      %p269 = por %p267, %p268
      %p271 = scmp.ne.s32.totalorder %s256, %s270
      %p272 = scmp.eq.s32.totalorder %s36, 0
      %p273 = por %p271, %p272
      %s275 = sadd.s32 %s274, 1
      %p278 = scmp.eq.s32.totalorder %s30, 1
      %p279 = scmp.ne.s32.totalorder %s274, %s276
      %p280 = scmp.eq.s32.totalorder %s30, 0
      %p281 = por %p279, %p280
      %p282 = scmp.ne.s32.totalorder %s274, %s276
      %p283 = scmp.eq.s32.totalorder %s35, 1
      %p284 = por %p282, %p283
      %p285 = scmp.ne.s32.totalorder %s276, %s277
      %p286 = scmp.eq.s32.totalorder %s35, 0
      %p287 = por %p285, %p286
      %p288 = scmp.ne.s32.totalorder %s276, %s277
      %p289 = scmp.eq.s32.totalorder %s36, 1
      %p290 = por %p288, %p289
      %p292 = scmp.ne.s32.totalorder %s277, %s291
      %p293 = scmp.eq.s32.totalorder %s36, 0
      %p294 = por %p292, %p293
      %s296 = sadd.s32 %s295, 1
      %p299 = scmp.eq.s32.totalorder %s30, 1
      %p300 = scmp.ne.s32.totalorder %s295, %s297
      %p301 = scmp.eq.s32.totalorder %s30, 0
      %p302 = por %p300, %p301
      %p303 = scmp.ne.s32.totalorder %s295, %s297
      %p304 = scmp.eq.s32.totalorder %s35, 1
      %p305 = por %p303, %p304
      %p306 = scmp.ne.s32.totalorder %s297, %s298
      %p307 = scmp.eq.s32.totalorder %s35, 0
      %p308 = por %p306, %p307
      %p309 = scmp.ne.s32.totalorder %s297, %s298
      %p310 = scmp.eq.s32.totalorder %s36, 1
      %p311 = por %p309, %p310
      %p313 = scmp.ne.s32.totalorder %s298, %s312
      %p314 = scmp.eq.s32.totalorder %s36, 0
      %p315 = por %p313, %p314
      %s317 = sadd.s32 %s316, 1
      %p320 = scmp.eq.s32.totalorder %s30, 1
      %p321 = scmp.ne.s32.totalorder %s316, %s318
      %p322 = scmp.eq.s32.totalorder %s30, 0
      %p323 = por %p321, %p322
      %p324 = scmp.ne.s32.totalorder %s316, %s318
      %p325 = scmp.eq.s32.totalorder %s35, 1
      %p326 = por %p324, %p325
      %p327 = scmp.ne.s32.totalorder %s318, %s319
      %p328 = scmp.eq.s32.totalorder %s35, 0
      %p329 = por %p327, %p328
      %p330 = scmp.ne.s32.totalorder %s318, %s319
      %p331 = scmp.eq.s32.totalorder %s36, 1
      %p332 = por %p330, %p331
      %p334 = scmp.ne.s32.totalorder %s319, %s333
      %p335 = scmp.eq.s32.totalorder %s36, 0
      %p336 = por %p334, %p335
      %s338 = sadd.s32 %s337, 1
      %p341 = scmp.eq.s32.totalorder %s30, 1
      %p342 = scmp.ne.s32.totalorder %s337, %s339
      %p343 = scmp.eq.s32.totalorder %s30, 0
      %p344 = por %p342, %p343
      %p345 = scmp.ne.s32.totalorder %s337, %s339
      %p346 = scmp.eq.s32.totalorder %s35, 1
      %p347 = por %p345, %p346
      %p348 = scmp.ne.s32.totalorder %s339, %s340
      %p349 = scmp.eq.s32.totalorder %s35, 0
      %p350 = por %p348, %p349
      %p351 = scmp.ne.s32.totalorder %s339, %s340
      %p352 = scmp.eq.s32.totalorder %s36, 1
      %p353 = por %p351, %p352
      %p355 = scmp.ne.s32.totalorder %s340, %s354
      %p356 = scmp.eq.s32.totalorder %s36, 0
      %p357 = por %p355, %p356
      %s359 = sadd.s32 %s358, 1
      %p362 = scmp.eq.s32.totalorder %s30, 1
      %p363 = scmp.ne.s32.totalorder %s358, %s360
      %p364 = scmp.eq.s32.totalorder %s30, 0
      %p365 = por %p363, %p364
      %p366 = scmp.ne.s32.totalorder %s358, %s360
      %p367 = scmp.eq.s32.totalorder %s35, 1
      %p368 = por %p366, %p367
      %p369 = scmp.ne.s32.totalorder %s360, %s361
      %p370 = scmp.eq.s32.totalorder %s35, 0
      %p371 = por %p369, %p370
      %p372 = scmp.ne.s32.totalorder %s360, %s361
      %p373 = scmp.eq.s32.totalorder %s36, 1
      %p374 = por %p372, %p373
      %p376 = scmp.ne.s32.totalorder %s361, %s375
      %p377 = scmp.eq.s32.totalorder %s36, 0
      %p378 = por %p376, %p377
      %s379 = ssub.s32 %s30, %s37
      %p380 = scmp.eq.s32.totalorder %s379, 0
      %s382 = sadd.s32 %s381, 1
      %s383 = scalar_select %p380, %s381, %s382
      %p386 = pneg %p380
      %p387 = scmp.eq.s32.totalorder %s30, 1
      %p388 = por %p386, %p387
      %p389 = scmp.ne.s32.totalorder %s381, %s384
      %p390 = scmp.eq.s32.totalorder %s30, 0
      %p391 = por %p389, %p390
      %p392 = scmp.ne.s32.totalorder %s381, %s384
      %p393 = scmp.eq.s32.totalorder %s35, 1
      %p394 = por %p392, %p393
      %p395 = scmp.ne.s32.totalorder %s384, %s385
      %p396 = scmp.eq.s32.totalorder %s35, 0
      %p397 = por %p395, %p396
      %p398 = scmp.ne.s32.totalorder %s384, %s385
      %p399 = scmp.eq.s32.totalorder %s36, 1
      %p400 = por %p398, %p399
      %p402 = scmp.ne.s32.totalorder %s385, %s401
      %p403 = scmp.eq.s32.totalorder %s36, 0
      %p404 = por %p402, %p403
      %p405 = scmp.le.s32.totalorder 1, %s30
      %p406 = scmp.lt.s32.totalorder %s30, 3
      %p407 = pnand %p405, %p406
      %p408 = pneg %p407
      // Predicated region
      $region9: #{feature_extractor.1} parent=5 // pred_check
        _
      $region10: #{feature_extractor.1} parent=5 // pred_check_branch
        %410 = sbr.rel (%p407) target = $region12
      $region11: #{feature_extractor.1} parent=5 // pred_region
        %s411 = ssub.s32 %s30, 1
        // Predicated region
        $region13: #{feature_extractor.1} parent=11 // pred_check
          %p412 = pneg %p77
        $region14: #{feature_extractor.1} parent=11 // pred_check_branch
          %414 = sbr.rel (%p412) target = $region16
        $region15: #{feature_extractor.1} parent=11 // pred_region
          %s416 = ssub.s32 112, 112
          %417 = vsyncadd [#allocation4], %s416
          %s418 = sshll.u32 [#allocation3], 4
          %s419 = int_to_ptr.vmem [resolvable:$true] %s418
          %424 = dma.hbm_to_vmem [thread:$0]  %s1, 112, %s419, [#allocation4], 16, 16, 1
        $region16: #{feature_extractor.1} parent=11 // pred_fallthru
          _
        // Predicated region
        $region17: #{feature_extractor.1} parent=11 // pred_check
          %p425 = pneg %p98
        $region18: #{feature_extractor.1} parent=11 // pred_check_branch
          %427 = sbr.rel (%p425) target = $region20
        $region19: #{feature_extractor.1} parent=11 // pred_region
          %s429 = ssub.s32 16, 16
          %430 = vsyncadd [#allocation6], %s429
          %s432 = sshll.u32 [#allocation5], 4
          %s433 = int_to_ptr.vmem [resolvable:$true] %s432
          %435 = dma.hbm_to_vmem [thread:$0]  %s2, 16, %s433, [#allocation6]
        $region20: #{feature_extractor.1} parent=11 // pred_fallthru
          _
        // Predicated region
        $region21: #{feature_extractor.1} parent=11 // pred_check
          %p436 = pneg %p119
        $region22: #{feature_extractor.1} parent=11 // pred_check_branch
          %438 = sbr.rel (%p436) target = $region24
        $region23: #{feature_extractor.1} parent=11 // pred_region
          %s440 = ssub.s32 16, 16
          %441 = vsyncadd [#allocation6], %s440
          %s443 = sshll.u32 [#allocation7], 4
          %s444 = int_to_ptr.vmem [resolvable:$true] %s443
          %446 = dma.hbm_to_vmem [thread:$0]  %s3, 16, %s444, [#allocation6]
        $region24: #{feature_extractor.1} parent=11 // pred_fallthru
          _
        // Predicated region
        $region25: #{feature_extractor.1} parent=11 // pred_check
          %p447 = pneg %p140
        $region26: #{feature_extractor.1} parent=11 // pred_check_branch
          %449 = sbr.rel (%p447) target = $region28
        $region27: #{feature_extractor.1} parent=11 // pred_region
          %s451 = ssub.s32 1536, 1536
          %452 = vsyncadd [#allocation9], %s451
          %s453 = sshll.u32 [#allocation8], 4
          %s454 = int_to_ptr.vmem [resolvable:$true] %s453
          %459 = dma.hbm_to_vmem [thread:$0]  %s4, 1536, %s454, [#allocation9], 128, 128, 8
        $region28: #{feature_extractor.1} parent=11 // pred_fallthru
          _
        // Predicated region
        $region29: #{feature_extractor.1} parent=11 // pred_check
          %p460 = pneg %p161
        $region30: #{feature_extractor.1} parent=11 // pred_check_branch
          %462 = sbr.rel (%p460) target = $region32
        $region31: #{feature_extractor.1} parent=11 // pred_region
          %s464 = ssub.s32 16, 16
          %465 = vsyncadd [#allocation9], %s464
          %s467 = sshll.u32 [#allocation10], 4
          %s468 = int_to_ptr.vmem [resolvable:$true] %s467
          %470 = dma.hbm_to_vmem [thread:$0]  %s5, 16, %s468, [#allocation9]
        $region32: #{feature_extractor.1} parent=11 // pred_fallthru
          _
        // Predicated region
        $region33: #{feature_extractor.1} parent=11 // pred_check
          %p471 = pneg %p182
        $region34: #{feature_extractor.1} parent=11 // pred_check_branch
          %473 = sbr.rel (%p471) target = $region36
        $region35: #{feature_extractor.1} parent=11 // pred_region
          %s475 = ssub.s32 16, 16
          %476 = vsyncadd [#allocation12], %s475
          %s478 = sshll.u32 [#allocation11], 4
          %s479 = int_to_ptr.vmem [resolvable:$true] %s478
          %481 = dma.hbm_to_vmem [thread:$0]  %s6, 16, %s479, [#allocation12]
        $region36: #{feature_extractor.1} parent=11 // pred_fallthru
          _
        // Predicated region
        $region37: #{feature_extractor.1} parent=11 // pred_check
          %p482 = pneg %p203
        $region38: #{feature_extractor.1} parent=11 // pred_check_branch
          %484 = sbr.rel (%p482) target = $region40
        $region39: #{feature_extractor.1} parent=11 // pred_region
          %s486 = ssub.s32 3072, 3072
          %487 = vsyncadd [#allocation12], %s486
          %s488 = sshll.u32 [#allocation13], 4
          %s489 = int_to_ptr.vmem [resolvable:$true] %s488
          %494 = dma.hbm_to_vmem [thread:$0]  %s7, 3072, %s489, [#allocation12], 128, 128, 8
        $region40: #{feature_extractor.1} parent=11 // pred_fallthru
          _
        // Predicated region
        $region41: #{feature_extractor.1} parent=11 // pred_check
          %p495 = pneg %p224
        $region42: #{feature_extractor.1} parent=11 // pred_check_branch
          %497 = sbr.rel (%p495) target = $region44
        $region43: #{feature_extractor.1} parent=11 // pred_region
          %s499 = ssub.s32 16, 16
          %500 = vsyncadd [#allocation15], %s499
          %s502 = sshll.u32 [#allocation14], 4
          %s503 = int_to_ptr.vmem [resolvable:$true] %s502
          %505 = dma.hbm_to_vmem [thread:$0]  %s8, 16, %s503, [#allocation15]
        $region44: #{feature_extractor.1} parent=11 // pred_fallthru
          _
        // Predicated region
        $region45: #{feature_extractor.1} parent=11 // pred_check
          %p506 = pneg %p245
        $region46: #{feature_extractor.1} parent=11 // pred_check_branch
          %508 = sbr.rel (%p506) target = $region48
        $region47: #{feature_extractor.1} parent=11 // pred_region
          %s510 = ssub.s32 16, 16
          %511 = vsyncadd [#allocation15], %s510
          %s513 = sshll.u32 [#allocation16], 4
          %s514 = int_to_ptr.vmem [resolvable:$true] %s513
          %516 = dma.hbm_to_vmem [thread:$0]  %s9, 16, %s514, [#allocation15]
        $region48: #{feature_extractor.1} parent=11 // pred_fallthru
          _
        // Predicated region
        $region49: #{feature_extractor.1} parent=11 // pred_check
          %p517 = pneg %p266
        $region50: #{feature_extractor.1} parent=11 // pred_check_branch
          %519 = sbr.rel (%p517) target = $region52
        $region51: #{feature_extractor.1} parent=11 // pred_region
          %s521 = ssub.s32 12288, 12288
          %522 = vsyncadd [#allocation18], %s521
          %s523 = sshll.u32 [#allocation17], 4
          %s524 = int_to_ptr.vmem [resolvable:$true] %s523
          %529 = dma.hbm_to_vmem [thread:$0]  %s10, 12288, %s524, [#allocation18], 256, 256, 16
        $region52: #{feature_extractor.1} parent=11 // pred_fallthru
          _
        // Predicated region
        $region53: #{feature_extractor.1} parent=11 // pred_check
          %p530 = pneg %p287
        $region54: #{feature_extractor.1} parent=11 // pred_check_branch
          %532 = sbr.rel (%p530) target = $region56
        $region55: #{feature_extractor.1} parent=11 // pred_region
          %s534 = ssub.s32 32, 32
          %535 = vsyncadd [#allocation18], %s534
          %s537 = sshll.u32 [#allocation19], 4
          %s538 = int_to_ptr.vmem [resolvable:$true] %s537
          %540 = dma.hbm_to_vmem [thread:$0]  %s11, 32, %s538, [#allocation18]
        $region56: #{feature_extractor.1} parent=11 // pred_fallthru
          _
        // Predicated region
        $region57: #{feature_extractor.1} parent=11 // pred_check
          %p541 = pneg %p308
        $region58: #{feature_extractor.1} parent=11 // pred_check_branch
          %543 = sbr.rel (%p541) target = $region60
        $region59: #{feature_extractor.1} parent=11 // pred_region
          %s545 = ssub.s32 32, 32
          %546 = vsyncadd [#allocation21], %s545
          %s548 = sshll.u32 [#allocation20], 4
          %s549 = int_to_ptr.vmem [resolvable:$true] %s548
          %551 = dma.hbm_to_vmem [thread:$0]  %s12, 32, %s549, [#allocation21]
        $region60: #{feature_extractor.1} parent=11 // pred_fallthru
          _
        // Predicated region
        $region61: #{feature_extractor.1} parent=11 // pred_check
          %p552 = pneg %p329
        $region62: #{feature_extractor.1} parent=11 // pred_check_branch
          %554 = sbr.rel (%p552) target = $region64
        $region63: #{feature_extractor.1} parent=11 // pred_region
          %s556 = ssub.s32 49152, 49152
          %557 = vsyncadd [#allocation21], %s556
          %s558 = sshll.u32 [#allocation22], 4
          %s559 = int_to_ptr.vmem [resolvable:$true] %s558
          %564 = dma.hbm_to_vmem [thread:$0]  %s13, 49152, %s559, [#allocation21], 512, 512, 32
        $region64: #{feature_extractor.1} parent=11 // pred_fallthru
          _
        // Predicated region
        $region65: #{feature_extractor.1} parent=11 // pred_check
          %p565 = pneg %p350
        $region66: #{feature_extractor.1} parent=11 // pred_check_branch
          %567 = sbr.rel (%p565) target = $region68
        $region67: #{feature_extractor.1} parent=11 // pred_region
          %s569 = ssub.s32 64, 64
          %570 = vsyncadd [#allocation24], %s569
          %s572 = sshll.u32 [#allocation23], 4
          %s573 = int_to_ptr.vmem [resolvable:$true] %s572
          %575 = dma.hbm_to_vmem [thread:$0]  %s14, 64, %s573, [#allocation24]
        $region68: #{feature_extractor.1} parent=11 // pred_fallthru
          _
        // Predicated region
        $region69: #{feature_extractor.1} parent=11 // pred_check
          %p576 = pneg %p371
        $region70: #{feature_extractor.1} parent=11 // pred_check_branch
          %578 = sbr.rel (%p576) target = $region72
        $region71: #{feature_extractor.1} parent=11 // pred_region
          %s580 = ssub.s32 64, 64
          %581 = vsyncadd [#allocation24], %s580
          %s583 = sshll.u32 [#allocation25], 4
          %s584 = int_to_ptr.vmem [resolvable:$true] %s583
          %586 = dma.hbm_to_vmem [thread:$0]  %s15, 64, %s584, [#allocation24]
        $region72: #{feature_extractor.1} parent=11 // pred_fallthru
          _
      $region12: #{feature_extractor.1} parent=5 // pred_fallthru
        _
      %p587 = scmp.lt.s32.totalorder %s30, 2
      // Predicated region
      $region73: #{feature_extractor.1} parent=5 // pred_check
        %p588 = pneg %p587
      $region74: #{feature_extractor.1} parent=5 // pred_check_branch
        %590 = sbr.rel (%p588) target = $region76
      $region75: #{feature_extractor.1} parent=5 // pred_region
        // Predicated region
        $region77: #{feature_extractor.1} parent=75 // pred_check
          %p591 = pneg %p50
        $region78: #{feature_extractor.1} parent=75 // pred_check_branch
          %593 = sbr.rel (%p591) target = $region80
        $region79: #{feature_extractor.1} parent=75 // pred_region
          %p594 = scmp.lt.s32.totalorder %s30, 1
          %s595 = scalar_select %p594, %s30, 1
          %s596 = smul.addr %s595, 8
          %s597 = smul.addr %s596, 8
          %s598 = scalar_lea.vmem %s0, %s597
        $region80: #{feature_extractor.1} parent=75 // pred_fallthru
          _
      $region76: #{feature_extractor.1} parent=5 // pred_fallthru
        _
      %p599 = scmp.le.s32.totalorder 1, %s30
      %p600 = scmp.lt.s32.totalorder %s30, 3
      %p601 = pnand %p599, %p600
      %p602 = pneg %p601
      // Predicated region
      $region81: #{feature_extractor.1} parent=5 // pred_check
        _
      $region82: #{feature_extractor.1} parent=5 // pred_check_branch
        %604 = sbr.rel (%p601) target = $region84
      $region83: #{feature_extractor.1} parent=5 // pred_region
        %s605 = ssub.s32 %s30, 1
        // Predicated region
        $region85: #{feature_extractor.1} parent=83 // pred_check
          %p606 = pneg %p77
        $region86: #{feature_extractor.1} parent=83 // pred_check_branch
          %608 = sbr.rel (%p606) target = $region88
        $region87: #{feature_extractor.1} parent=83 // pred_region
          %609 = dma.done [#allocation4], 112
        $region88: #{feature_extractor.1} parent=83 // pred_fallthru
          _
        // Predicated region
        $region89: #{feature_extractor.1} parent=83 // pred_check
          %p610 = pneg %p98
        $region90: #{feature_extractor.1} parent=83 // pred_check_branch
          %612 = sbr.rel (%p610) target = $region92
        $region91: #{feature_extractor.1} parent=83 // pred_region
          %613 = dma.done [#allocation6], 16
        $region92: #{feature_extractor.1} parent=83 // pred_fallthru
          _
        // Predicated region
        $region93: #{feature_extractor.1} parent=83 // pred_check
          %p614 = pneg %p119
        $region94: #{feature_extractor.1} parent=83 // pred_check_branch
          %616 = sbr.rel (%p614) target = $region96
        $region95: #{feature_extractor.1} parent=83 // pred_region
          %617 = dma.done [#allocation6], 16
        $region96: #{feature_extractor.1} parent=83 // pred_fallthru
          _
        // Predicated region
        $region97: #{feature_extractor.1} parent=83 // pred_check
          %p618 = pneg %p140
        $region98: #{feature_extractor.1} parent=83 // pred_check_branch
          %620 = sbr.rel (%p618) target = $region100
        $region99: #{feature_extractor.1} parent=83 // pred_region
          %621 = dma.done [#allocation9], 1536
        $region100: #{feature_extractor.1} parent=83 // pred_fallthru
          _
        // Predicated region
        $region101: #{feature_extractor.1} parent=83 // pred_check
          %p622 = pneg %p161
        $region102: #{feature_extractor.1} parent=83 // pred_check_branch
          %624 = sbr.rel (%p622) target = $region104
        $region103: #{feature_extractor.1} parent=83 // pred_region
          %625 = dma.done [#allocation9], 16
        $region104: #{feature_extractor.1} parent=83 // pred_fallthru
          _
        // Predicated region
        $region105: #{feature_extractor.1} parent=83 // pred_check
          %p626 = pneg %p182
        $region106: #{feature_extractor.1} parent=83 // pred_check_branch
          %628 = sbr.rel (%p626) target = $region108
        $region107: #{feature_extractor.1} parent=83 // pred_region
          %629 = dma.done [#allocation12], 16
        $region108: #{feature_extractor.1} parent=83 // pred_fallthru
          _
        // Predicated region
        $region109: #{feature_extractor.1} parent=83 // pred_check
          %p630 = pneg %p203
        $region110: #{feature_extractor.1} parent=83 // pred_check_branch
          %632 = sbr.rel (%p630) target = $region112
        $region111: #{feature_extractor.1} parent=83 // pred_region
          %633 = dma.done [#allocation12], 3072
        $region112: #{feature_extractor.1} parent=83 // pred_fallthru
          _
        // Predicated region
        $region113: #{feature_extractor.1} parent=83 // pred_check
          %p634 = pneg %p224
        $region114: #{feature_extractor.1} parent=83 // pred_check_branch
          %636 = sbr.rel (%p634) target = $region116
        $region115: #{feature_extractor.1} parent=83 // pred_region
          %637 = dma.done [#allocation15], 16
        $region116: #{feature_extractor.1} parent=83 // pred_fallthru
          _
        // Predicated region
        $region117: #{feature_extractor.1} parent=83 // pred_check
          %p638 = pneg %p245
        $region118: #{feature_extractor.1} parent=83 // pred_check_branch
          %640 = sbr.rel (%p638) target = $region120
        $region119: #{feature_extractor.1} parent=83 // pred_region
          %641 = dma.done [#allocation15], 16
        $region120: #{feature_extractor.1} parent=83 // pred_fallthru
          _
        // Predicated region
        $region121: #{feature_extractor.1} parent=83 // pred_check
          %p642 = pneg %p266
        $region122: #{feature_extractor.1} parent=83 // pred_check_branch
          %644 = sbr.rel (%p642) target = $region124
        $region123: #{feature_extractor.1} parent=83 // pred_region
          %645 = dma.done [#allocation18], 12288
        $region124: #{feature_extractor.1} parent=83 // pred_fallthru
          _
        // Predicated region
        $region125: #{feature_extractor.1} parent=83 // pred_check
          %p646 = pneg %p287
        $region126: #{feature_extractor.1} parent=83 // pred_check_branch
          %648 = sbr.rel (%p646) target = $region128
        $region127: #{feature_extractor.1} parent=83 // pred_region
          %649 = dma.done [#allocation18], 32
        $region128: #{feature_extractor.1} parent=83 // pred_fallthru
          _
        // Predicated region
        $region129: #{feature_extractor.1} parent=83 // pred_check
          %p650 = pneg %p308
        $region130: #{feature_extractor.1} parent=83 // pred_check_branch
          %652 = sbr.rel (%p650) target = $region132
        $region131: #{feature_extractor.1} parent=83 // pred_region
          %653 = dma.done [#allocation21], 32
        $region132: #{feature_extractor.1} parent=83 // pred_fallthru
          _
        // Predicated region
        $region133: #{feature_extractor.1} parent=83 // pred_check
          %p654 = pneg %p329
        $region134: #{feature_extractor.1} parent=83 // pred_check_branch
          %656 = sbr.rel (%p654) target = $region136
        $region135: #{feature_extractor.1} parent=83 // pred_region
          %657 = dma.done [#allocation21], 49152
        $region136: #{feature_extractor.1} parent=83 // pred_fallthru
          _
        // Predicated region
        $region137: #{feature_extractor.1} parent=83 // pred_check
          %p658 = pneg %p350
        $region138: #{feature_extractor.1} parent=83 // pred_check_branch
          %660 = sbr.rel (%p658) target = $region140
        $region139: #{feature_extractor.1} parent=83 // pred_region
          %661 = dma.done [#allocation24], 64
        $region140: #{feature_extractor.1} parent=83 // pred_fallthru
          _
        // Predicated region
        $region141: #{feature_extractor.1} parent=83 // pred_check
          %p662 = pneg %p371
        $region142: #{feature_extractor.1} parent=83 // pred_check_branch
          %664 = sbr.rel (%p662) target = $region144
        $region143: #{feature_extractor.1} parent=83 // pred_region
          %665 = dma.done [#allocation24], 64
        $region144: #{feature_extractor.1} parent=83 // pred_fallthru
          _
        %p666 = scmp.lt.s32.totalorder %s35, 1
        %s667 = scalar_select %p666, %s35, 1
        %s668 = smul.addr %s667, 8
        %s669 = smul.addr %s668, 8
        %s670 = scalar_lea.vmem %s0, %s669
        %p671 = pneg %p56
        %p672 = pneg %p53
        %p673 = pneg %p77
        %p674 = pneg %p74
        %p675 = pneg %p98
        %p676 = pneg %p95
        %p677 = pneg %p119
        %p678 = pneg %p116
        %p679 = pneg %p140
        %p680 = pneg %p137
        %p681 = pneg %p161
        %p682 = pneg %p158
        %p683 = pneg %p182
        %p684 = pneg %p179
        %p685 = pneg %p203
        %p686 = pneg %p200
        %p687 = pneg %p224
        %p688 = pneg %p221
        %p689 = pneg %p245
        %p690 = pneg %p242
        %p691 = pneg %p266
        %p692 = pneg %p263
        %p693 = pneg %p287
        %p694 = pneg %p284
        %p695 = pneg %p308
        %p696 = pneg %p305
        %p697 = pneg %p329
        %p698 = pneg %p326
        %p699 = pneg %p350
        %p700 = pneg %p347
        %p701 = pneg %p371
        %p702 = pneg %p368
        %p703 = pneg %p397
        %p704 = pneg %p394
        %p705 = scmp.lt.s32.totalorder %s35, 1
        %s706 = scalar_select %p705, %s35, 1
        %s707 = smul.addr %s706, 4
        %s708 = smul.addr %s707, 4
        %s709 = scalar_lea.vmem %s16, %s708
        %p710 = scmp.lt.s32.totalorder %s35, 1
        %s711 = scalar_select %p710, %s35, 1
        %s712 = smul.addr %s711, 8
        %s713 = smul.addr %s712, 8
        %s714 = scalar_lea.vmem %s0, %s713
        %p715 = scmp.lt.s32.totalorder %s35, 1
        %s716 = scalar_select %p715, %s35, 1
        %s717 = smul.addr %s716, 4
        %s718 = smul.addr %s717, 4
        %s719 = scalar_lea.vmem %s16, %s718
        %v720 = vld [vmem:[%s714] sm:$0xff]
        %v721 = vld [vmem:[%s714 + $0x8] sm:$0xff]
        %v722 = vld [vmem:[%s714 + $0x10] sm:$0xff]
        %v723 = vld [vmem:[%s714 + $0x18] sm:$0xff]
        %v724 = vld [vmem:[%s714 + $0x20] sm:$0xff]
        %v725 = vld [vmem:[%s714 + $0x28] sm:$0xff]
        %v726 = vld [vmem:[%s714 + $0x30] sm:$0xff]
        %v727 = vld [vmem:[%s714 + $0x38] sm:$0xff]
        %v728 = vld [vmem:[#allocation3] sm:$0x1]
        %730 = vset.pattern.permute.xlu0 0
        %731 = vperm.xlu0 %730, %v720
        %v732 = vpop.permute.xlu0 %731
        %735 = vset.pattern.permute.xlu0 0
        %736 = vperm.xlu0 %735, %v721
        %v737 = vpop.permute.xlu0 %736
        %740 = vset.pattern.permute.xlu0 0
        %741 = vperm.xlu0 %740, %v722
        %v742 = vpop.permute.xlu0 %741
        %745 = vset.pattern.permute.xlu0 0
        %746 = vperm.xlu0 %745, %v723
        %v747 = vpop.permute.xlu0 %746
        %750 = vset.pattern.permute.xlu0 0
        %751 = vperm.xlu0 %750, %v724
        %v752 = vpop.permute.xlu0 %751
        %755 = vset.pattern.permute.xlu0 0
        %756 = vperm.xlu0 %755, %v725
        %v757 = vpop.permute.xlu0 %756
        %760 = vset.pattern.permute.xlu0 0
        %761 = vperm.xlu0 %760, %v726
        %v762 = vpop.permute.xlu0 %761
        %765 = vset.pattern.permute.xlu0 0
        %766 = vperm.xlu0 %765, %v727
        %v767 = vpop.permute.xlu0 %766
        %v770 = vlaneseq
        %v771 = vshrl.u32 %v770, 7
        %v772 = vsub.s32 0, %v771
        %v773 = vrot.slane %v728, %v772
        %v775 = vmul.f32 %v732, %v773
        %v776 = vmul.f32 %v737, %v773
        %v777 = vmul.f32 %v742, %v773
        %v778 = vmul.f32 %v747, %v773
        %v779 = vmul.f32 %v752, %v773
        %v780 = vmul.f32 %v757, %v773
        %v781 = vmul.f32 %v762, %v773
        %v782 = vmul.f32 %v767, %v773
        %v783 = vadd.f32 %v775, 0.0
        %v784 = vadd.f32 %v776, 0.0
        %v785 = vadd.f32 %v777, 0.0
        %v786 = vadd.f32 %v778, 0.0
        %v787 = vadd.f32 %v779, 0.0
        %v788 = vadd.f32 %v780, 0.0
        %v789 = vadd.f32 %v781, 0.0
        %v790 = vadd.f32 %v782, 0.0
        %s791 = scalar_lea.vmem [#allocation3], 1
        %v792 = vld [vmem:[%s791] sm:$0x1]
        %v794 = vlaneseq
        %v795 = vshrl.u32 %v794, 7
        %v796 = vsub.s32 0, %v795
        %v797 = vrot.slane %v792, %v796
        %v799 = vmul.f32 %v732, %v797
        %v800 = vmul.f32 %v737, %v797
        %v801 = vmul.f32 %v742, %v797
        %v802 = vmul.f32 %v747, %v797
        %v803 = vmul.f32 %v752, %v797
        %v804 = vmul.f32 %v757, %v797
        %v805 = vmul.f32 %v762, %v797
        %v806 = vmul.f32 %v767, %v797
        %vm815 = vcmask 1046528
        %v816 = vrot.slane %v799, 1
        %v817 = vrot.slane %v800, 1
        %v818 = vsel %vm815, %v816, %v817
        %v819 = vrot.slane %v801, 1
        %v820 = vsel %vm815, %v817, %v819
        %v821 = vrot.slane %v802, 1
        %v822 = vsel %vm815, %v819, %v821
        %v823 = vrot.slane %v803, 1
        %v824 = vsel %vm815, %v821, %v823
        %v825 = vrot.slane %v804, 1
        %v826 = vsel %vm815, %v823, %v825
        %v827 = vrot.slane %v805, 1
        %v828 = vsel %vm815, %v825, %v827
        %v829 = vrot.slane %v806, 1
        %v830 = vsel %vm815, %v827, %v829
        %v839 = vadd.f32 %v783, %v818
        %v840 = vadd.f32 %v784, %v820
        %v841 = vadd.f32 %v785, %v822
        %v842 = vadd.f32 %v786, %v824
        %v843 = vadd.f32 %v787, %v826
        %v844 = vadd.f32 %v788, %v828
        %v845 = vadd.f32 %v789, %v830
        %v846 = vadd.f32 %v790, %v829
        %s847 = scalar_lea.vmem [#allocation3], 2
        %v848 = vld [vmem:[%s847] sm:$0x1]
        %v850 = vlaneseq
        %v851 = vshrl.u32 %v850, 7
        %v852 = vsub.s32 0, %v851
        %v853 = vrot.slane %v848, %v852
        %v855 = vmul.f32 %v732, %v853
        %v856 = vmul.f32 %v737, %v853
        %v857 = vmul.f32 %v742, %v853
        %v858 = vmul.f32 %v747, %v853
        %v859 = vmul.f32 %v752, %v853
        %v860 = vmul.f32 %v757, %v853
        %v861 = vmul.f32 %v762, %v853
        %v862 = vmul.f32 %v767, %v853
        %vm871 = vcmask 1045504
        %v872 = vrot.slane %v855, 2
        %v873 = vrot.slane %v856, 2
        %v874 = vsel %vm871, %v872, %v873
        %v875 = vrot.slane %v857, 2
        %v876 = vsel %vm871, %v873, %v875
        %v877 = vrot.slane %v858, 2
        %v878 = vsel %vm871, %v875, %v877
        %v879 = vrot.slane %v859, 2
        %v880 = vsel %vm871, %v877, %v879
        %v881 = vrot.slane %v860, 2
        %v882 = vsel %vm871, %v879, %v881
        %v883 = vrot.slane %v861, 2
        %v884 = vsel %vm871, %v881, %v883
        %v885 = vrot.slane %v862, 2
        %v886 = vsel %vm871, %v883, %v885
        %v895 = vadd.f32 %v839, %v874
        %v896 = vadd.f32 %v840, %v876
        %v897 = vadd.f32 %v841, %v878
        %v898 = vadd.f32 %v842, %v880
        %v899 = vadd.f32 %v843, %v882
        %v900 = vadd.f32 %v844, %v884
        %v901 = vadd.f32 %v845, %v886
        %v902 = vadd.f32 %v846, %v885
        %s903 = scalar_lea.vmem [#allocation3], 3
        %v904 = vld [vmem:[%s903] sm:$0x1]
        %v906 = vlaneseq
        %v907 = vshrl.u32 %v906, 7
        %v908 = vsub.s32 0, %v907
        %v909 = vrot.slane %v904, %v908
        %v911 = vmul.f32 %v732, %v909
        %v912 = vmul.f32 %v737, %v909
        %v913 = vmul.f32 %v742, %v909
        %v914 = vmul.f32 %v747, %v909
        %v915 = vmul.f32 %v752, %v909
        %v916 = vmul.f32 %v757, %v909
        %v917 = vmul.f32 %v762, %v909
        %v918 = vmul.f32 %v767, %v909
        %vm927 = vcmask 1044480
        %v928 = vrot.slane %v911, 3
        %v929 = vrot.slane %v912, 3
        %v930 = vsel %vm927, %v928, %v929
        %v931 = vrot.slane %v913, 3
        %v932 = vsel %vm927, %v929, %v931
        %v933 = vrot.slane %v914, 3
        %v934 = vsel %vm927, %v931, %v933
        %v935 = vrot.slane %v915, 3
        %v936 = vsel %vm927, %v933, %v935
        %v937 = vrot.slane %v916, 3
        %v938 = vsel %vm927, %v935, %v937
        %v939 = vrot.slane %v917, 3
        %v940 = vsel %vm927, %v937, %v939
        %v941 = vrot.slane %v918, 3
        %v942 = vsel %vm927, %v939, %v941
        %v951 = vadd.f32 %v895, %v930
        %v952 = vadd.f32 %v896, %v932
        %v953 = vadd.f32 %v897, %v934
        %v954 = vadd.f32 %v898, %v936
        %v955 = vadd.f32 %v899, %v938
        %v956 = vadd.f32 %v900, %v940
        %v957 = vadd.f32 %v901, %v942
        %v958 = vadd.f32 %v902, %v941
        %s959 = scalar_lea.vmem [#allocation3], 4
        %v960 = vld [vmem:[%s959] sm:$0x1]
        %v962 = vlaneseq
        %v963 = vshrl.u32 %v962, 7
        %v964 = vsub.s32 0, %v963
        %v965 = vrot.slane %v960, %v964
        %v967 = vmul.f32 %v732, %v965
        %v968 = vmul.f32 %v737, %v965
        %v969 = vmul.f32 %v742, %v965
        %v970 = vmul.f32 %v747, %v965
        %v971 = vmul.f32 %v752, %v965
        %v972 = vmul.f32 %v757, %v965
        %v973 = vmul.f32 %v762, %v965
        %v974 = vmul.f32 %v767, %v965
        %vm983 = vcmask 1043456
        %v984 = vrot.slane %v967, 4
        %v985 = vrot.slane %v968, 4
        %v986 = vsel %vm983, %v984, %v985
        %v987 = vrot.slane %v969, 4
        %v988 = vsel %vm983, %v985, %v987
        %v989 = vrot.slane %v970, 4
        %v990 = vsel %vm983, %v987, %v989
        %v991 = vrot.slane %v971, 4
        %v992 = vsel %vm983, %v989, %v991
        %v993 = vrot.slane %v972, 4
        %v994 = vsel %vm983, %v991, %v993
        %v995 = vrot.slane %v973, 4
        %v996 = vsel %vm983, %v993, %v995
        %v997 = vrot.slane %v974, 4
        %v998 = vsel %vm983, %v995, %v997
        %v1007 = vadd.f32 %v951, %v986
        %v1008 = vadd.f32 %v952, %v988
        %v1009 = vadd.f32 %v953, %v990
        %v1010 = vadd.f32 %v954, %v992
        %v1011 = vadd.f32 %v955, %v994
        %v1012 = vadd.f32 %v956, %v996
        %v1013 = vadd.f32 %v957, %v998
        %v1014 = vadd.f32 %v958, %v997
        %s1015 = scalar_lea.vmem [#allocation3], 5
        %v1016 = vld [vmem:[%s1015] sm:$0x1]
        %v1018 = vlaneseq
        %v1019 = vshrl.u32 %v1018, 7
        %v1020 = vsub.s32 0, %v1019
        %v1021 = vrot.slane %v1016, %v1020
        %v1023 = vmul.f32 %v732, %v1021
        %v1024 = vmul.f32 %v737, %v1021
        %v1025 = vmul.f32 %v742, %v1021
        %v1026 = vmul.f32 %v747, %v1021
        %v1027 = vmul.f32 %v752, %v1021
        %v1028 = vmul.f32 %v757, %v1021
        %v1029 = vmul.f32 %v762, %v1021
        %v1030 = vmul.f32 %v767, %v1021
        %vm1039 = vcmask 1042432
        %v1040 = vrot.slane %v1023, 5
        %v1041 = vrot.slane %v1024, 5
        %v1042 = vsel %vm1039, %v1040, %v1041
        %v1043 = vrot.slane %v1025, 5
        %v1044 = vsel %vm1039, %v1041, %v1043
        %v1045 = vrot.slane %v1026, 5
        %v1046 = vsel %vm1039, %v1043, %v1045
        %v1047 = vrot.slane %v1027, 5
        %v1048 = vsel %vm1039, %v1045, %v1047
        %v1049 = vrot.slane %v1028, 5
        %v1050 = vsel %vm1039, %v1047, %v1049
        %v1051 = vrot.slane %v1029, 5
        %v1052 = vsel %vm1039, %v1049, %v1051
        %v1053 = vrot.slane %v1030, 5
        %v1054 = vsel %vm1039, %v1051, %v1053
        %v1063 = vadd.f32 %v1007, %v1042
        %v1064 = vadd.f32 %v1008, %v1044
        %v1065 = vadd.f32 %v1009, %v1046
        %v1066 = vadd.f32 %v1010, %v1048
        %v1067 = vadd.f32 %v1011, %v1050
        %v1068 = vadd.f32 %v1012, %v1052
        %v1069 = vadd.f32 %v1013, %v1054
        %v1070 = vadd.f32 %v1014, %v1053
        %s1071 = scalar_lea.vmem [#allocation3], 6
        %v1072 = vld [vmem:[%s1071] sm:$0x1]
        %v1074 = vlaneseq
        %v1075 = vshrl.u32 %v1074, 7
        %v1076 = vsub.s32 0, %v1075
        %v1077 = vrot.slane %v1072, %v1076
        %v1079 = vmul.f32 %v732, %v1077
        %v1080 = vmul.f32 %v737, %v1077
        %v1081 = vmul.f32 %v742, %v1077
        %v1082 = vmul.f32 %v747, %v1077
        %v1083 = vmul.f32 %v752, %v1077
        %v1084 = vmul.f32 %v757, %v1077
        %v1085 = vmul.f32 %v762, %v1077
        %v1086 = vmul.f32 %v767, %v1077
        %vm1095 = vcmask 1041408
        %v1096 = vrot.slane %v1079, 6
        %v1097 = vrot.slane %v1080, 6
        %v1098 = vsel %vm1095, %v1096, %v1097
        %v1099 = vrot.slane %v1081, 6
        %v1100 = vsel %vm1095, %v1097, %v1099
        %v1101 = vrot.slane %v1082, 6
        %v1102 = vsel %vm1095, %v1099, %v1101
        %v1103 = vrot.slane %v1083, 6
        %v1104 = vsel %vm1095, %v1101, %v1103
        %v1105 = vrot.slane %v1084, 6
        %v1106 = vsel %vm1095, %v1103, %v1105
        %v1107 = vrot.slane %v1085, 6
        %v1108 = vsel %vm1095, %v1105, %v1107
        %v1109 = vrot.slane %v1086, 6
        %v1110 = vsel %vm1095, %v1107, %v1109
        %v1119 = vadd.f32 %v1063, %v1098
        %v1120 = vadd.f32 %v1064, %v1100
        %v1121 = vadd.f32 %v1065, %v1102
        %v1122 = vadd.f32 %v1066, %v1104
        %v1123 = vadd.f32 %v1067, %v1106
        %v1124 = vadd.f32 %v1068, %v1108
        %v1125 = vadd.f32 %v1069, %v1110
        %v1126 = vadd.f32 %v1070, %v1109
        %v1127 = vld [vmem:[#allocation5] sm:$0x1]
        %v1129 = vlaneseq
        %v1130 = vshrl.u32 %v1129, 7
        %v1131 = vsub.s32 0, %v1130
        %v1132 = vrot.slane %v1127, %v1131
        %v1134 = vmul.f32 %v1119, %v1132
        %v1135 = vmul.f32 %v1120, %v1132
        %v1136 = vmul.f32 %v1121, %v1132
        %v1137 = vmul.f32 %v1122, %v1132
        %v1138 = vmul.f32 %v1123, %v1132
        %v1139 = vmul.f32 %v1124, %v1132
        %v1140 = vmul.f32 %v1125, %v1132
        %v1141 = vmul.f32 %v1126, %v1132
        %v1142 = vld [vmem:[#allocation7] sm:$0x1]
        %v1144 = vlaneseq
        %v1145 = vshrl.u32 %v1144, 7
        %v1146 = vsub.s32 0, %v1145
        %v1147 = vrot.slane %v1142, %v1146
        %v1149 = vadd.f32 %v1134, %v1147
        %v1150 = vadd.f32 %v1135, %v1147
        %v1151 = vadd.f32 %v1136, %v1147
        %v1152 = vadd.f32 %v1137, %v1147
        %v1153 = vadd.f32 %v1138, %v1147
        %v1154 = vadd.f32 %v1139, %v1147
        %v1155 = vadd.f32 %v1140, %v1147
        %v1156 = vadd.f32 %v1141, %v1147
        %v1157 = vmax.f32 %v1149, 0.0
        %v1158 = vmax.f32 %v1150, 0.0
        %v1159 = vmax.f32 %v1151, 0.0
        %v1160 = vmax.f32 %v1152, 0.0
        %v1161 = vmax.f32 %v1153, 0.0
        %v1162 = vmax.f32 %v1154, 0.0
        %v1163 = vmax.f32 %v1155, 0.0
        %v1164 = vmax.f32 %v1156, 0.0
        %vm1165 = vcmask 261120
        %1166 = vst.msk [vmem:[#allocation2] sm:$0xff] %vm1165, %v1157
        %1167 = vst.msk [vmem:[#allocation2 + $0x8] sm:$0xff] %vm1165, %v1158
        %1168 = vst.msk [vmem:[#allocation2 + $0x10] sm:$0xff] %vm1165, %v1159
        %1169 = vst.msk [vmem:[#allocation2 + $0x18] sm:$0xff] %vm1165, %v1160
        %1170 = vst.msk [vmem:[#allocation2 + $0x20] sm:$0xff] %vm1165, %v1161
        %1171 = vst.msk [vmem:[#allocation2 + $0x28] sm:$0xff] %vm1165, %v1162
        %1172 = vst.msk [vmem:[#allocation2 + $0x30] sm:$0xff] %vm1165, %v1163
        %vm1173 = vcmask 254976
        %1174 = vst.msk [vmem:[#allocation2 + $0x38] sm:$0x3] %vm1173, %v1164
        %v1175 = vld [vmem:[#allocation2] ss:$2 sm:$0xff]
        %s1176 = scalar_lea.vmem [#allocation2], 16
        %v1177 = vld [vmem:[%s1176] ss:$2 sm:$0xff]
        %s1178 = scalar_lea.vmem [#allocation2], 32
        %v1179 = vld [vmem:[%s1178] ss:$2 sm:$0xff]
        %s1180 = scalar_lea.vmem [#allocation2], 48
        %v1181 = vld [vmem:[%s1180] ss:$2 sm:$0x1f]
        %s1182 = scalar_lea.vmem [#allocation2], 1
        %v1183 = vld [vmem:[%s1182] ss:$2 sm:$0xff]
        %s1184 = scalar_lea.vmem [#allocation2], 17
        %v1185 = vld [vmem:[%s1184] ss:$2 sm:$0xff]
        %s1186 = scalar_lea.vmem [#allocation2], 33
        %v1187 = vld [vmem:[%s1186] ss:$2 sm:$0xff]
        %s1188 = scalar_lea.vmem [#allocation2], 49
        %v1189 = vld [vmem:[%s1188] ss:$2 sm:$0x1f]
        %v1190 = vmax.f32 %v1175, %v1183
        %v1191 = vmax.f32 %v1177, %v1185
        %v1192 = vmax.f32 %v1179, %v1187
        %v1193 = vmax.f32 %v1181, %v1189
        %v1194 = vld [vmem:[#allocation8] sm:$0xff]
        %v1195 = vld [vmem:[#allocation8 + $0x8] sm:$0xff]
        %v1196 = vld [vmem:[#allocation8 + $0x10] sm:$0xff]
        %v1197 = vld [vmem:[#allocation8 + $0x18] sm:$0xff]
        %s1198 = scalar_lea.vmem [#allocation8], 32
        %v1199 = vld [vmem:[%s1198] sm:$0xff]
        %v1200 = vld [vmem:[%s1198 + $0x8] sm:$0xff]
        %v1201 = vld [vmem:[%s1198 + $0x10] sm:$0xff]
        %v1202 = vld [vmem:[%s1198 + $0x18] sm:$0xff]
        %v1207 = vrot.slane %v1190, 1
        %v1208 = vrot.slane %v1191, 1
        %v1209 = vsel %vm815, %v1207, %v1208
        %v1210 = vrot.slane %v1192, 1
        %v1211 = vsel %vm815, %v1208, %v1210
        %v1212 = vrot.slane %v1193, 1
        %v1213 = vsel %vm815, %v1210, %v1212
        %v1214 = vsel %vm1165, %v1209, 0
        %v1216 = vsel %vm1165, %v1211, 0
        %v1218 = vsel %vm1165, %v1213, 0
        %v1220 = vsel %vm1165, %v1212, 0
        %1222 = vmatprep.subr.mxu0 0.0
        %1223 = vmatpush1.msra.mxu0 %v1199
        %1224 = vmatprep.subr.mxu0 0.0
        %1225 = vmatpush1.msra.mxu0 %v1200
        %1226 = vmatprep.subr.mxu0 0.0
        %1227 = vmatpush1.msra.mxu0 %v1201
        %1228 = vmatprep.subr.mxu0 0.0
        %1229 = vmatpush1.msra.mxu0 %v1202
        %1230 = vmatprep.subr.mxu0 0.0
        %1231 = vmatpush1.msra.mxu0 0.0
        %1232 = vmatprep.subr.mxu0 0.0
        %1233 = vmatpush1.msra.mxu0 0.0
        %1234 = vmatprep.subr.mxu0 0.0
        %1235 = vmatpush1.msra.mxu0 0.0
        %1236 = vmatprep.subr.mxu0 0.0
        %1237 = vmatpush1.msra.mxu0 0.0
        %1238 = vmatprep.subr.mxu0 0.0
        %1239 = vmatpush1.msra.mxu0 0.0
        %1240 = vmatprep.subr.mxu0 0.0
        %1241 = vmatpush1.msra.mxu0 0.0
        %1242 = vmatprep.subr.mxu0 0.0
        %1243 = vmatpush1.msra.mxu0 0.0
        %1244 = vmatprep.subr.mxu0 0.0
        %1245 = vmatpush1.msra.mxu0 0.0
        %1246 = vmatprep.subr.mxu0 0.0
        %1247 = vmatpush1.msra.mxu0 0.0
        %1248 = vmatprep.subr.mxu0 0.0
        %1249 = vmatpush1.msra.mxu0 0.0
        %1250 = vmatprep.subr.mxu0 0.0
        %1251 = vmatpush1.msra.mxu0 0.0
        %1252 = vmatprep.subr.mxu0 0.0
        %1253 = vmatpush1.msra.mxu0 0.0
        %1254 = vmatprep.subr.mxu0 0.0
        %1255 = vmatpush1.msra.mxu0 0.0
        %1256 = vmatprep.subr.mxu0 0.0
        %1257 = vmatpush1.msra.mxu0 0.0
        %1258 = vmatprep.subr.mxu0 0.0
        %1259 = vmatpush1.msra.mxu0 0.0
        %1260 = vmatprep.subr.mxu0 0.0
        %1261 = vmatpush1.msra.mxu0 0.0
        %1262 = vmatprep.subr.mxu0 0.0
        %1263 = vmatpush1.msra.mxu0 0.0
        %1264 = vmatprep.subr.mxu0 0.0
        %1265 = vmatpush1.msra.mxu0 0.0
        %1266 = vmatprep.subr.mxu0 0.0
        %1267 = vmatpush1.msra.mxu0 0.0
        %1268 = vmatprep.subr.mxu0 0.0
        %1269 = vmatpush1.msra.mxu0 0.0
        %1270 = vmatprep.subr.mxu0 0.0
        %1271 = vmatpush1.msra.mxu0 0.0
        %1272 = vmatprep.subr.mxu0 0.0
        %1273 = vmatpush1.msra.mxu0 0.0
        %1274 = vmatprep.subr.mxu0 0.0
        %1275 = vmatpush1.msra.mxu0 0.0
        %1276 = vmatprep.subr.mxu0 0.0
        %1277 = vmatpush1.msra.mxu0 0.0
        %1278 = vmatprep.subr.mxu0 0.0
        %1279 = vmatpush1.msra.mxu0 0.0
        %1280 = vmatprep.subr.mxu0 0.0
        %1281 = vmatpush1.msra.mxu0 0.0
        %1282 = vmatprep.subr.mxu0 0.0
        %1283 = vmatpush1.msra.mxu0 0.0
        %1284 = vmatprep.subr.mxu0 0.0
        %1285 = vmatpush1.msra.mxu0 0.0
        %1286 = vmatprep.mubr.f32.mxu0 0.0
        %1287 = vmatmul.mubr.f32.gmra.mrb[0].mxu0 %v1214
        %v1288 = vpop.f32.mrb[0].mxu0
        %v1289 = vadd.f32 0.0, %v1288
        %v1290 = vpop.f32.mrb[0].mxu0
        %1291 = vmatprep.mubr.f32.mxu0 0.0
        %1292 = vmatmul.mubr.f32.gmra.mrb[0].mxu0 %v1216
        %v1293 = vpop.f32.mrb[0].mxu0
        %v1294 = vadd.f32 0.0, %v1293
        %v1295 = vpop.f32.mrb[0].mxu0
        %1296 = vmatprep.mubr.f32.mxu0 0.0
        %1297 = vmatmul.mubr.f32.gmra.mrb[0].mxu0 %v1218
        %v1298 = vpop.f32.mrb[0].mxu0
        %v1299 = vadd.f32 0.0, %v1298
        %v1300 = vpop.f32.mrb[0].mxu0
        %1301 = vmatprep.mubr.f32.mxu0 0.0
        %1302 = vmatmul.mubr.f32.gmra.mrb[0].mxu0 %v1220
        %v1303 = vpop.f32.mrb[0].mxu0
        %v1304 = vadd.f32 0.0, %v1303
        %v1305 = vpop.f32.mrb[0].mxu0
        %1306 = vdwg.mxu0
        %v1307 = vsel %vm1165, %v1190, 0
        %v1309 = vsel %vm1165, %v1191, 0
        %v1311 = vsel %vm1165, %v1192, 0
        %v1313 = vsel %vm1165, %v1193, 0
        %1315 = vmatprep.subr.mxu0 0.0
        %1316 = vmatpush1.msra.mxu0 %v1194
        %1317 = vmatprep.subr.mxu0 0.0
        %1318 = vmatpush1.msra.mxu0 %v1195
        %1319 = vmatprep.subr.mxu0 0.0
        %1320 = vmatpush1.msra.mxu0 %v1196
        %1321 = vmatprep.subr.mxu0 0.0
        %1322 = vmatpush1.msra.mxu0 %v1197
        %1323 = vmatprep.subr.mxu0 0.0
        %1324 = vmatpush1.msra.mxu0 0.0
        %1325 = vmatprep.subr.mxu0 0.0
        %1326 = vmatpush1.msra.mxu0 0.0
        %1327 = vmatprep.subr.mxu0 0.0
        %1328 = vmatpush1.msra.mxu0 0.0
        %1329 = vmatprep.subr.mxu0 0.0
        %1330 = vmatpush1.msra.mxu0 0.0
        %1331 = vmatprep.subr.mxu0 0.0
        %1332 = vmatpush1.msra.mxu0 0.0
        %1333 = vmatprep.subr.mxu0 0.0
        %1334 = vmatpush1.msra.mxu0 0.0
        %1335 = vmatprep.subr.mxu0 0.0
        %1336 = vmatpush1.msra.mxu0 0.0
        %1337 = vmatprep.subr.mxu0 0.0
        %1338 = vmatpush1.msra.mxu0 0.0
        %1339 = vmatprep.subr.mxu0 0.0
        %1340 = vmatpush1.msra.mxu0 0.0
        %1341 = vmatprep.subr.mxu0 0.0
        %1342 = vmatpush1.msra.mxu0 0.0
        %1343 = vmatprep.subr.mxu0 0.0
        %1344 = vmatpush1.msra.mxu0 0.0
        %1345 = vmatprep.subr.mxu0 0.0
        %1346 = vmatpush1.msra.mxu0 0.0
        %1347 = vmatprep.subr.mxu0 0.0
        %1348 = vmatpush1.msra.mxu0 0.0
        %1349 = vmatprep.subr.mxu0 0.0
        %1350 = vmatpush1.msra.mxu0 0.0
        %1351 = vmatprep.subr.mxu0 0.0
        %1352 = vmatpush1.msra.mxu0 0.0
        %1353 = vmatprep.subr.mxu0 0.0
        %1354 = vmatpush1.msra.mxu0 0.0
        %1355 = vmatprep.subr.mxu0 0.0
        %1356 = vmatpush1.msra.mxu0 0.0
        %1357 = vmatprep.subr.mxu0 0.0
        %1358 = vmatpush1.msra.mxu0 0.0
        %1359 = vmatprep.subr.mxu0 0.0
        %1360 = vmatpush1.msra.mxu0 0.0
        %1361 = vmatprep.subr.mxu0 0.0
        %1362 = vmatpush1.msra.mxu0 0.0
        %1363 = vmatprep.subr.mxu0 0.0
        %1364 = vmatpush1.msra.mxu0 0.0
        %1365 = vmatprep.subr.mxu0 0.0
        %1366 = vmatpush1.msra.mxu0 0.0
        %1367 = vmatprep.subr.mxu0 0.0
        %1368 = vmatpush1.msra.mxu0 0.0
        %1369 = vmatprep.subr.mxu0 0.0
        %1370 = vmatpush1.msra.mxu0 0.0
        %1371 = vmatprep.subr.mxu0 0.0
        %1372 = vmatpush1.msra.mxu0 0.0
        %1373 = vmatprep.subr.mxu0 0.0
        %1374 = vmatpush1.msra.mxu0 0.0
        %1375 = vmatprep.subr.mxu0 0.0
        %1376 = vmatpush1.msra.mxu0 0.0
        %1377 = vmatprep.subr.mxu0 0.0
        %1378 = vmatpush1.msra.mxu0 0.0
        %1379 = vmatprep.mubr.f32.mxu0 0.0
        %1380 = vmatmul.mubr.f32.gmra.mrb[0].mxu0 %v1307
        %v1381 = vpop.f32.mrb[0].mxu0
        %v1382 = vadd.f32 %v1289, %v1381
        %v1383 = vpop.f32.mrb[0].mxu0
        %1384 = vmatprep.mubr.f32.mxu0 0.0
        %1385 = vmatmul.mubr.f32.gmra.mrb[0].mxu0 %v1309
        %v1386 = vpop.f32.mrb[0].mxu0
        %v1387 = vadd.f32 %v1294, %v1386
        %v1388 = vpop.f32.mrb[0].mxu0
        %1389 = vmatprep.mubr.f32.mxu0 0.0
        %1390 = vmatmul.mubr.f32.gmra.mrb[0].mxu0 %v1311
        %v1391 = vpop.f32.mrb[0].mxu0
        %v1392 = vadd.f32 %v1299, %v1391
        %v1393 = vpop.f32.mrb[0].mxu0
        %1394 = vmatprep.mubr.f32.mxu0 0.0
        %1395 = vmatmul.mubr.f32.gmra.mrb[0].mxu0 %v1313
        %v1396 = vpop.f32.mrb[0].mxu0
        %v1397 = vadd.f32 %v1304, %v1396
        %v1398 = vpop.f32.mrb[0].mxu0
        %1399 = vdwg.mxu0
        %s1400 = scalar_lea.vmem [#allocation8], 64
        %v1401 = vld [vmem:[%s1400] sm:$0xff]
        %v1402 = vld [vmem:[%s1400 + $0x8] sm:$0xff]
        %v1403 = vld [vmem:[%s1400 + $0x10] sm:$0xff]
        %v1404 = vld [vmem:[%s1400 + $0x18] sm:$0xff]
        %v1405 = vrot.slane %v1190, 2
        %v1406 = vrot.slane %v1191, 2
        %v1407 = vsel %vm871, %v1405, %v1406
        %v1408 = vrot.slane %v1192, 2
        %v1409 = vsel %vm871, %v1406, %v1408
        %v1410 = vrot.slane %v1193, 2
        %v1411 = vsel %vm871, %v1408, %v1410
        %v1412 = vsel %vm1165, %v1407, 0
        %v1414 = vsel %vm1165, %v1409, 0
        %v1416 = vsel %vm1165, %v1411, 0
        %v1418 = vsel %vm1165, %v1410, 0
        %1420 = vmatprep.subr.mxu0 0.0
        %1421 = vmatpush1.msra.mxu0 %v1401
        %1422 = vmatprep.subr.mxu0 0.0
        %1423 = vmatpush1.msra.mxu0 %v1402
        %1424 = vmatprep.subr.mxu0 0.0
        %1425 = vmatpush1.msra.mxu0 %v1403
        %1426 = vmatprep.subr.mxu0 0.0
        %1427 = vmatpush1.msra.mxu0 %v1404
        %1428 = vmatprep.subr.mxu0 0.0
        %1429 = vmatpush1.msra.mxu0 0.0
        %1430 = vmatprep.subr.mxu0 0.0
        %1431 = vmatpush1.msra.mxu0 0.0
        %1432 = vmatprep.subr.mxu0 0.0
        %1433 = vmatpush1.msra.mxu0 0.0
        %1434 = vmatprep.subr.mxu0 0.0
        %1435 = vmatpush1.msra.mxu0 0.0
        %1436 = vmatprep.subr.mxu0 0.0
        %1437 = vmatpush1.msra.mxu0 0.0
        %1438 = vmatprep.subr.mxu0 0.0
        %1439 = vmatpush1.msra.mxu0 0.0
        %1440 = vmatprep.subr.mxu0 0.0
        %1441 = vmatpush1.msra.mxu0 0.0
        %1442 = vmatprep.subr.mxu0 0.0
        %1443 = vmatpush1.msra.mxu0 0.0
        %1444 = vmatprep.subr.mxu0 0.0
        %1445 = vmatpush1.msra.mxu0 0.0
        %1446 = vmatprep.subr.mxu0 0.0
        %1447 = vmatpush1.msra.mxu0 0.0
        %1448 = vmatprep.subr.mxu0 0.0
        %1449 = vmatpush1.msra.mxu0 0.0
        %1450 = vmatprep.subr.mxu0 0.0
        %1451 = vmatpush1.msra.mxu0 0.0
        %1452 = vmatprep.subr.mxu0 0.0
        %1453 = vmatpush1.msra.mxu0 0.0
        %1454 = vmatprep.subr.mxu0 0.0
        %1455 = vmatpush1.msra.mxu0 0.0
        %1456 = vmatprep.subr.mxu0 0.0
        %1457 = vmatpush1.msra.mxu0 0.0
        %1458 = vmatprep.subr.mxu0 0.0
        %1459 = vmatpush1.msra.mxu0 0.0
        %1460 = vmatprep.subr.mxu0 0.0
        %1461 = vmatpush1.msra.mxu0 0.0
        %1462 = vmatprep.subr.mxu0 0.0
        %1463 = vmatpush1.msra.mxu0 0.0
        %1464 = vmatprep.subr.mxu0 0.0
        %1465 = vmatpush1.msra.mxu0 0.0
        %1466 = vmatprep.subr.mxu0 0.0
        %1467 = vmatpush1.msra.mxu0 0.0
        %1468 = vmatprep.subr.mxu0 0.0
        %1469 = vmatpush1.msra.mxu0 0.0
        %1470 = vmatprep.subr.mxu0 0.0
        %1471 = vmatpush1.msra.mxu0 0.0
        %1472 = vmatprep.subr.mxu0 0.0
        %1473 = vmatpush1.msra.mxu0 0.0
        %1474 = vmatprep.subr.mxu0 0.0
        %1475 = vmatpush1.msra.mxu0 0.0
        %1476 = vmatprep.subr.mxu0 0.0
        %1477 = vmatpush1.msra.mxu0 0.0
        %1478 = vmatprep.subr.mxu0 0.0
        %1479 = vmatpush1.msra.mxu0 0.0
        %1480 = vmatprep.subr.mxu0 0.0
        %1481 = vmatpush1.msra.mxu0 0.0
        %1482 = vmatprep.subr.mxu0 0.0
        %1483 = vmatpush1.msra.mxu0 0.0
        %1484 = vmatprep.mubr.f32.mxu0 0.0
        %1485 = vmatmul.mubr.f32.gmra.mrb[0].mxu0 %v1412
        %v1486 = vpop.f32.mrb[0].mxu0
        %v1487 = vadd.f32 0.0, %v1486
        %v1488 = vpop.f32.mrb[0].mxu0
        %1489 = vmatprep.mubr.f32.mxu0 0.0
        %1490 = vmatmul.mubr.f32.gmra.mrb[0].mxu0 %v1414
        %v1491 = vpop.f32.mrb[0].mxu0
        %v1492 = vadd.f32 0.0, %v1491
        %v1493 = vpop.f32.mrb[0].mxu0
        %1494 = vmatprep.mubr.f32.mxu0 0.0
        %1495 = vmatmul.mubr.f32.gmra.mrb[0].mxu0 %v1416
        %v1496 = vpop.f32.mrb[0].mxu0
        %v1497 = vadd.f32 0.0, %v1496
        %v1498 = vpop.f32.mrb[0].mxu0
        %1499 = vmatprep.mubr.f32.mxu0 0.0
        %1500 = vmatmul.mubr.f32.gmra.mrb[0].mxu0 %v1418
        %v1501 = vpop.f32.mrb[0].mxu0
        %v1502 = vadd.f32 0.0, %v1501
        %v1503 = vpop.f32.mrb[0].mxu0
        %1504 = vdwg.mxu0
        %v1505 = vadd.f32 %v1382, %v1487
        %v1506 = vadd.f32 %v1387, %v1492
        %v1507 = vadd.f32 %v1392, %v1497
        %v1508 = vadd.f32 %v1397, %v1502
        %v1509 = vld [vmem:[#allocation10] sm:$0x1]
        %v1511 = vlaneseq
        %v1512 = vshrl.u32 %v1511, 7
        %v1513 = vsub.s32 0, %v1512
        %v1514 = vrot.slane %v1509, %v1513
        %v1516 = vmul.f32 %v1505, %v1514
        %v1517 = vmul.f32 %v1506, %v1514
        %v1518 = vmul.f32 %v1507, %v1514
        %v1519 = vmul.f32 %v1508, %v1514
        %v1520 = vld [vmem:[#allocation11] sm:$0x1]
        %v1522 = vlaneseq
        %v1523 = vshrl.u32 %v1522, 7
        %v1524 = vsub.s32 0, %v1523
        %v1525 = vrot.slane %v1520, %v1524
        %v1527 = vadd.f32 %v1516, %v1525
        %v1528 = vadd.f32 %v1517, %v1525
        %v1529 = vadd.f32 %v1518, %v1525
        %v1530 = vadd.f32 %v1519, %v1525
        %v1531 = vmax.f32 %v1527, 0.0
        %v1532 = vmax.f32 %v1528, 0.0
        %v1533 = vmax.f32 %v1529, 0.0
        %v1534 = vmax.f32 %v1530, 0.0
        %v1535 = vld [vmem:[#allocation13] sm:$0xff]
        %v1536 = vld [vmem:[#allocation13 + $0x8] sm:$0xff]
        %v1537 = vld [vmem:[#allocation13 + $0x10] sm:$0xff]
        %v1538 = vld [vmem:[#allocation13 + $0x18] sm:$0xff]
        %v1539 = vld [vmem:[#allocation13 + $0x20] sm:$0xff]
        %v1540 = vld [vmem:[#allocation13 + $0x28] sm:$0xff]
        %v1541 = vld [vmem:[#allocation13 + $0x30] sm:$0xff]
        %v1542 = vld [vmem:[#allocation13 + $0x38] sm:$0xff]
        %s1543 = scalar_lea.vmem [#allocation13], 64
        %v1544 = vld [vmem:[%s1543] sm:$0xff]
        %v1545 = vld [vmem:[%s1543 + $0x8] sm:$0xff]
        %v1546 = vld [vmem:[%s1543 + $0x10] sm:$0xff]
        %v1547 = vld [vmem:[%s1543 + $0x18] sm:$0xff]
        %v1548 = vld [vmem:[%s1543 + $0x20] sm:$0xff]
        %v1549 = vld [vmem:[%s1543 + $0x28] sm:$0xff]
        %v1550 = vld [vmem:[%s1543 + $0x30] sm:$0xff]
        %v1551 = vld [vmem:[%s1543 + $0x38] sm:$0xff]
        %v1556 = vrot.slane %v1531, 1
        %v1557 = vrot.slane %v1532, 1
        %v1558 = vsel %vm815, %v1556, %v1557
        %v1559 = vrot.slane %v1533, 1
        %v1560 = vsel %vm815, %v1557, %v1559
        %v1561 = vrot.slane %v1534, 1
        %v1562 = vsel %vm815, %v1559, %v1561
        %vm1563 = vcmask 523264
        %v1564 = vsel %vm1563, %v1558, 0
        %v1566 = vsel %vm1563, %v1560, 0
        %v1568 = vsel %vm1563, %v1562, 0
        %v1570 = vsel %vm1563, %v1561, 0
        %1572 = vmatprep.subr.mxu0 0.0
        %1573 = vmatpush1.msra.mxu0 %v1544
        %1574 = vmatprep.subr.mxu0 0.0
        %1575 = vmatpush1.msra.mxu0 %v1545
        %1576 = vmatprep.subr.mxu0 0.0
        %1577 = vmatpush1.msra.mxu0 %v1546
        %1578 = vmatprep.subr.mxu0 0.0
        %1579 = vmatpush1.msra.mxu0 %v1547
        %1580 = vmatprep.subr.mxu0 0.0
        %1581 = vmatpush1.msra.mxu0 %v1548
        %1582 = vmatprep.subr.mxu0 0.0
        %1583 = vmatpush1.msra.mxu0 %v1549
        %1584 = vmatprep.subr.mxu0 0.0
        %1585 = vmatpush1.msra.mxu0 %v1550
        %1586 = vmatprep.subr.mxu0 0.0
        %1587 = vmatpush1.msra.mxu0 %v1551
        %1588 = vmatprep.subr.mxu0 0.0
        %1589 = vmatpush1.msra.mxu0 0.0
        %1590 = vmatprep.subr.mxu0 0.0
        %1591 = vmatpush1.msra.mxu0 0.0
        %1592 = vmatprep.subr.mxu0 0.0
        %1593 = vmatpush1.msra.mxu0 0.0
        %1594 = vmatprep.subr.mxu0 0.0
        %1595 = vmatpush1.msra.mxu0 0.0
        %1596 = vmatprep.subr.mxu0 0.0
        %1597 = vmatpush1.msra.mxu0 0.0
        %1598 = vmatprep.subr.mxu0 0.0
        %1599 = vmatpush1.msra.mxu0 0.0
        %1600 = vmatprep.subr.mxu0 0.0
        %1601 = vmatpush1.msra.mxu0 0.0
        %1602 = vmatprep.subr.mxu0 0.0
        %1603 = vmatpush1.msra.mxu0 0.0
        %1604 = vmatprep.subr.mxu0 0.0
        %1605 = vmatpush1.msra.mxu0 0.0
        %1606 = vmatprep.subr.mxu0 0.0
        %1607 = vmatpush1.msra.mxu0 0.0
        %1608 = vmatprep.subr.mxu0 0.0
        %1609 = vmatpush1.msra.mxu0 0.0
        %1610 = vmatprep.subr.mxu0 0.0
        %1611 = vmatpush1.msra.mxu0 0.0
        %1612 = vmatprep.subr.mxu0 0.0
        %1613 = vmatpush1.msra.mxu0 0.0
        %1614 = vmatprep.subr.mxu0 0.0
        %1615 = vmatpush1.msra.mxu0 0.0
        %1616 = vmatprep.subr.mxu0 0.0
        %1617 = vmatpush1.msra.mxu0 0.0
        %1618 = vmatprep.subr.mxu0 0.0
        %1619 = vmatpush1.msra.mxu0 0.0
        %1620 = vmatprep.subr.mxu0 0.0
        %1621 = vmatpush1.msra.mxu0 0.0
        %1622 = vmatprep.subr.mxu0 0.0
        %1623 = vmatpush1.msra.mxu0 0.0
        %1624 = vmatprep.subr.mxu0 0.0
        %1625 = vmatpush1.msra.mxu0 0.0
        %1626 = vmatprep.subr.mxu0 0.0
        %1627 = vmatpush1.msra.mxu0 0.0
        %1628 = vmatprep.subr.mxu0 0.0
        %1629 = vmatpush1.msra.mxu0 0.0
        %1630 = vmatprep.subr.mxu0 0.0
        %1631 = vmatpush1.msra.mxu0 0.0
        %1632 = vmatprep.subr.mxu0 0.0
        %1633 = vmatpush1.msra.mxu0 0.0
        %1634 = vmatprep.subr.mxu0 0.0
        %1635 = vmatpush1.msra.mxu0 0.0
        %1636 = vmatprep.mubr.f32.mxu0 0.0
        %1637 = vmatmul.mubr.f32.gmra.mrb[0].mxu0 %v1564
        %v1638 = vpop.f32.mrb[0].mxu0
        %v1639 = vadd.f32 0.0, %v1638
        %v1640 = vpop.f32.mrb[0].mxu0
        %1641 = vmatprep.mubr.f32.mxu0 0.0
        %1642 = vmatmul.mubr.f32.gmra.mrb[0].mxu0 %v1566
        %v1643 = vpop.f32.mrb[0].mxu0
        %v1644 = vadd.f32 0.0, %v1643
        %v1645 = vpop.f32.mrb[0].mxu0
        %1646 = vmatprep.mubr.f32.mxu0 0.0
        %1647 = vmatmul.mubr.f32.gmra.mrb[0].mxu0 %v1568
        %v1648 = vpop.f32.mrb[0].mxu0
        %v1649 = vadd.f32 0.0, %v1648
        %v1650 = vpop.f32.mrb[0].mxu0
        %1651 = vmatprep.mubr.f32.mxu0 0.0
        %1652 = vmatmul.mubr.f32.gmra.mrb[0].mxu0 %v1570
        %v1653 = vpop.f32.mrb[0].mxu0
        %v1654 = vadd.f32 0.0, %v1653
        %v1655 = vpop.f32.mrb[0].mxu0
        %1656 = vdwg.mxu0
        %v1657 = vsel %vm1563, %v1531, 0
        %v1659 = vsel %vm1563, %v1532, 0
        %v1661 = vsel %vm1563, %v1533, 0
        %v1663 = vsel %vm1563, %v1534, 0
        %1665 = vmatprep.subr.mxu0 0.0
        %1666 = vmatpush1.msra.mxu0 %v1535
        %1667 = vmatprep.subr.mxu0 0.0
        %1668 = vmatpush1.msra.mxu0 %v1536
        %1669 = vmatprep.subr.mxu0 0.0
        %1670 = vmatpush1.msra.mxu0 %v1537
        %1671 = vmatprep.subr.mxu0 0.0
        %1672 = vmatpush1.msra.mxu0 %v1538
        %1673 = vmatprep.subr.mxu0 0.0
        %1674 = vmatpush1.msra.mxu0 %v1539
        %1675 = vmatprep.subr.mxu0 0.0
        %1676 = vmatpush1.msra.mxu0 %v1540
        %1677 = vmatprep.subr.mxu0 0.0
        %1678 = vmatpush1.msra.mxu0 %v1541
        %1679 = vmatprep.subr.mxu0 0.0
        %1680 = vmatpush1.msra.mxu0 %v1542
        %1681 = vmatprep.subr.mxu0 0.0
        %1682 = vmatpush1.msra.mxu0 0.0
        %1683 = vmatprep.subr.mxu0 0.0
        %1684 = vmatpush1.msra.mxu0 0.0
        %1685 = vmatprep.subr.mxu0 0.0
        %1686 = vmatpush1.msra.mxu0 0.0
        %1687 = vmatprep.subr.mxu0 0.0
        %1688 = vmatpush1.msra.mxu0 0.0
        %1689 = vmatprep.subr.mxu0 0.0
        %1690 = vmatpush1.msra.mxu0 0.0
        %1691 = vmatprep.subr.mxu0 0.0
        %1692 = vmatpush1.msra.mxu0 0.0
        %1693 = vmatprep.subr.mxu0 0.0
        %1694 = vmatpush1.msra.mxu0 0.0
        %1695 = vmatprep.subr.mxu0 0.0
        %1696 = vmatpush1.msra.mxu0 0.0
        %1697 = vmatprep.subr.mxu0 0.0
        %1698 = vmatpush1.msra.mxu0 0.0
        %1699 = vmatprep.subr.mxu0 0.0
        %1700 = vmatpush1.msra.mxu0 0.0
        %1701 = vmatprep.subr.mxu0 0.0
        %1702 = vmatpush1.msra.mxu0 0.0
        %1703 = vmatprep.subr.mxu0 0.0
        %1704 = vmatpush1.msra.mxu0 0.0
        %1705 = vmatprep.subr.mxu0 0.0
        %1706 = vmatpush1.msra.mxu0 0.0
        %1707 = vmatprep.subr.mxu0 0.0
        %1708 = vmatpush1.msra.mxu0 0.0
        %1709 = vmatprep.subr.mxu0 0.0
        %1710 = vmatpush1.msra.mxu0 0.0
        %1711 = vmatprep.subr.mxu0 0.0
        %1712 = vmatpush1.msra.mxu0 0.0
        %1713 = vmatprep.subr.mxu0 0.0
        %1714 = vmatpush1.msra.mxu0 0.0
        %1715 = vmatprep.subr.mxu0 0.0
        %1716 = vmatpush1.msra.mxu0 0.0
        %1717 = vmatprep.subr.mxu0 0.0
        %1718 = vmatpush1.msra.mxu0 0.0
        %1719 = vmatprep.subr.mxu0 0.0
        %1720 = vmatpush1.msra.mxu0 0.0
        %1721 = vmatprep.subr.mxu0 0.0
        %1722 = vmatpush1.msra.mxu0 0.0
        %1723 = vmatprep.subr.mxu0 0.0
        %1724 = vmatpush1.msra.mxu0 0.0
        %1725 = vmatprep.subr.mxu0 0.0
        %1726 = vmatpush1.msra.mxu0 0.0
        %1727 = vmatprep.subr.mxu0 0.0
        %1728 = vmatpush1.msra.mxu0 0.0
        %1729 = vmatprep.mubr.f32.mxu0 0.0
        %1730 = vmatmul.mubr.f32.gmra.mrb[0].mxu0 %v1657
        %v1731 = vpop.f32.mrb[0].mxu0
        %v1732 = vadd.f32 %v1639, %v1731
        %v1733 = vpop.f32.mrb[0].mxu0
        %1734 = vmatprep.mubr.f32.mxu0 0.0
        %1735 = vmatmul.mubr.f32.gmra.mrb[0].mxu0 %v1659
        %v1736 = vpop.f32.mrb[0].mxu0
        %v1737 = vadd.f32 %v1644, %v1736
        %v1738 = vpop.f32.mrb[0].mxu0
        %1739 = vmatprep.mubr.f32.mxu0 0.0
        %1740 = vmatmul.mubr.f32.gmra.mrb[0].mxu0 %v1661
        %v1741 = vpop.f32.mrb[0].mxu0
        %v1742 = vadd.f32 %v1649, %v1741
        %v1743 = vpop.f32.mrb[0].mxu0
        %1744 = vmatprep.mubr.f32.mxu0 0.0
        %1745 = vmatmul.mubr.f32.gmra.mrb[0].mxu0 %v1663
        %v1746 = vpop.f32.mrb[0].mxu0
        %v1747 = vadd.f32 %v1654, %v1746
        %v1748 = vpop.f32.mrb[0].mxu0
        %1749 = vdwg.mxu0
        %s1750 = scalar_lea.vmem [#allocation13], 128
        %v1751 = vld [vmem:[%s1750] sm:$0xff]
        %v1752 = vld [vmem:[%s1750 + $0x8] sm:$0xff]
        %v1753 = vld [vmem:[%s1750 + $0x10] sm:$0xff]
        %v1754 = vld [vmem:[%s1750 + $0x18] sm:$0xff]
        %v1755 = vld [vmem:[%s1750 + $0x20] sm:$0xff]
        %v1756 = vld [vmem:[%s1750 + $0x28] sm:$0xff]
        %v1757 = vld [vmem:[%s1750 + $0x30] sm:$0xff]
        %v1758 = vld [vmem:[%s1750 + $0x38] sm:$0xff]
        %v1759 = vrot.slane %v1531, 2
        %v1760 = vrot.slane %v1532, 2
        %v1761 = vsel %vm871, %v1759, %v1760
        %v1762 = vrot.slane %v1533, 2
        %v1763 = vsel %vm871, %v1760, %v1762
        %v1764 = vrot.slane %v1534, 2
        %v1765 = vsel %vm871, %v1762, %v1764
        %v1766 = vsel %vm1563, %v1761, 0
        %v1768 = vsel %vm1563, %v1763, 0
        %v1770 = vsel %vm1563, %v1765, 0
        %v1772 = vsel %vm1563, %v1764, 0
        %1774 = vmatprep.subr.mxu0 0.0
        %1775 = vmatpush1.msra.mxu0 %v1751
        %1776 = vmatprep.subr.mxu0 0.0
        %1777 = vmatpush1.msra.mxu0 %v1752
        %1778 = vmatprep.subr.mxu0 0.0
        %1779 = vmatpush1.msra.mxu0 %v1753
        %1780 = vmatprep.subr.mxu0 0.0
        %1781 = vmatpush1.msra.mxu0 %v1754
        %1782 = vmatprep.subr.mxu0 0.0
        %1783 = vmatpush1.msra.mxu0 %v1755
        %1784 = vmatprep.subr.mxu0 0.0
        %1785 = vmatpush1.msra.mxu0 %v1756
        %1786 = vmatprep.subr.mxu0 0.0
        %1787 = vmatpush1.msra.mxu0 %v1757
        %1788 = vmatprep.subr.mxu0 0.0
        %1789 = vmatpush1.msra.mxu0 %v1758
        %1790 = vmatprep.subr.mxu0 0.0
        %1791 = vmatpush1.msra.mxu0 0.0
        %1792 = vmatprep.subr.mxu0 0.0
        %1793 = vmatpush1.msra.mxu0 0.0
        %1794 = vmatprep.subr.mxu0 0.0
        %1795 = vmatpush1.msra.mxu0 0.0
        %1796 = vmatprep.subr.mxu0 0.0
        %1797 = vmatpush1.msra.mxu0 0.0
        %1798 = vmatprep.subr.mxu0 0.0
        %1799 = vmatpush1.msra.mxu0 0.0
        %1800 = vmatprep.subr.mxu0 0.0
        %1801 = vmatpush1.msra.mxu0 0.0
        %1802 = vmatprep.subr.mxu0 0.0
        %1803 = vmatpush1.msra.mxu0 0.0
        %1804 = vmatprep.subr.mxu0 0.0
        %1805 = vmatpush1.msra.mxu0 0.0
        %1806 = vmatprep.subr.mxu0 0.0
        %1807 = vmatpush1.msra.mxu0 0.0
        %1808 = vmatprep.subr.mxu0 0.0
        %1809 = vmatpush1.msra.mxu0 0.0
        %1810 = vmatprep.subr.mxu0 0.0
        %1811 = vmatpush1.msra.mxu0 0.0
        %1812 = vmatprep.subr.mxu0 0.0
        %1813 = vmatpush1.msra.mxu0 0.0
        %1814 = vmatprep.subr.mxu0 0.0
        %1815 = vmatpush1.msra.mxu0 0.0
        %1816 = vmatprep.subr.mxu0 0.0
        %1817 = vmatpush1.msra.mxu0 0.0
        %1818 = vmatprep.subr.mxu0 0.0
        %1819 = vmatpush1.msra.mxu0 0.0
        %1820 = vmatprep.subr.mxu0 0.0
        %1821 = vmatpush1.msra.mxu0 0.0
        %1822 = vmatprep.subr.mxu0 0.0
        %1823 = vmatpush1.msra.mxu0 0.0
        %1824 = vmatprep.subr.mxu0 0.0
        %1825 = vmatpush1.msra.mxu0 0.0
        %1826 = vmatprep.subr.mxu0 0.0
        %1827 = vmatpush1.msra.mxu0 0.0
        %1828 = vmatprep.subr.mxu0 0.0
        %1829 = vmatpush1.msra.mxu0 0.0
        %1830 = vmatprep.subr.mxu0 0.0
        %1831 = vmatpush1.msra.mxu0 0.0
        %1832 = vmatprep.subr.mxu0 0.0
        %1833 = vmatpush1.msra.mxu0 0.0
        %1834 = vmatprep.subr.mxu0 0.0
        %1835 = vmatpush1.msra.mxu0 0.0
        %1836 = vmatprep.subr.mxu0 0.0
        %1837 = vmatpush1.msra.mxu0 0.0
        %1838 = vmatprep.mubr.f32.mxu0 0.0
        %1839 = vmatmul.mubr.f32.gmra.mrb[0].mxu0 %v1766
        %v1840 = vpop.f32.mrb[0].mxu0
        %v1841 = vadd.f32 0.0, %v1840
        %v1842 = vpop.f32.mrb[0].mxu0
        %1843 = vmatprep.mubr.f32.mxu0 0.0
        %1844 = vmatmul.mubr.f32.gmra.mrb[0].mxu0 %v1768
        %v1845 = vpop.f32.mrb[0].mxu0
        %v1846 = vadd.f32 0.0, %v1845
        %v1847 = vpop.f32.mrb[0].mxu0
        %1848 = vmatprep.mubr.f32.mxu0 0.0
        %1849 = vmatmul.mubr.f32.gmra.mrb[0].mxu0 %v1770
        %v1850 = vpop.f32.mrb[0].mxu0
        %v1851 = vadd.f32 0.0, %v1850
        %v1852 = vpop.f32.mrb[0].mxu0
        %1853 = vmatprep.mubr.f32.mxu0 0.0
        %1854 = vmatmul.mubr.f32.gmra.mrb[0].mxu0 %v1772
        %v1855 = vpop.f32.mrb[0].mxu0
        %v1856 = vadd.f32 0.0, %v1855
        %v1857 = vpop.f32.mrb[0].mxu0
        %1858 = vdwg.mxu0
        %v1859 = vadd.f32 %v1732, %v1841
        %v1860 = vadd.f32 %v1737, %v1846
        %v1861 = vadd.f32 %v1742, %v1851
        %v1862 = vadd.f32 %v1747, %v1856
        %v1863 = vld [vmem:[#allocation14] sm:$0x1]
        %v1865 = vlaneseq
        %v1866 = vshrl.u32 %v1865, 7
        %v1867 = vsub.s32 0, %v1866
        %v1868 = vrot.slane %v1863, %v1867
        %v1870 = vmul.f32 %v1859, %v1868
        %v1871 = vmul.f32 %v1860, %v1868
        %v1872 = vmul.f32 %v1861, %v1868
        %v1873 = vmul.f32 %v1862, %v1868
        %v1874 = vld [vmem:[#allocation16] sm:$0x1]
        %v1876 = vlaneseq
        %v1877 = vshrl.u32 %v1876, 7
        %v1878 = vsub.s32 0, %v1877
        %v1879 = vrot.slane %v1874, %v1878
        %v1881 = vadd.f32 %v1870, %v1879
        %v1882 = vadd.f32 %v1871, %v1879
        %v1883 = vadd.f32 %v1872, %v1879
        %v1884 = vadd.f32 %v1873, %v1879
        %v1885 = vmax.f32 %v1881, 0.0
        %v1886 = vmax.f32 %v1882, 0.0
        %v1887 = vmax.f32 %v1883, 0.0
        %v1888 = vmax.f32 %v1884, 0.0
        %v1889 = vld [vmem:[#allocation17] sm:$0xff]
        %v1890 = vld [vmem:[#allocation17 + $0x8] sm:$0xff]
        %v1891 = vld [vmem:[#allocation17 + $0x10] sm:$0xff]
        %v1892 = vld [vmem:[#allocation17 + $0x18] sm:$0xff]
        %v1893 = vld [vmem:[#allocation17 + $0x20] sm:$0xff]
        %v1894 = vld [vmem:[#allocation17 + $0x28] sm:$0xff]
        %v1895 = vld [vmem:[#allocation17 + $0x30] sm:$0xff]
        %v1896 = vld [vmem:[#allocation17 + $0x38] sm:$0xff]
        %v1897 = vld [vmem:[#allocation17 + $0x40] sm:$0xff]
        %v1898 = vld [vmem:[#allocation17 + $0x48] sm:$0xff]
        %v1899 = vld [vmem:[#allocation17 + $0x50] sm:$0xff]
        %v1900 = vld [vmem:[#allocation17 + $0x58] sm:$0xff]
        %v1901 = vld [vmem:[#allocation17 + $0x60] sm:$0xff]
        %v1902 = vld [vmem:[#allocation17 + $0x68] sm:$0xff]
        %v1903 = vld [vmem:[#allocation17 + $0x70] sm:$0xff]
        %v1904 = vld [vmem:[#allocation17 + $0x78] sm:$0xff]
        %v1905 = vld [vmem:[#allocation17 + $0x80] sm:$0xff]
        %v1906 = vld [vmem:[#allocation17 + $0x88] sm:$0xff]
        %v1907 = vld [vmem:[#allocation17 + $0x90] sm:$0xff]
        %v1908 = vld [vmem:[#allocation17 + $0x98] sm:$0xff]
        %v1909 = vld [vmem:[#allocation17 + $0xa0] sm:$0xff]
        %v1910 = vld [vmem:[#allocation17 + $0xa8] sm:$0xff]
        %v1911 = vld [vmem:[#allocation17 + $0xb0] sm:$0xff]
        %v1912 = vld [vmem:[#allocation17 + $0xb8] sm:$0xff]
        %v1913 = vld [vmem:[#allocation17 + $0xc0] sm:$0xff]
        %v1914 = vld [vmem:[#allocation17 + $0xc8] sm:$0xff]
        %v1915 = vld [vmem:[#allocation17 + $0xd0] sm:$0xff]
        %v1916 = vld [vmem:[#allocation17 + $0xd8] sm:$0xff]
        %v1917 = vld [vmem:[#allocation17 + $0xe0] sm:$0xff]
        %v1918 = vld [vmem:[#allocation17 + $0xe8] sm:$0xff]
        %v1919 = vld [vmem:[#allocation17 + $0xf0] sm:$0xff]
        %v1920 = vld [vmem:[#allocation17 + $0xf8] sm:$0xff]
        %s1921 = scalar_lea.vmem [#allocation17], 256
        %v1922 = vld [vmem:[%s1921] sm:$0xff]
        %v1923 = vld [vmem:[%s1921 + $0x8] sm:$0xff]
        %v1924 = vld [vmem:[%s1921 + $0x10] sm:$0xff]
        %v1925 = vld [vmem:[%s1921 + $0x18] sm:$0xff]
        %v1926 = vld [vmem:[%s1921 + $0x20] sm:$0xff]
        %v1927 = vld [vmem:[%s1921 + $0x28] sm:$0xff]
        %v1928 = vld [vmem:[%s1921 + $0x30] sm:$0xff]
        %v1929 = vld [vmem:[%s1921 + $0x38] sm:$0xff]
        %v1930 = vld [vmem:[%s1921 + $0x40] sm:$0xff]
        %v1931 = vld [vmem:[%s1921 + $0x48] sm:$0xff]
        %v1932 = vld [vmem:[%s1921 + $0x50] sm:$0xff]
        %v1933 = vld [vmem:[%s1921 + $0x58] sm:$0xff]
        %v1934 = vld [vmem:[%s1921 + $0x60] sm:$0xff]
        %v1935 = vld [vmem:[%s1921 + $0x68] sm:$0xff]
        %v1936 = vld [vmem:[%s1921 + $0x70] sm:$0xff]
        %v1937 = vld [vmem:[%s1921 + $0x78] sm:$0xff]
        %v1938 = vld [vmem:[%s1921 + $0x80] sm:$0xff]
        %v1939 = vld [vmem:[%s1921 + $0x88] sm:$0xff]
        %v1940 = vld [vmem:[%s1921 + $0x90] sm:$0xff]
        %v1941 = vld [vmem:[%s1921 + $0x98] sm:$0xff]
        %v1942 = vld [vmem:[%s1921 + $0xa0] sm:$0xff]
        %v1943 = vld [vmem:[%s1921 + $0xa8] sm:$0xff]
        %v1944 = vld [vmem:[%s1921 + $0xb0] sm:$0xff]
        %v1945 = vld [vmem:[%s1921 + $0xb8] sm:$0xff]
        %v1946 = vld [vmem:[%s1921 + $0xc0] sm:$0xff]
        %v1947 = vld [vmem:[%s1921 + $0xc8] sm:$0xff]
        %v1948 = vld [vmem:[%s1921 + $0xd0] sm:$0xff]
        %v1949 = vld [vmem:[%s1921 + $0xd8] sm:$0xff]
        %v1950 = vld [vmem:[%s1921 + $0xe0] sm:$0xff]
        %v1951 = vld [vmem:[%s1921 + $0xe8] sm:$0xff]
        %v1952 = vld [vmem:[%s1921 + $0xf0] sm:$0xff]
        %v1953 = vld [vmem:[%s1921 + $0xf8] sm:$0xff]
        %v1957 = vrot.slane %v1885, 1
        %v1958 = vrot.slane %v1886, 1
        %v1959 = vsel %vm815, %v1957, %v1958
        %v1960 = vrot.slane %v1887, 1
        %v1961 = vsel %vm815, %v1958, %v1960
        %1965 = vmatprep.subr.mxu0 %v1923
        %1966 = vmatpush1.msra.mxu0 %v1922
        %1967 = vmatprep.subr.mxu0 %v1925
        %1968 = vmatpush1.msra.mxu0 %v1924
        %1969 = vmatprep.subr.mxu0 %v1927
        %1970 = vmatpush1.msra.mxu0 %v1926
        %1971 = vmatprep.subr.mxu0 %v1929
        %1972 = vmatpush1.msra.mxu0 %v1928
        %1973 = vmatprep.subr.mxu0 %v1931
        %1974 = vmatpush1.msra.mxu0 %v1930
        %1975 = vmatprep.subr.mxu0 %v1933
        %1976 = vmatpush1.msra.mxu0 %v1932
        %1977 = vmatprep.subr.mxu0 %v1935
        %1978 = vmatpush1.msra.mxu0 %v1934
        %1979 = vmatprep.subr.mxu0 %v1937
        %1980 = vmatpush1.msra.mxu0 %v1936
        %1981 = vmatprep.subr.mxu0 %v1939
        %1982 = vmatpush1.msra.mxu0 %v1938
        %1983 = vmatprep.subr.mxu0 %v1941
        %1984 = vmatpush1.msra.mxu0 %v1940
        %1985 = vmatprep.subr.mxu0 %v1943
        %1986 = vmatpush1.msra.mxu0 %v1942
        %1987 = vmatprep.subr.mxu0 %v1945
        %1988 = vmatpush1.msra.mxu0 %v1944
        %1989 = vmatprep.subr.mxu0 %v1947
        %1990 = vmatpush1.msra.mxu0 %v1946
        %1991 = vmatprep.subr.mxu0 %v1949
        %1992 = vmatpush1.msra.mxu0 %v1948
        %1993 = vmatprep.subr.mxu0 %v1951
        %1994 = vmatpush1.msra.mxu0 %v1950
        %1995 = vmatprep.subr.mxu0 %v1953
        %1996 = vmatpush1.msra.mxu0 %v1952
        %1997 = vmatprep.subr.mxu0 0.0
        %1998 = vmatpush1.msra.mxu0 0.0
        %1999 = vmatprep.subr.mxu0 0.0
        %2000 = vmatpush1.msra.mxu0 0.0
        %2001 = vmatprep.subr.mxu0 0.0
        %2002 = vmatpush1.msra.mxu0 0.0
        %2003 = vmatprep.subr.mxu0 0.0
        %2004 = vmatpush1.msra.mxu0 0.0
        %2005 = vmatprep.subr.mxu0 0.0
        %2006 = vmatpush1.msra.mxu0 0.0
        %2007 = vmatprep.subr.mxu0 0.0
        %2008 = vmatpush1.msra.mxu0 0.0
        %2009 = vmatprep.subr.mxu0 0.0
        %2010 = vmatpush1.msra.mxu0 0.0
        %2011 = vmatprep.subr.mxu0 0.0
        %2012 = vmatpush1.msra.mxu0 0.0
        %2013 = vmatprep.subr.mxu0 0.0
        %2014 = vmatpush1.msra.mxu0 0.0
        %2015 = vmatprep.subr.mxu0 0.0
        %2016 = vmatpush1.msra.mxu0 0.0
        %2017 = vmatprep.subr.mxu0 0.0
        %2018 = vmatpush1.msra.mxu0 0.0
        %2019 = vmatprep.subr.mxu0 0.0
        %2020 = vmatpush1.msra.mxu0 0.0
        %2021 = vmatprep.subr.mxu0 0.0
        %2022 = vmatpush1.msra.mxu0 0.0
        %2023 = vmatprep.subr.mxu0 0.0
        %2024 = vmatpush1.msra.mxu0 0.0
        %2025 = vmatprep.subr.mxu0 0.0
        %2026 = vmatpush1.msra.mxu0 0.0
        %2027 = vmatprep.subr.mxu0 0.0
        %2028 = vmatpush1.msra.mxu0 0.0
        %2029 = vmatprep.mubr.f32.mxu0 0.0
        %2030 = vmatmul.mubr.f32.gmra.mrb[0].mxu0 %v1959
        %v2031 = vpop.f32.mrb[0].mxu0
        %v2032 = vadd.f32 0.0, %v2031
        %v2033 = vpop.f32.mrb[0].mxu0
        %v2034 = vadd.f32 0.0, %v2033
        %2035 = vmatprep.mubr.f32.mxu0 0.0
        %2036 = vmatmul.mubr.f32.gmra.mrb[0].mxu0 %v1961
        %v2037 = vpop.f32.mrb[0].mxu0
        %v2038 = vadd.f32 0.0, %v2037
        %v2039 = vpop.f32.mrb[0].mxu0
        %v2040 = vadd.f32 0.0, %v2039
        %2041 = vmatprep.mubr.f32.mxu0 0.0
        %2042 = vmatmul.mubr.f32.gmra.mrb[0].mxu0 %v1960
        %v2043 = vpop.f32.mrb[0].mxu0
        %v2044 = vadd.f32 0.0, %v2043
        %v2045 = vpop.f32.mrb[0].mxu0
        %v2046 = vadd.f32 0.0, %v2045
        %2047 = vdwg.mxu0
        %2048 = vmatprep.subr.mxu0 %v1890
        %2049 = vmatpush1.msra.mxu0 %v1889
        %2050 = vmatprep.subr.mxu0 %v1892
        %2051 = vmatpush1.msra.mxu0 %v1891
        %2052 = vmatprep.subr.mxu0 %v1894
        %2053 = vmatpush1.msra.mxu0 %v1893
        %2054 = vmatprep.subr.mxu0 %v1896
        %2055 = vmatpush1.msra.mxu0 %v1895
        %2056 = vmatprep.subr.mxu0 %v1898
        %2057 = vmatpush1.msra.mxu0 %v1897
        %2058 = vmatprep.subr.mxu0 %v1900
        %2059 = vmatpush1.msra.mxu0 %v1899
        %2060 = vmatprep.subr.mxu0 %v1902
        %2061 = vmatpush1.msra.mxu0 %v1901
        %2062 = vmatprep.subr.mxu0 %v1904
        %2063 = vmatpush1.msra.mxu0 %v1903
        %2064 = vmatprep.subr.mxu0 %v1906
        %2065 = vmatpush1.msra.mxu0 %v1905
        %2066 = vmatprep.subr.mxu0 %v1908
        %2067 = vmatpush1.msra.mxu0 %v1907
        %2068 = vmatprep.subr.mxu0 %v1910
        %2069 = vmatpush1.msra.mxu0 %v1909
        %2070 = vmatprep.subr.mxu0 %v1912
        %2071 = vmatpush1.msra.mxu0 %v1911
        %2072 = vmatprep.subr.mxu0 %v1914
        %2073 = vmatpush1.msra.mxu0 %v1913
        %2074 = vmatprep.subr.mxu0 %v1916
        %2075 = vmatpush1.msra.mxu0 %v1915
        %2076 = vmatprep.subr.mxu0 %v1918
        %2077 = vmatpush1.msra.mxu0 %v1917
        %2078 = vmatprep.subr.mxu0 %v1920
        %2079 = vmatpush1.msra.mxu0 %v1919
        %2080 = vmatprep.subr.mxu0 0.0
        %2081 = vmatpush1.msra.mxu0 0.0
        %2082 = vmatprep.subr.mxu0 0.0
        %2083 = vmatpush1.msra.mxu0 0.0
        %2084 = vmatprep.subr.mxu0 0.0
        %2085 = vmatpush1.msra.mxu0 0.0
        %2086 = vmatprep.subr.mxu0 0.0
        %2087 = vmatpush1.msra.mxu0 0.0
        %2088 = vmatprep.subr.mxu0 0.0
        %2089 = vmatpush1.msra.mxu0 0.0
        %2090 = vmatprep.subr.mxu0 0.0
        %2091 = vmatpush1.msra.mxu0 0.0
        %2092 = vmatprep.subr.mxu0 0.0
        %2093 = vmatpush1.msra.mxu0 0.0
        %2094 = vmatprep.subr.mxu0 0.0
        %2095 = vmatpush1.msra.mxu0 0.0
        %2096 = vmatprep.subr.mxu0 0.0
        %2097 = vmatpush1.msra.mxu0 0.0
        %2098 = vmatprep.subr.mxu0 0.0
        %2099 = vmatpush1.msra.mxu0 0.0
        %2100 = vmatprep.subr.mxu0 0.0
        %2101 = vmatpush1.msra.mxu0 0.0
        %2102 = vmatprep.subr.mxu0 0.0
        %2103 = vmatpush1.msra.mxu0 0.0
        %2104 = vmatprep.subr.mxu0 0.0
        %2105 = vmatpush1.msra.mxu0 0.0
        %2106 = vmatprep.subr.mxu0 0.0
        %2107 = vmatpush1.msra.mxu0 0.0
        %2108 = vmatprep.subr.mxu0 0.0
        %2109 = vmatpush1.msra.mxu0 0.0
        %2110 = vmatprep.subr.mxu0 0.0
        %2111 = vmatpush1.msra.mxu0 0.0
        %2112 = vmatprep.mubr.f32.mxu0 0.0
        %2113 = vmatmul.mubr.f32.gmra.mrb[0].mxu0 %v1885
        %v2114 = vpop.f32.mrb[0].mxu0
        %v2115 = vadd.f32 %v2032, %v2114
        %v2116 = vpop.f32.mrb[0].mxu0
        %v2117 = vadd.f32 %v2034, %v2116
        %2118 = vmatprep.mubr.f32.mxu0 0.0
        %2119 = vmatmul.mubr.f32.gmra.mrb[0].mxu0 %v1886
        %v2120 = vpop.f32.mrb[0].mxu0
        %v2121 = vadd.f32 %v2038, %v2120
        %v2122 = vpop.f32.mrb[0].mxu0
        %v2123 = vadd.f32 %v2040, %v2122
        %2124 = vmatprep.mubr.f32.mxu0 0.0
        %2125 = vmatmul.mubr.f32.gmra.mrb[0].mxu0 %v1887
        %v2126 = vpop.f32.mrb[0].mxu0
        %v2127 = vadd.f32 %v2044, %v2126
        %v2128 = vpop.f32.mrb[0].mxu0
        %v2129 = vadd.f32 %v2046, %v2128
        %2130 = vdwg.mxu0
        %s2131 = scalar_lea.vmem [#allocation17], 512
        %v2132 = vld [vmem:[%s2131] sm:$0xff]
        %v2133 = vld [vmem:[%s2131 + $0x8] sm:$0xff]
        %v2134 = vld [vmem:[%s2131 + $0x10] sm:$0xff]
        %v2135 = vld [vmem:[%s2131 + $0x18] sm:$0xff]
        %v2136 = vld [vmem:[%s2131 + $0x20] sm:$0xff]
        %v2137 = vld [vmem:[%s2131 + $0x28] sm:$0xff]
        %v2138 = vld [vmem:[%s2131 + $0x30] sm:$0xff]
        %v2139 = vld [vmem:[%s2131 + $0x38] sm:$0xff]
        %v2140 = vld [vmem:[%s2131 + $0x40] sm:$0xff]
        %v2141 = vld [vmem:[%s2131 + $0x48] sm:$0xff]
        %v2142 = vld [vmem:[%s2131 + $0x50] sm:$0xff]
        %v2143 = vld [vmem:[%s2131 + $0x58] sm:$0xff]
        %v2144 = vld [vmem:[%s2131 + $0x60] sm:$0xff]
        %v2145 = vld [vmem:[%s2131 + $0x68] sm:$0xff]
        %v2146 = vld [vmem:[%s2131 + $0x70] sm:$0xff]
        %v2147 = vld [vmem:[%s2131 + $0x78] sm:$0xff]
        %v2148 = vld [vmem:[%s2131 + $0x80] sm:$0xff]
        %v2149 = vld [vmem:[%s2131 + $0x88] sm:$0xff]
        %v2150 = vld [vmem:[%s2131 + $0x90] sm:$0xff]
        %v2151 = vld [vmem:[%s2131 + $0x98] sm:$0xff]
        %v2152 = vld [vmem:[%s2131 + $0xa0] sm:$0xff]
        %v2153 = vld [vmem:[%s2131 + $0xa8] sm:$0xff]
        %v2154 = vld [vmem:[%s2131 + $0xb0] sm:$0xff]
        %v2155 = vld [vmem:[%s2131 + $0xb8] sm:$0xff]
        %v2156 = vld [vmem:[%s2131 + $0xc0] sm:$0xff]
        %v2157 = vld [vmem:[%s2131 + $0xc8] sm:$0xff]
        %v2158 = vld [vmem:[%s2131 + $0xd0] sm:$0xff]
        %v2159 = vld [vmem:[%s2131 + $0xd8] sm:$0xff]
        %v2160 = vld [vmem:[%s2131 + $0xe0] sm:$0xff]
        %v2161 = vld [vmem:[%s2131 + $0xe8] sm:$0xff]
        %v2162 = vld [vmem:[%s2131 + $0xf0] sm:$0xff]
        %v2163 = vld [vmem:[%s2131 + $0xf8] sm:$0xff]
        %v2165 = vrot.slane %v1885, 2
        %v2166 = vrot.slane %v1886, 2
        %v2167 = vsel %vm871, %v2165, %v2166
        %v2168 = vrot.slane %v1887, 2
        %v2169 = vsel %vm871, %v2166, %v2168
        %v2170 = vrot.slane %v1888, 2
        %v2171 = vsel %vm871, %v2168, %v2170
        %2175 = vmatprep.subr.mxu0 %v2133
        %2176 = vmatpush1.msra.mxu0 %v2132
        %2177 = vmatprep.subr.mxu0 %v2135
        %2178 = vmatpush1.msra.mxu0 %v2134
        %2179 = vmatprep.subr.mxu0 %v2137
        %2180 = vmatpush1.msra.mxu0 %v2136
        %2181 = vmatprep.subr.mxu0 %v2139
        %2182 = vmatpush1.msra.mxu0 %v2138
        %2183 = vmatprep.subr.mxu0 %v2141
        %2184 = vmatpush1.msra.mxu0 %v2140
        %2185 = vmatprep.subr.mxu0 %v2143
        %2186 = vmatpush1.msra.mxu0 %v2142
        %2187 = vmatprep.subr.mxu0 %v2145
        %2188 = vmatpush1.msra.mxu0 %v2144
        %2189 = vmatprep.subr.mxu0 %v2147
        %2190 = vmatpush1.msra.mxu0 %v2146
        %2191 = vmatprep.subr.mxu0 %v2149
        %2192 = vmatpush1.msra.mxu0 %v2148
        %2193 = vmatprep.subr.mxu0 %v2151
        %2194 = vmatpush1.msra.mxu0 %v2150
        %2195 = vmatprep.subr.mxu0 %v2153
        %2196 = vmatpush1.msra.mxu0 %v2152
        %2197 = vmatprep.subr.mxu0 %v2155
        %2198 = vmatpush1.msra.mxu0 %v2154
        %2199 = vmatprep.subr.mxu0 %v2157
        %2200 = vmatpush1.msra.mxu0 %v2156
        %2201 = vmatprep.subr.mxu0 %v2159
        %2202 = vmatpush1.msra.mxu0 %v2158
        %2203 = vmatprep.subr.mxu0 %v2161
        %2204 = vmatpush1.msra.mxu0 %v2160
        %2205 = vmatprep.subr.mxu0 %v2163
        %2206 = vmatpush1.msra.mxu0 %v2162
        %2207 = vmatprep.subr.mxu0 0.0
        %2208 = vmatpush1.msra.mxu0 0.0
        %2209 = vmatprep.subr.mxu0 0.0
        %2210 = vmatpush1.msra.mxu0 0.0
        %2211 = vmatprep.subr.mxu0 0.0
        %2212 = vmatpush1.msra.mxu0 0.0
        %2213 = vmatprep.subr.mxu0 0.0
        %2214 = vmatpush1.msra.mxu0 0.0
        %2215 = vmatprep.subr.mxu0 0.0
        %2216 = vmatpush1.msra.mxu0 0.0
        %2217 = vmatprep.subr.mxu0 0.0
        %2218 = vmatpush1.msra.mxu0 0.0
        %2219 = vmatprep.subr.mxu0 0.0
        %2220 = vmatpush1.msra.mxu0 0.0
        %2221 = vmatprep.subr.mxu0 0.0
        %2222 = vmatpush1.msra.mxu0 0.0
        %2223 = vmatprep.subr.mxu0 0.0
        %2224 = vmatpush1.msra.mxu0 0.0
        %2225 = vmatprep.subr.mxu0 0.0
        %2226 = vmatpush1.msra.mxu0 0.0
        %2227 = vmatprep.subr.mxu0 0.0
        %2228 = vmatpush1.msra.mxu0 0.0
        %2229 = vmatprep.subr.mxu0 0.0
        %2230 = vmatpush1.msra.mxu0 0.0
        %2231 = vmatprep.subr.mxu0 0.0
        %2232 = vmatpush1.msra.mxu0 0.0
        %2233 = vmatprep.subr.mxu0 0.0
        %2234 = vmatpush1.msra.mxu0 0.0
        %2235 = vmatprep.subr.mxu0 0.0
        %2236 = vmatpush1.msra.mxu0 0.0
        %2237 = vmatprep.subr.mxu0 0.0
        %2238 = vmatpush1.msra.mxu0 0.0
        %2239 = vmatprep.mubr.f32.mxu0 0.0
        %2240 = vmatmul.mubr.f32.gmra.mrb[0].mxu0 %v2167
        %v2241 = vpop.f32.mrb[0].mxu0
        %v2242 = vadd.f32 0.0, %v2241
        %v2243 = vpop.f32.mrb[0].mxu0
        %v2244 = vadd.f32 0.0, %v2243
        %2245 = vmatprep.mubr.f32.mxu0 0.0
        %2246 = vmatmul.mubr.f32.gmra.mrb[0].mxu0 %v2169
        %v2247 = vpop.f32.mrb[0].mxu0
        %v2248 = vadd.f32 0.0, %v2247
        %v2249 = vpop.f32.mrb[0].mxu0
        %v2250 = vadd.f32 0.0, %v2249
        %2251 = vmatprep.mubr.f32.mxu0 0.0
        %2252 = vmatmul.mubr.f32.gmra.mrb[0].mxu0 %v2171
        %v2253 = vpop.f32.mrb[0].mxu0
        %v2254 = vadd.f32 0.0, %v2253
        %v2255 = vpop.f32.mrb[0].mxu0
        %v2256 = vadd.f32 0.0, %v2255
        %2257 = vdwg.mxu0
        %v2258 = vadd.f32 %v2115, %v2242
        %v2259 = vadd.f32 %v2117, %v2244
        %v2260 = vadd.f32 %v2121, %v2248
        %v2261 = vadd.f32 %v2123, %v2250
        %v2262 = vadd.f32 %v2127, %v2254
        %v2263 = vadd.f32 %v2129, %v2256
        %v2264 = vld [vmem:[#allocation19] sm:$0x3]
        %v2266 = vlaneseq
        %v2267 = vshrl.u32 %v2266, 7
        %v2268 = vsub.s32 0, %v2267
        %v2269 = vrot.slane %v2264, %v2268
        %v2270 = vlaneseq
        %v2271 = vshrl.u32 %v2270, 7
        %v2272 = vsub.s32 1, %v2271
        %v2273 = vrot.slane %v2264, %v2272
        %v2276 = vmul.f32 %v2258, %v2269
        %v2277 = vmul.f32 %v2259, %v2273
        %v2278 = vmul.f32 %v2260, %v2269
        %v2279 = vmul.f32 %v2261, %v2273
        %v2280 = vmul.f32 %v2262, %v2269
        %v2281 = vmul.f32 %v2263, %v2273
        %v2282 = vld [vmem:[#allocation20] sm:$0x3]
        %v2284 = vlaneseq
        %v2285 = vshrl.u32 %v2284, 7
        %v2286 = vsub.s32 0, %v2285
        %v2287 = vrot.slane %v2282, %v2286
        %v2288 = vlaneseq
        %v2289 = vshrl.u32 %v2288, 7
        %v2290 = vsub.s32 1, %v2289
        %v2291 = vrot.slane %v2282, %v2290
        %v2294 = vadd.f32 %v2276, %v2287
        %v2295 = vadd.f32 %v2277, %v2291
        %v2296 = vadd.f32 %v2278, %v2287
        %v2297 = vadd.f32 %v2279, %v2291
        %v2298 = vadd.f32 %v2280, %v2287
        %v2299 = vadd.f32 %v2281, %v2291
        %v2300 = vmax.f32 %v2294, 0.0
        %v2301 = vmax.f32 %v2295, 0.0
        %v2302 = vmax.f32 %v2296, 0.0
        %v2303 = vmax.f32 %v2297, 0.0
        %v2304 = vmax.f32 %v2298, 0.0
        %v2305 = vmax.f32 %v2299, 0.0
        %v2306 = vld [vmem:[#allocation22] sm:$0xff]
        %v2307 = vld [vmem:[#allocation22 + $0x8] sm:$0xff]
        %v2308 = vld [vmem:[#allocation22 + $0x10] sm:$0xff]
        %v2309 = vld [vmem:[#allocation22 + $0x18] sm:$0xff]
        %v2310 = vld [vmem:[#allocation22 + $0x20] sm:$0xff]
        %v2311 = vld [vmem:[#allocation22 + $0x28] sm:$0xff]
        %v2312 = vld [vmem:[#allocation22 + $0x30] sm:$0xff]
        %v2313 = vld [vmem:[#allocation22 + $0x38] sm:$0xff]
        %v2314 = vld [vmem:[#allocation22 + $0x40] sm:$0xff]
        %v2315 = vld [vmem:[#allocation22 + $0x48] sm:$0xff]
        %v2316 = vld [vmem:[#allocation22 + $0x50] sm:$0xff]
        %v2317 = vld [vmem:[#allocation22 + $0x58] sm:$0xff]
        %v2318 = vld [vmem:[#allocation22 + $0x60] sm:$0xff]
        %v2319 = vld [vmem:[#allocation22 + $0x68] sm:$0xff]
        %v2320 = vld [vmem:[#allocation22 + $0x70] sm:$0xff]
        %v2321 = vld [vmem:[#allocation22 + $0x78] sm:$0xff]
        %v2322 = vld [vmem:[#allocation22 + $0x80] sm:$0xff]
        %v2323 = vld [vmem:[#allocation22 + $0x88] sm:$0xff]
        %v2324 = vld [vmem:[#allocation22 + $0x90] sm:$0xff]
        %v2325 = vld [vmem:[#allocation22 + $0x98] sm:$0xff]
        %v2326 = vld [vmem:[#allocation22 + $0xa0] sm:$0xff]
        %v2327 = vld [vmem:[#allocation22 + $0xa8] sm:$0xff]
        %v2328 = vld [vmem:[#allocation22 + $0xb0] sm:$0xff]
        %v2329 = vld [vmem:[#allocation22 + $0xb8] sm:$0xff]
        %v2330 = vld [vmem:[#allocation22 + $0xc0] sm:$0xff]
        %v2331 = vld [vmem:[#allocation22 + $0xc8] sm:$0xff]
        %v2332 = vld [vmem:[#allocation22 + $0xd0] sm:$0xff]
        %v2333 = vld [vmem:[#allocation22 + $0xd8] sm:$0xff]
        %v2334 = vld [vmem:[#allocation22 + $0xe0] sm:$0xff]
        %v2335 = vld [vmem:[#allocation22 + $0xe8] sm:$0xff]
        %v2336 = vld [vmem:[#allocation22 + $0xf0] sm:$0xff]
        %v2337 = vld [vmem:[#allocation22 + $0xf8] sm:$0xff]
        %v2338 = vld [vmem:[#allocation22 + $0x100] sm:$0xff]
        %v2339 = vld [vmem:[#allocation22 + $0x108] sm:$0xff]
        %v2340 = vld [vmem:[#allocation22 + $0x110] sm:$0xff]
        %v2341 = vld [vmem:[#allocation22 + $0x118] sm:$0xff]
        %v2342 = vld [vmem:[#allocation22 + $0x120] sm:$0xff]
        %v2343 = vld [vmem:[#allocation22 + $0x128] sm:$0xff]
        %v2344 = vld [vmem:[#allocation22 + $0x130] sm:$0xff]
        %v2345 = vld [vmem:[#allocation22 + $0x138] sm:$0xff]
        %v2346 = vld [vmem:[#allocation22 + $0x140] sm:$0xff]
        %v2347 = vld [vmem:[#allocation22 + $0x148] sm:$0xff]
        %v2348 = vld [vmem:[#allocation22 + $0x150] sm:$0xff]
        %v2349 = vld [vmem:[#allocation22 + $0x158] sm:$0xff]
        %v2350 = vld [vmem:[#allocation22 + $0x160] sm:$0xff]
        %v2351 = vld [vmem:[#allocation22 + $0x168] sm:$0xff]
        %v2352 = vld [vmem:[#allocation22 + $0x170] sm:$0xff]
        %v2353 = vld [vmem:[#allocation22 + $0x178] sm:$0xff]
        %v2354 = vld [vmem:[#allocation22 + $0x180] sm:$0xff]
        %v2355 = vld [vmem:[#allocation22 + $0x188] sm:$0xff]
        %v2356 = vld [vmem:[#allocation22 + $0x190] sm:$0xff]
        %v2357 = vld [vmem:[#allocation22 + $0x198] sm:$0xff]
        %v2358 = vld [vmem:[#allocation22 + $0x1a0] sm:$0xff]
        %v2359 = vld [vmem:[#allocation22 + $0x1a8] sm:$0xff]
        %v2360 = vld [vmem:[#allocation22 + $0x1b0] sm:$0xff]
        %v2361 = vld [vmem:[#allocation22 + $0x1b8] sm:$0xff]
        %v2362 = vld [vmem:[#allocation22 + $0x1c0] sm:$0xff]
        %v2363 = vld [vmem:[#allocation22 + $0x1c8] sm:$0xff]
        %v2364 = vld [vmem:[#allocation22 + $0x1d0] sm:$0xff]
        %v2365 = vld [vmem:[#allocation22 + $0x1d8] sm:$0xff]
        %v2366 = vld [vmem:[#allocation22 + $0x1e0] sm:$0xff]
        %v2367 = vld [vmem:[#allocation22 + $0x1e8] sm:$0xff]
        %v2368 = vld [vmem:[#allocation22 + $0x1f0] sm:$0xff]
        %v2369 = vld [vmem:[#allocation22 + $0x1f8] sm:$0xff]
        %v2370 = vld [vmem:[#allocation22 + $0x200] sm:$0xff]
        %v2371 = vld [vmem:[#allocation22 + $0x208] sm:$0xff]
        %v2372 = vld [vmem:[#allocation22 + $0x210] sm:$0xff]
        %v2373 = vld [vmem:[#allocation22 + $0x218] sm:$0xff]
        %v2374 = vld [vmem:[#allocation22 + $0x220] sm:$0xff]
        %v2375 = vld [vmem:[#allocation22 + $0x228] sm:$0xff]
        %v2376 = vld [vmem:[#allocation22 + $0x230] sm:$0xff]
        %v2377 = vld [vmem:[#allocation22 + $0x238] sm:$0xff]
        %v2378 = vld [vmem:[#allocation22 + $0x240] sm:$0xff]
        %v2379 = vld [vmem:[#allocation22 + $0x248] sm:$0xff]
        %v2380 = vld [vmem:[#allocation22 + $0x250] sm:$0xff]
        %v2381 = vld [vmem:[#allocation22 + $0x258] sm:$0xff]
        %v2382 = vld [vmem:[#allocation22 + $0x260] sm:$0xff]
        %v2383 = vld [vmem:[#allocation22 + $0x268] sm:$0xff]
        %v2384 = vld [vmem:[#allocation22 + $0x270] sm:$0xff]
        %v2385 = vld [vmem:[#allocation22 + $0x278] sm:$0xff]
        %v2386 = vld [vmem:[#allocation22 + $0x280] sm:$0xff]
        %v2387 = vld [vmem:[#allocation22 + $0x288] sm:$0xff]
        %v2388 = vld [vmem:[#allocation22 + $0x290] sm:$0xff]
        %v2389 = vld [vmem:[#allocation22 + $0x298] sm:$0xff]
        %v2390 = vld [vmem:[#allocation22 + $0x2a0] sm:$0xff]
        %v2391 = vld [vmem:[#allocation22 + $0x2a8] sm:$0xff]
        %v2392 = vld [vmem:[#allocation22 + $0x2b0] sm:$0xff]
        %v2393 = vld [vmem:[#allocation22 + $0x2b8] sm:$0xff]
        %v2394 = vld [vmem:[#allocation22 + $0x2c0] sm:$0xff]
        %v2395 = vld [vmem:[#allocation22 + $0x2c8] sm:$0xff]
        %v2396 = vld [vmem:[#allocation22 + $0x2d0] sm:$0xff]
        %v2397 = vld [vmem:[#allocation22 + $0x2d8] sm:$0xff]
        %v2398 = vld [vmem:[#allocation22 + $0x2e0] sm:$0xff]
        %v2399 = vld [vmem:[#allocation22 + $0x2e8] sm:$0xff]
        %v2400 = vld [vmem:[#allocation22 + $0x2f0] sm:$0xff]
        %v2401 = vld [vmem:[#allocation22 + $0x2f8] sm:$0xff]
        %v2402 = vld [vmem:[#allocation22 + $0x300] sm:$0xff]
        %v2403 = vld [vmem:[#allocation22 + $0x308] sm:$0xff]
        %v2404 = vld [vmem:[#allocation22 + $0x310] sm:$0xff]
        %v2405 = vld [vmem:[#allocation22 + $0x318] sm:$0xff]
        %v2406 = vld [vmem:[#allocation22 + $0x320] sm:$0xff]
        %v2407 = vld [vmem:[#allocation22 + $0x328] sm:$0xff]
        %v2408 = vld [vmem:[#allocation22 + $0x330] sm:$0xff]
        %v2409 = vld [vmem:[#allocation22 + $0x338] sm:$0xff]
        %v2410 = vld [vmem:[#allocation22 + $0x340] sm:$0xff]
        %v2411 = vld [vmem:[#allocation22 + $0x348] sm:$0xff]
        %v2412 = vld [vmem:[#allocation22 + $0x350] sm:$0xff]
        %v2413 = vld [vmem:[#allocation22 + $0x358] sm:$0xff]
        %v2414 = vld [vmem:[#allocation22 + $0x360] sm:$0xff]
        %v2415 = vld [vmem:[#allocation22 + $0x368] sm:$0xff]
        %v2416 = vld [vmem:[#allocation22 + $0x370] sm:$0xff]
        %v2417 = vld [vmem:[#allocation22 + $0x378] sm:$0xff]
        %v2418 = vld [vmem:[#allocation22 + $0x380] sm:$0xff]
        %v2419 = vld [vmem:[#allocation22 + $0x388] sm:$0xff]
        %v2420 = vld [vmem:[#allocation22 + $0x390] sm:$0xff]
        %v2421 = vld [vmem:[#allocation22 + $0x398] sm:$0xff]
        %v2422 = vld [vmem:[#allocation22 + $0x3a0] sm:$0xff]
        %v2423 = vld [vmem:[#allocation22 + $0x3a8] sm:$0xff]
        %v2424 = vld [vmem:[#allocation22 + $0x3b0] sm:$0xff]
        %v2425 = vld [vmem:[#allocation22 + $0x3b8] sm:$0xff]
        %v2426 = vld [vmem:[#allocation22 + $0x3c0] sm:$0xff]
        %v2427 = vld [vmem:[#allocation22 + $0x3c8] sm:$0xff]
        %v2428 = vld [vmem:[#allocation22 + $0x3d0] sm:$0xff]
        %v2429 = vld [vmem:[#allocation22 + $0x3d8] sm:$0xff]
        %v2430 = vld [vmem:[#allocation22 + $0x3e0] sm:$0xff]
        %v2431 = vld [vmem:[#allocation22 + $0x3e8] sm:$0xff]
        %v2432 = vld [vmem:[#allocation22 + $0x3f0] sm:$0xff]
        %v2433 = vld [vmem:[#allocation22 + $0x3f8] sm:$0xff]
        %s2434 = scalar_lea.vmem [#allocation22], 1024
        %v2435 = vld [vmem:[%s2434] sm:$0xff]
        %v2436 = vld [vmem:[%s2434 + $0x8] sm:$0xff]
        %v2437 = vld [vmem:[%s2434 + $0x10] sm:$0xff]
        %v2438 = vld [vmem:[%s2434 + $0x18] sm:$0xff]
        %v2439 = vld [vmem:[%s2434 + $0x20] sm:$0xff]
        %v2440 = vld [vmem:[%s2434 + $0x28] sm:$0xff]
        %v2441 = vld [vmem:[%s2434 + $0x30] sm:$0xff]
        %v2442 = vld [vmem:[%s2434 + $0x38] sm:$0xff]
        %v2443 = vld [vmem:[%s2434 + $0x40] sm:$0xff]
        %v2444 = vld [vmem:[%s2434 + $0x48] sm:$0xff]
        %v2445 = vld [vmem:[%s2434 + $0x50] sm:$0xff]
        %v2446 = vld [vmem:[%s2434 + $0x58] sm:$0xff]
        %v2447 = vld [vmem:[%s2434 + $0x60] sm:$0xff]
        %v2448 = vld [vmem:[%s2434 + $0x68] sm:$0xff]
        %v2449 = vld [vmem:[%s2434 + $0x70] sm:$0xff]
        %v2450 = vld [vmem:[%s2434 + $0x78] sm:$0xff]
        %v2451 = vld [vmem:[%s2434 + $0x80] sm:$0xff]
        %v2452 = vld [vmem:[%s2434 + $0x88] sm:$0xff]
        %v2453 = vld [vmem:[%s2434 + $0x90] sm:$0xff]
        %v2454 = vld [vmem:[%s2434 + $0x98] sm:$0xff]
        %v2455 = vld [vmem:[%s2434 + $0xa0] sm:$0xff]
        %v2456 = vld [vmem:[%s2434 + $0xa8] sm:$0xff]
        %v2457 = vld [vmem:[%s2434 + $0xb0] sm:$0xff]
        %v2458 = vld [vmem:[%s2434 + $0xb8] sm:$0xff]
        %v2459 = vld [vmem:[%s2434 + $0xc0] sm:$0xff]
        %v2460 = vld [vmem:[%s2434 + $0xc8] sm:$0xff]
        %v2461 = vld [vmem:[%s2434 + $0xd0] sm:$0xff]
        %v2462 = vld [vmem:[%s2434 + $0xd8] sm:$0xff]
        %v2463 = vld [vmem:[%s2434 + $0xe0] sm:$0xff]
        %v2464 = vld [vmem:[%s2434 + $0xe8] sm:$0xff]
        %v2465 = vld [vmem:[%s2434 + $0xf0] sm:$0xff]
        %v2466 = vld [vmem:[%s2434 + $0xf8] sm:$0xff]
        %v2467 = vld [vmem:[%s2434 + $0x100] sm:$0xff]
        %v2468 = vld [vmem:[%s2434 + $0x108] sm:$0xff]
        %v2469 = vld [vmem:[%s2434 + $0x110] sm:$0xff]
        %v2470 = vld [vmem:[%s2434 + $0x118] sm:$0xff]
        %v2471 = vld [vmem:[%s2434 + $0x120] sm:$0xff]
        %v2472 = vld [vmem:[%s2434 + $0x128] sm:$0xff]
        %v2473 = vld [vmem:[%s2434 + $0x130] sm:$0xff]
        %v2474 = vld [vmem:[%s2434 + $0x138] sm:$0xff]
        %v2475 = vld [vmem:[%s2434 + $0x140] sm:$0xff]
        %v2476 = vld [vmem:[%s2434 + $0x148] sm:$0xff]
        %v2477 = vld [vmem:[%s2434 + $0x150] sm:$0xff]
        %v2478 = vld [vmem:[%s2434 + $0x158] sm:$0xff]
        %v2479 = vld [vmem:[%s2434 + $0x160] sm:$0xff]
        %v2480 = vld [vmem:[%s2434 + $0x168] sm:$0xff]
        %v2481 = vld [vmem:[%s2434 + $0x170] sm:$0xff]
        %v2482 = vld [vmem:[%s2434 + $0x178] sm:$0xff]
        %v2483 = vld [vmem:[%s2434 + $0x180] sm:$0xff]
        %v2484 = vld [vmem:[%s2434 + $0x188] sm:$0xff]
        %v2485 = vld [vmem:[%s2434 + $0x190] sm:$0xff]
        %v2486 = vld [vmem:[%s2434 + $0x198] sm:$0xff]
        %v2487 = vld [vmem:[%s2434 + $0x1a0] sm:$0xff]
        %v2488 = vld [vmem:[%s2434 + $0x1a8] sm:$0xff]
        %v2489 = vld [vmem:[%s2434 + $0x1b0] sm:$0xff]
        %v2490 = vld [vmem:[%s2434 + $0x1b8] sm:$0xff]
        %v2491 = vld [vmem:[%s2434 + $0x1c0] sm:$0xff]
        %v2492 = vld [vmem:[%s2434 + $0x1c8] sm:$0xff]
        %v2493 = vld [vmem:[%s2434 + $0x1d0] sm:$0xff]
        %v2494 = vld [vmem:[%s2434 + $0x1d8] sm:$0xff]
        %v2495 = vld [vmem:[%s2434 + $0x1e0] sm:$0xff]
        %v2496 = vld [vmem:[%s2434 + $0x1e8] sm:$0xff]
        %v2497 = vld [vmem:[%s2434 + $0x1f0] sm:$0xff]
        %v2498 = vld [vmem:[%s2434 + $0x1f8] sm:$0xff]
        %v2499 = vld [vmem:[%s2434 + $0x200] sm:$0xff]
        %v2500 = vld [vmem:[%s2434 + $0x208] sm:$0xff]
        %v2501 = vld [vmem:[%s2434 + $0x210] sm:$0xff]
        %v2502 = vld [vmem:[%s2434 + $0x218] sm:$0xff]
        %v2503 = vld [vmem:[%s2434 + $0x220] sm:$0xff]
        %v2504 = vld [vmem:[%s2434 + $0x228] sm:$0xff]
        %v2505 = vld [vmem:[%s2434 + $0x230] sm:$0xff]
        %v2506 = vld [vmem:[%s2434 + $0x238] sm:$0xff]
        %v2507 = vld [vmem:[%s2434 + $0x240] sm:$0xff]
        %v2508 = vld [vmem:[%s2434 + $0x248] sm:$0xff]
        %v2509 = vld [vmem:[%s2434 + $0x250] sm:$0xff]
        %v2510 = vld [vmem:[%s2434 + $0x258] sm:$0xff]
        %v2511 = vld [vmem:[%s2434 + $0x260] sm:$0xff]
        %v2512 = vld [vmem:[%s2434 + $0x268] sm:$0xff]
        %v2513 = vld [vmem:[%s2434 + $0x270] sm:$0xff]
        %v2514 = vld [vmem:[%s2434 + $0x278] sm:$0xff]
        %v2515 = vld [vmem:[%s2434 + $0x280] sm:$0xff]
        %v2516 = vld [vmem:[%s2434 + $0x288] sm:$0xff]
        %v2517 = vld [vmem:[%s2434 + $0x290] sm:$0xff]
        %v2518 = vld [vmem:[%s2434 + $0x298] sm:$0xff]
        %v2519 = vld [vmem:[%s2434 + $0x2a0] sm:$0xff]
        %v2520 = vld [vmem:[%s2434 + $0x2a8] sm:$0xff]
        %v2521 = vld [vmem:[%s2434 + $0x2b0] sm:$0xff]
        %v2522 = vld [vmem:[%s2434 + $0x2b8] sm:$0xff]
        %v2523 = vld [vmem:[%s2434 + $0x2c0] sm:$0xff]
        %v2524 = vld [vmem:[%s2434 + $0x2c8] sm:$0xff]
        %v2525 = vld [vmem:[%s2434 + $0x2d0] sm:$0xff]
        %v2526 = vld [vmem:[%s2434 + $0x2d8] sm:$0xff]
        %v2527 = vld [vmem:[%s2434 + $0x2e0] sm:$0xff]
        %v2528 = vld [vmem:[%s2434 + $0x2e8] sm:$0xff]
        %v2529 = vld [vmem:[%s2434 + $0x2f0] sm:$0xff]
        %v2530 = vld [vmem:[%s2434 + $0x2f8] sm:$0xff]
        %v2531 = vld [vmem:[%s2434 + $0x300] sm:$0xff]
        %v2532 = vld [vmem:[%s2434 + $0x308] sm:$0xff]
        %v2533 = vld [vmem:[%s2434 + $0x310] sm:$0xff]
        %v2534 = vld [vmem:[%s2434 + $0x318] sm:$0xff]
        %v2535 = vld [vmem:[%s2434 + $0x320] sm:$0xff]
        %v2536 = vld [vmem:[%s2434 + $0x328] sm:$0xff]
        %v2537 = vld [vmem:[%s2434 + $0x330] sm:$0xff]
        %v2538 = vld [vmem:[%s2434 + $0x338] sm:$0xff]
        %v2539 = vld [vmem:[%s2434 + $0x340] sm:$0xff]
        %v2540 = vld [vmem:[%s2434 + $0x348] sm:$0xff]
        %v2541 = vld [vmem:[%s2434 + $0x350] sm:$0xff]
        %v2542 = vld [vmem:[%s2434 + $0x358] sm:$0xff]
        %v2543 = vld [vmem:[%s2434 + $0x360] sm:$0xff]
        %v2544 = vld [vmem:[%s2434 + $0x368] sm:$0xff]
        %v2545 = vld [vmem:[%s2434 + $0x370] sm:$0xff]
        %v2546 = vld [vmem:[%s2434 + $0x378] sm:$0xff]
        %v2547 = vld [vmem:[%s2434 + $0x380] sm:$0xff]
        %v2548 = vld [vmem:[%s2434 + $0x388] sm:$0xff]
        %v2549 = vld [vmem:[%s2434 + $0x390] sm:$0xff]
        %v2550 = vld [vmem:[%s2434 + $0x398] sm:$0xff]
        %v2551 = vld [vmem:[%s2434 + $0x3a0] sm:$0xff]
        %v2552 = vld [vmem:[%s2434 + $0x3a8] sm:$0xff]
        %v2553 = vld [vmem:[%s2434 + $0x3b0] sm:$0xff]
        %v2554 = vld [vmem:[%s2434 + $0x3b8] sm:$0xff]
        %v2555 = vld [vmem:[%s2434 + $0x3c0] sm:$0xff]
        %v2556 = vld [vmem:[%s2434 + $0x3c8] sm:$0xff]
        %v2557 = vld [vmem:[%s2434 + $0x3d0] sm:$0xff]
        %v2558 = vld [vmem:[%s2434 + $0x3d8] sm:$0xff]
        %v2559 = vld [vmem:[%s2434 + $0x3e0] sm:$0xff]
        %v2560 = vld [vmem:[%s2434 + $0x3e8] sm:$0xff]
        %v2561 = vld [vmem:[%s2434 + $0x3f0] sm:$0xff]
        %v2562 = vld [vmem:[%s2434 + $0x3f8] sm:$0xff]
        %v2569 = vrot.slane %v2300, 1
        %v2570 = vrot.slane %v2302, 1
        %v2571 = vsel %vm815, %v2569, %v2570
        %v2572 = vrot.slane %v2301, 1
        %v2573 = vrot.slane %v2303, 1
        %v2574 = vsel %vm815, %v2572, %v2573
        %v2575 = vrot.slane %v2304, 1
        %v2576 = vsel %vm815, %v2570, %v2575
        %v2577 = vrot.slane %v2305, 1
        %v2578 = vsel %vm815, %v2573, %v2577
        %2585 = vmatprep.subr.mxu0 %v2436
        %2586 = vmatpush1.msra.mxu0 %v2435
        %2587 = vmatprep.subr.mxu0 %v2440
        %2588 = vmatpush1.msra.mxu0 %v2439
        %2589 = vmatprep.subr.mxu0 %v2444
        %2590 = vmatpush1.msra.mxu0 %v2443
        %2591 = vmatprep.subr.mxu0 %v2448
        %2592 = vmatpush1.msra.mxu0 %v2447
        %2593 = vmatprep.subr.mxu0 %v2452
        %2594 = vmatpush1.msra.mxu0 %v2451
        %2595 = vmatprep.subr.mxu0 %v2456
        %2596 = vmatpush1.msra.mxu0 %v2455
        %2597 = vmatprep.subr.mxu0 %v2460
        %2598 = vmatpush1.msra.mxu0 %v2459
        %2599 = vmatprep.subr.mxu0 %v2464
        %2600 = vmatpush1.msra.mxu0 %v2463
        %2601 = vmatprep.subr.mxu0 %v2468
        %2602 = vmatpush1.msra.mxu0 %v2467
        %2603 = vmatprep.subr.mxu0 %v2472
        %2604 = vmatpush1.msra.mxu0 %v2471
        %2605 = vmatprep.subr.mxu0 %v2476
        %2606 = vmatpush1.msra.mxu0 %v2475
        %2607 = vmatprep.subr.mxu0 %v2480
        %2608 = vmatpush1.msra.mxu0 %v2479
        %2609 = vmatprep.subr.mxu0 %v2484
        %2610 = vmatpush1.msra.mxu0 %v2483
        %2611 = vmatprep.subr.mxu0 %v2488
        %2612 = vmatpush1.msra.mxu0 %v2487
        %2613 = vmatprep.subr.mxu0 %v2492
        %2614 = vmatpush1.msra.mxu0 %v2491
        %2615 = vmatprep.subr.mxu0 %v2496
        %2616 = vmatpush1.msra.mxu0 %v2495
        %2617 = vmatprep.subr.mxu0 %v2500
        %2618 = vmatpush1.msra.mxu0 %v2499
        %2619 = vmatprep.subr.mxu0 %v2504
        %2620 = vmatpush1.msra.mxu0 %v2503
        %2621 = vmatprep.subr.mxu0 %v2508
        %2622 = vmatpush1.msra.mxu0 %v2507
        %2623 = vmatprep.subr.mxu0 %v2512
        %2624 = vmatpush1.msra.mxu0 %v2511
        %2625 = vmatprep.subr.mxu0 %v2516
        %2626 = vmatpush1.msra.mxu0 %v2515
        %2627 = vmatprep.subr.mxu0 %v2520
        %2628 = vmatpush1.msra.mxu0 %v2519
        %2629 = vmatprep.subr.mxu0 %v2524
        %2630 = vmatpush1.msra.mxu0 %v2523
        %2631 = vmatprep.subr.mxu0 %v2528
        %2632 = vmatpush1.msra.mxu0 %v2527
        %2633 = vmatprep.subr.mxu0 %v2532
        %2634 = vmatpush1.msra.mxu0 %v2531
        %2635 = vmatprep.subr.mxu0 %v2536
        %2636 = vmatpush1.msra.mxu0 %v2535
        %2637 = vmatprep.subr.mxu0 %v2540
        %2638 = vmatpush1.msra.mxu0 %v2539
        %2639 = vmatprep.subr.mxu0 %v2544
        %2640 = vmatpush1.msra.mxu0 %v2543
        %2641 = vmatprep.subr.mxu0 %v2548
        %2642 = vmatpush1.msra.mxu0 %v2547
        %2643 = vmatprep.subr.mxu0 %v2552
        %2644 = vmatpush1.msra.mxu0 %v2551
        %2645 = vmatprep.subr.mxu0 %v2556
        %2646 = vmatpush1.msra.mxu0 %v2555
        %2647 = vmatprep.subr.mxu0 %v2560
        %2648 = vmatpush1.msra.mxu0 %v2559
        %2649 = vmatprep.mubr.f32.mxu0 %v2574
        %2650 = vmatmul.mubr.f32.gmra.mrb[0].mxu0 %v2571
        %v2651 = vpop.f32.mrb[0].mxu0
        %v2652 = vadd.f32 0.0, %v2651
        %v2653 = vpop.f32.mrb[0].mxu0
        %v2654 = vadd.f32 0.0, %v2653
        %2655 = vmatprep.mubr.f32.mxu0 %v2578
        %2656 = vmatmul.mubr.f32.gmra.mrb[0].mxu0 %v2576
        %v2657 = vpop.f32.mrb[0].mxu0
        %v2658 = vadd.f32 0.0, %v2657
        %v2659 = vpop.f32.mrb[0].mxu0
        %v2660 = vadd.f32 0.0, %v2659
        %2661 = vmatprep.mubr.f32.mxu0 %v2577
        %2662 = vmatmul.mubr.f32.gmra.mrb[0].mxu0 %v2575
        %v2663 = vpop.f32.mrb[0].mxu0
        %v2664 = vadd.f32 0.0, %v2663
        %v2665 = vpop.f32.mrb[0].mxu0
        %v2666 = vadd.f32 0.0, %v2665
        %2667 = vdwg.mxu0
        %2668 = vmatprep.subr.mxu0 %v2438
        %2669 = vmatpush1.msra.mxu0 %v2437
        %2670 = vmatprep.subr.mxu0 %v2442
        %2671 = vmatpush1.msra.mxu0 %v2441
        %2672 = vmatprep.subr.mxu0 %v2446
        %2673 = vmatpush1.msra.mxu0 %v2445
        %2674 = vmatprep.subr.mxu0 %v2450
        %2675 = vmatpush1.msra.mxu0 %v2449
        %2676 = vmatprep.subr.mxu0 %v2454
        %2677 = vmatpush1.msra.mxu0 %v2453
        %2678 = vmatprep.subr.mxu0 %v2458
        %2679 = vmatpush1.msra.mxu0 %v2457
        %2680 = vmatprep.subr.mxu0 %v2462
        %2681 = vmatpush1.msra.mxu0 %v2461
        %2682 = vmatprep.subr.mxu0 %v2466
        %2683 = vmatpush1.msra.mxu0 %v2465
        %2684 = vmatprep.subr.mxu0 %v2470
        %2685 = vmatpush1.msra.mxu0 %v2469
        %2686 = vmatprep.subr.mxu0 %v2474
        %2687 = vmatpush1.msra.mxu0 %v2473
        %2688 = vmatprep.subr.mxu0 %v2478
        %2689 = vmatpush1.msra.mxu0 %v2477
        %2690 = vmatprep.subr.mxu0 %v2482
        %2691 = vmatpush1.msra.mxu0 %v2481
        %2692 = vmatprep.subr.mxu0 %v2486
        %2693 = vmatpush1.msra.mxu0 %v2485
        %2694 = vmatprep.subr.mxu0 %v2490
        %2695 = vmatpush1.msra.mxu0 %v2489
        %2696 = vmatprep.subr.mxu0 %v2494
        %2697 = vmatpush1.msra.mxu0 %v2493
        %2698 = vmatprep.subr.mxu0 %v2498
        %2699 = vmatpush1.msra.mxu0 %v2497
        %2700 = vmatprep.subr.mxu0 %v2502
        %2701 = vmatpush1.msra.mxu0 %v2501
        %2702 = vmatprep.subr.mxu0 %v2506
        %2703 = vmatpush1.msra.mxu0 %v2505
        %2704 = vmatprep.subr.mxu0 %v2510
        %2705 = vmatpush1.msra.mxu0 %v2509
        %2706 = vmatprep.subr.mxu0 %v2514
        %2707 = vmatpush1.msra.mxu0 %v2513
        %2708 = vmatprep.subr.mxu0 %v2518
        %2709 = vmatpush1.msra.mxu0 %v2517
        %2710 = vmatprep.subr.mxu0 %v2522
        %2711 = vmatpush1.msra.mxu0 %v2521
        %2712 = vmatprep.subr.mxu0 %v2526
        %2713 = vmatpush1.msra.mxu0 %v2525
        %2714 = vmatprep.subr.mxu0 %v2530
        %2715 = vmatpush1.msra.mxu0 %v2529
        %2716 = vmatprep.subr.mxu0 %v2534
        %2717 = vmatpush1.msra.mxu0 %v2533
        %2718 = vmatprep.subr.mxu0 %v2538
        %2719 = vmatpush1.msra.mxu0 %v2537
        %2720 = vmatprep.subr.mxu0 %v2542
        %2721 = vmatpush1.msra.mxu0 %v2541
        %2722 = vmatprep.subr.mxu0 %v2546
        %2723 = vmatpush1.msra.mxu0 %v2545
        %2724 = vmatprep.subr.mxu0 %v2550
        %2725 = vmatpush1.msra.mxu0 %v2549
        %2726 = vmatprep.subr.mxu0 %v2554
        %2727 = vmatpush1.msra.mxu0 %v2553
        %2728 = vmatprep.subr.mxu0 %v2558
        %2729 = vmatpush1.msra.mxu0 %v2557
        %2730 = vmatprep.subr.mxu0 %v2562
        %2731 = vmatpush1.msra.mxu0 %v2561
        %2732 = vmatprep.mubr.f32.mxu0 %v2574
        %2733 = vmatmul.mubr.f32.gmra.mrb[0].mxu0 %v2571
        %v2734 = vpop.f32.mrb[0].mxu0
        %v2735 = vadd.f32 0.0, %v2734
        %v2736 = vpop.f32.mrb[0].mxu0
        %v2737 = vadd.f32 0.0, %v2736
        %2738 = vmatprep.mubr.f32.mxu0 %v2578
        %2739 = vmatmul.mubr.f32.gmra.mrb[0].mxu0 %v2576
        %v2740 = vpop.f32.mrb[0].mxu0
        %v2741 = vadd.f32 0.0, %v2740
        %v2742 = vpop.f32.mrb[0].mxu0
        %v2743 = vadd.f32 0.0, %v2742
        %2744 = vmatprep.mubr.f32.mxu0 %v2577
        %2745 = vmatmul.mubr.f32.gmra.mrb[0].mxu0 %v2575
        %v2746 = vpop.f32.mrb[0].mxu0
        %v2747 = vadd.f32 0.0, %v2746
        %v2748 = vpop.f32.mrb[0].mxu0
        %v2749 = vadd.f32 0.0, %v2748
        %2750 = vdwg.mxu0
        %2751 = vmatprep.subr.mxu0 %v2307
        %2752 = vmatpush1.msra.mxu0 %v2306
        %2753 = vmatprep.subr.mxu0 %v2311
        %2754 = vmatpush1.msra.mxu0 %v2310
        %2755 = vmatprep.subr.mxu0 %v2315
        %2756 = vmatpush1.msra.mxu0 %v2314
        %2757 = vmatprep.subr.mxu0 %v2319
        %2758 = vmatpush1.msra.mxu0 %v2318
        %2759 = vmatprep.subr.mxu0 %v2323
        %2760 = vmatpush1.msra.mxu0 %v2322
        %2761 = vmatprep.subr.mxu0 %v2327
        %2762 = vmatpush1.msra.mxu0 %v2326
        %2763 = vmatprep.subr.mxu0 %v2331
        %2764 = vmatpush1.msra.mxu0 %v2330
        %2765 = vmatprep.subr.mxu0 %v2335
        %2766 = vmatpush1.msra.mxu0 %v2334
        %2767 = vmatprep.subr.mxu0 %v2339
        %2768 = vmatpush1.msra.mxu0 %v2338
        %2769 = vmatprep.subr.mxu0 %v2343
        %2770 = vmatpush1.msra.mxu0 %v2342
        %2771 = vmatprep.subr.mxu0 %v2347
        %2772 = vmatpush1.msra.mxu0 %v2346
        %2773 = vmatprep.subr.mxu0 %v2351
        %2774 = vmatpush1.msra.mxu0 %v2350
        %2775 = vmatprep.subr.mxu0 %v2355
        %2776 = vmatpush1.msra.mxu0 %v2354
        %2777 = vmatprep.subr.mxu0 %v2359
        %2778 = vmatpush1.msra.mxu0 %v2358
        %2779 = vmatprep.subr.mxu0 %v2363
        %2780 = vmatpush1.msra.mxu0 %v2362
        %2781 = vmatprep.subr.mxu0 %v2367
        %2782 = vmatpush1.msra.mxu0 %v2366
        %2783 = vmatprep.subr.mxu0 %v2371
        %2784 = vmatpush1.msra.mxu0 %v2370
        %2785 = vmatprep.subr.mxu0 %v2375
        %2786 = vmatpush1.msra.mxu0 %v2374
        %2787 = vmatprep.subr.mxu0 %v2379
        %2788 = vmatpush1.msra.mxu0 %v2378
        %2789 = vmatprep.subr.mxu0 %v2383
        %2790 = vmatpush1.msra.mxu0 %v2382
        %2791 = vmatprep.subr.mxu0 %v2387
        %2792 = vmatpush1.msra.mxu0 %v2386
        %2793 = vmatprep.subr.mxu0 %v2391
        %2794 = vmatpush1.msra.mxu0 %v2390
        %2795 = vmatprep.subr.mxu0 %v2395
        %2796 = vmatpush1.msra.mxu0 %v2394
        %2797 = vmatprep.subr.mxu0 %v2399
        %2798 = vmatpush1.msra.mxu0 %v2398
        %2799 = vmatprep.subr.mxu0 %v2403
        %2800 = vmatpush1.msra.mxu0 %v2402
        %2801 = vmatprep.subr.mxu0 %v2407
        %2802 = vmatpush1.msra.mxu0 %v2406
        %2803 = vmatprep.subr.mxu0 %v2411
        %2804 = vmatpush1.msra.mxu0 %v2410
        %2805 = vmatprep.subr.mxu0 %v2415
        %2806 = vmatpush1.msra.mxu0 %v2414
        %2807 = vmatprep.subr.mxu0 %v2419
        %2808 = vmatpush1.msra.mxu0 %v2418
        %2809 = vmatprep.subr.mxu0 %v2423
        %2810 = vmatpush1.msra.mxu0 %v2422
        %2811 = vmatprep.subr.mxu0 %v2427
        %2812 = vmatpush1.msra.mxu0 %v2426
        %2813 = vmatprep.subr.mxu0 %v2431
        %2814 = vmatpush1.msra.mxu0 %v2430
        %2815 = vmatprep.mubr.f32.mxu0 %v2301
        %2816 = vmatmul.mubr.f32.gmra.mrb[0].mxu0 %v2300
        %v2817 = vpop.f32.mrb[0].mxu0
        %v2818 = vadd.f32 %v2652, %v2817
        %v2819 = vpop.f32.mrb[0].mxu0
        %v2820 = vadd.f32 %v2654, %v2819
        %2821 = vmatprep.mubr.f32.mxu0 %v2303
        %2822 = vmatmul.mubr.f32.gmra.mrb[0].mxu0 %v2302
        %v2823 = vpop.f32.mrb[0].mxu0
        %v2824 = vadd.f32 %v2658, %v2823
        %v2825 = vpop.f32.mrb[0].mxu0
        %v2826 = vadd.f32 %v2660, %v2825
        %2827 = vmatprep.mubr.f32.mxu0 %v2305
        %2828 = vmatmul.mubr.f32.gmra.mrb[0].mxu0 %v2304
        %v2829 = vpop.f32.mrb[0].mxu0
        %v2830 = vadd.f32 %v2664, %v2829
        %v2831 = vpop.f32.mrb[0].mxu0
        %v2832 = vadd.f32 %v2666, %v2831
        %2833 = vdwg.mxu0
        %2834 = vmatprep.subr.mxu0 %v2309
        %2835 = vmatpush1.msra.mxu0 %v2308
        %2836 = vmatprep.subr.mxu0 %v2313
        %2837 = vmatpush1.msra.mxu0 %v2312
        %2838 = vmatprep.subr.mxu0 %v2317
        %2839 = vmatpush1.msra.mxu0 %v2316
        %2840 = vmatprep.subr.mxu0 %v2321
        %2841 = vmatpush1.msra.mxu0 %v2320
        %2842 = vmatprep.subr.mxu0 %v2325
        %2843 = vmatpush1.msra.mxu0 %v2324
        %2844 = vmatprep.subr.mxu0 %v2329
        %2845 = vmatpush1.msra.mxu0 %v2328
        %2846 = vmatprep.subr.mxu0 %v2333
        %2847 = vmatpush1.msra.mxu0 %v2332
        %2848 = vmatprep.subr.mxu0 %v2337
        %2849 = vmatpush1.msra.mxu0 %v2336
        %2850 = vmatprep.subr.mxu0 %v2341
        %2851 = vmatpush1.msra.mxu0 %v2340
        %2852 = vmatprep.subr.mxu0 %v2345
        %2853 = vmatpush1.msra.mxu0 %v2344
        %2854 = vmatprep.subr.mxu0 %v2349
        %2855 = vmatpush1.msra.mxu0 %v2348
        %2856 = vmatprep.subr.mxu0 %v2353
        %2857 = vmatpush1.msra.mxu0 %v2352
        %2858 = vmatprep.subr.mxu0 %v2357
        %2859 = vmatpush1.msra.mxu0 %v2356
        %2860 = vmatprep.subr.mxu0 %v2361
        %2861 = vmatpush1.msra.mxu0 %v2360
        %2862 = vmatprep.subr.mxu0 %v2365
        %2863 = vmatpush1.msra.mxu0 %v2364
        %2864 = vmatprep.subr.mxu0 %v2369
        %2865 = vmatpush1.msra.mxu0 %v2368
        %2866 = vmatprep.subr.mxu0 %v2373
        %2867 = vmatpush1.msra.mxu0 %v2372
        %2868 = vmatprep.subr.mxu0 %v2377
        %2869 = vmatpush1.msra.mxu0 %v2376
        %2870 = vmatprep.subr.mxu0 %v2381
        %2871 = vmatpush1.msra.mxu0 %v2380
        %2872 = vmatprep.subr.mxu0 %v2385
        %2873 = vmatpush1.msra.mxu0 %v2384
        %2874 = vmatprep.subr.mxu0 %v2389
        %2875 = vmatpush1.msra.mxu0 %v2388
        %2876 = vmatprep.subr.mxu0 %v2393
        %2877 = vmatpush1.msra.mxu0 %v2392
        %2878 = vmatprep.subr.mxu0 %v2397
        %2879 = vmatpush1.msra.mxu0 %v2396
        %2880 = vmatprep.subr.mxu0 %v2401
        %2881 = vmatpush1.msra.mxu0 %v2400
        %2882 = vmatprep.subr.mxu0 %v2405
        %2883 = vmatpush1.msra.mxu0 %v2404
        %2884 = vmatprep.subr.mxu0 %v2409
        %2885 = vmatpush1.msra.mxu0 %v2408
        %2886 = vmatprep.subr.mxu0 %v2413
        %2887 = vmatpush1.msra.mxu0 %v2412
        %2888 = vmatprep.subr.mxu0 %v2417
        %2889 = vmatpush1.msra.mxu0 %v2416
        %2890 = vmatprep.subr.mxu0 %v2421
        %2891 = vmatpush1.msra.mxu0 %v2420
        %2892 = vmatprep.subr.mxu0 %v2425
        %2893 = vmatpush1.msra.mxu0 %v2424
        %2894 = vmatprep.subr.mxu0 %v2429
        %2895 = vmatpush1.msra.mxu0 %v2428
        %2896 = vmatprep.subr.mxu0 %v2433
        %2897 = vmatpush1.msra.mxu0 %v2432
        %2898 = vmatprep.mubr.f32.mxu0 %v2301
        %2899 = vmatmul.mubr.f32.gmra.mrb[0].mxu0 %v2300
        %v2900 = vpop.f32.mrb[0].mxu0
        %v2901 = vadd.f32 %v2735, %v2900
        %v2902 = vpop.f32.mrb[0].mxu0
        %v2903 = vadd.f32 %v2737, %v2902
        %2904 = vmatprep.mubr.f32.mxu0 %v2303
        %2905 = vmatmul.mubr.f32.gmra.mrb[0].mxu0 %v2302
        %v2906 = vpop.f32.mrb[0].mxu0
        %v2907 = vadd.f32 %v2741, %v2906
        %v2908 = vpop.f32.mrb[0].mxu0
        %v2909 = vadd.f32 %v2743, %v2908
        %2910 = vmatprep.mubr.f32.mxu0 %v2305
        %2911 = vmatmul.mubr.f32.gmra.mrb[0].mxu0 %v2304
        %v2912 = vpop.f32.mrb[0].mxu0
        %v2913 = vadd.f32 %v2747, %v2912
        %v2914 = vpop.f32.mrb[0].mxu0
        %v2915 = vadd.f32 %v2749, %v2914
        %2916 = vdwg.mxu0
        %s2917 = scalar_lea.vmem [#allocation22], 2048
        %v2918 = vld [vmem:[%s2917] sm:$0xff]
        %v2919 = vld [vmem:[%s2917 + $0x8] sm:$0xff]
        %v2920 = vld [vmem:[%s2917 + $0x10] sm:$0xff]
        %v2921 = vld [vmem:[%s2917 + $0x18] sm:$0xff]
        %v2922 = vld [vmem:[%s2917 + $0x20] sm:$0xff]
        %v2923 = vld [vmem:[%s2917 + $0x28] sm:$0xff]
        %v2924 = vld [vmem:[%s2917 + $0x30] sm:$0xff]
        %v2925 = vld [vmem:[%s2917 + $0x38] sm:$0xff]
        %v2926 = vld [vmem:[%s2917 + $0x40] sm:$0xff]
        %v2927 = vld [vmem:[%s2917 + $0x48] sm:$0xff]
        %v2928 = vld [vmem:[%s2917 + $0x50] sm:$0xff]
        %v2929 = vld [vmem:[%s2917 + $0x58] sm:$0xff]
        %v2930 = vld [vmem:[%s2917 + $0x60] sm:$0xff]
        %v2931 = vld [vmem:[%s2917 + $0x68] sm:$0xff]
        %v2932 = vld [vmem:[%s2917 + $0x70] sm:$0xff]
        %v2933 = vld [vmem:[%s2917 + $0x78] sm:$0xff]
        %v2934 = vld [vmem:[%s2917 + $0x80] sm:$0xff]
        %v2935 = vld [vmem:[%s2917 + $0x88] sm:$0xff]
        %v2936 = vld [vmem:[%s2917 + $0x90] sm:$0xff]
        %v2937 = vld [vmem:[%s2917 + $0x98] sm:$0xff]
        %v2938 = vld [vmem:[%s2917 + $0xa0] sm:$0xff]
        %v2939 = vld [vmem:[%s2917 + $0xa8] sm:$0xff]
        %v2940 = vld [vmem:[%s2917 + $0xb0] sm:$0xff]
        %v2941 = vld [vmem:[%s2917 + $0xb8] sm:$0xff]
        %v2942 = vld [vmem:[%s2917 + $0xc0] sm:$0xff]
        %v2943 = vld [vmem:[%s2917 + $0xc8] sm:$0xff]
        %v2944 = vld [vmem:[%s2917 + $0xd0] sm:$0xff]
        %v2945 = vld [vmem:[%s2917 + $0xd8] sm:$0xff]
        %v2946 = vld [vmem:[%s2917 + $0xe0] sm:$0xff]
        %v2947 = vld [vmem:[%s2917 + $0xe8] sm:$0xff]
        %v2948 = vld [vmem:[%s2917 + $0xf0] sm:$0xff]
        %v2949 = vld [vmem:[%s2917 + $0xf8] sm:$0xff]
        %v2950 = vld [vmem:[%s2917 + $0x100] sm:$0xff]
        %v2951 = vld [vmem:[%s2917 + $0x108] sm:$0xff]
        %v2952 = vld [vmem:[%s2917 + $0x110] sm:$0xff]
        %v2953 = vld [vmem:[%s2917 + $0x118] sm:$0xff]
        %v2954 = vld [vmem:[%s2917 + $0x120] sm:$0xff]
        %v2955 = vld [vmem:[%s2917 + $0x128] sm:$0xff]
        %v2956 = vld [vmem:[%s2917 + $0x130] sm:$0xff]
        %v2957 = vld [vmem:[%s2917 + $0x138] sm:$0xff]
        %v2958 = vld [vmem:[%s2917 + $0x140] sm:$0xff]
        %v2959 = vld [vmem:[%s2917 + $0x148] sm:$0xff]
        %v2960 = vld [vmem:[%s2917 + $0x150] sm:$0xff]
        %v2961 = vld [vmem:[%s2917 + $0x158] sm:$0xff]
        %v2962 = vld [vmem:[%s2917 + $0x160] sm:$0xff]
        %v2963 = vld [vmem:[%s2917 + $0x168] sm:$0xff]
        %v2964 = vld [vmem:[%s2917 + $0x170] sm:$0xff]
        %v2965 = vld [vmem:[%s2917 + $0x178] sm:$0xff]
        %v2966 = vld [vmem:[%s2917 + $0x180] sm:$0xff]
        %v2967 = vld [vmem:[%s2917 + $0x188] sm:$0xff]
        %v2968 = vld [vmem:[%s2917 + $0x190] sm:$0xff]
        %v2969 = vld [vmem:[%s2917 + $0x198] sm:$0xff]
        %v2970 = vld [vmem:[%s2917 + $0x1a0] sm:$0xff]
        %v2971 = vld [vmem:[%s2917 + $0x1a8] sm:$0xff]
        %v2972 = vld [vmem:[%s2917 + $0x1b0] sm:$0xff]
        %v2973 = vld [vmem:[%s2917 + $0x1b8] sm:$0xff]
        %v2974 = vld [vmem:[%s2917 + $0x1c0] sm:$0xff]
        %v2975 = vld [vmem:[%s2917 + $0x1c8] sm:$0xff]
        %v2976 = vld [vmem:[%s2917 + $0x1d0] sm:$0xff]
        %v2977 = vld [vmem:[%s2917 + $0x1d8] sm:$0xff]
        %v2978 = vld [vmem:[%s2917 + $0x1e0] sm:$0xff]
        %v2979 = vld [vmem:[%s2917 + $0x1e8] sm:$0xff]
        %v2980 = vld [vmem:[%s2917 + $0x1f0] sm:$0xff]
        %v2981 = vld [vmem:[%s2917 + $0x1f8] sm:$0xff]
        %v2982 = vld [vmem:[%s2917 + $0x200] sm:$0xff]
        %v2983 = vld [vmem:[%s2917 + $0x208] sm:$0xff]
        %v2984 = vld [vmem:[%s2917 + $0x210] sm:$0xff]
        %v2985 = vld [vmem:[%s2917 + $0x218] sm:$0xff]
        %v2986 = vld [vmem:[%s2917 + $0x220] sm:$0xff]
        %v2987 = vld [vmem:[%s2917 + $0x228] sm:$0xff]
        %v2988 = vld [vmem:[%s2917 + $0x230] sm:$0xff]
        %v2989 = vld [vmem:[%s2917 + $0x238] sm:$0xff]
        %v2990 = vld [vmem:[%s2917 + $0x240] sm:$0xff]
        %v2991 = vld [vmem:[%s2917 + $0x248] sm:$0xff]
        %v2992 = vld [vmem:[%s2917 + $0x250] sm:$0xff]
        %v2993 = vld [vmem:[%s2917 + $0x258] sm:$0xff]
        %v2994 = vld [vmem:[%s2917 + $0x260] sm:$0xff]
        %v2995 = vld [vmem:[%s2917 + $0x268] sm:$0xff]
        %v2996 = vld [vmem:[%s2917 + $0x270] sm:$0xff]
        %v2997 = vld [vmem:[%s2917 + $0x278] sm:$0xff]
        %v2998 = vld [vmem:[%s2917 + $0x280] sm:$0xff]
        %v2999 = vld [vmem:[%s2917 + $0x288] sm:$0xff]
        %v3000 = vld [vmem:[%s2917 + $0x290] sm:$0xff]
        %v3001 = vld [vmem:[%s2917 + $0x298] sm:$0xff]
        %v3002 = vld [vmem:[%s2917 + $0x2a0] sm:$0xff]
        %v3003 = vld [vmem:[%s2917 + $0x2a8] sm:$0xff]
        %v3004 = vld [vmem:[%s2917 + $0x2b0] sm:$0xff]
        %v3005 = vld [vmem:[%s2917 + $0x2b8] sm:$0xff]
        %v3006 = vld [vmem:[%s2917 + $0x2c0] sm:$0xff]
        %v3007 = vld [vmem:[%s2917 + $0x2c8] sm:$0xff]
        %v3008 = vld [vmem:[%s2917 + $0x2d0] sm:$0xff]
        %v3009 = vld [vmem:[%s2917 + $0x2d8] sm:$0xff]
        %v3010 = vld [vmem:[%s2917 + $0x2e0] sm:$0xff]
        %v3011 = vld [vmem:[%s2917 + $0x2e8] sm:$0xff]
        %v3012 = vld [vmem:[%s2917 + $0x2f0] sm:$0xff]
        %v3013 = vld [vmem:[%s2917 + $0x2f8] sm:$0xff]
        %v3014 = vld [vmem:[%s2917 + $0x300] sm:$0xff]
        %v3015 = vld [vmem:[%s2917 + $0x308] sm:$0xff]
        %v3016 = vld [vmem:[%s2917 + $0x310] sm:$0xff]
        %v3017 = vld [vmem:[%s2917 + $0x318] sm:$0xff]
        %v3018 = vld [vmem:[%s2917 + $0x320] sm:$0xff]
        %v3019 = vld [vmem:[%s2917 + $0x328] sm:$0xff]
        %v3020 = vld [vmem:[%s2917 + $0x330] sm:$0xff]
        %v3021 = vld [vmem:[%s2917 + $0x338] sm:$0xff]
        %v3022 = vld [vmem:[%s2917 + $0x340] sm:$0xff]
        %v3023 = vld [vmem:[%s2917 + $0x348] sm:$0xff]
        %v3024 = vld [vmem:[%s2917 + $0x350] sm:$0xff]
        %v3025 = vld [vmem:[%s2917 + $0x358] sm:$0xff]
        %v3026 = vld [vmem:[%s2917 + $0x360] sm:$0xff]
        %v3027 = vld [vmem:[%s2917 + $0x368] sm:$0xff]
        %v3028 = vld [vmem:[%s2917 + $0x370] sm:$0xff]
        %v3029 = vld [vmem:[%s2917 + $0x378] sm:$0xff]
        %v3030 = vld [vmem:[%s2917 + $0x380] sm:$0xff]
        %v3031 = vld [vmem:[%s2917 + $0x388] sm:$0xff]
        %v3032 = vld [vmem:[%s2917 + $0x390] sm:$0xff]
        %v3033 = vld [vmem:[%s2917 + $0x398] sm:$0xff]
        %v3034 = vld [vmem:[%s2917 + $0x3a0] sm:$0xff]
        %v3035 = vld [vmem:[%s2917 + $0x3a8] sm:$0xff]
        %v3036 = vld [vmem:[%s2917 + $0x3b0] sm:$0xff]
        %v3037 = vld [vmem:[%s2917 + $0x3b8] sm:$0xff]
        %v3038 = vld [vmem:[%s2917 + $0x3c0] sm:$0xff]
        %v3039 = vld [vmem:[%s2917 + $0x3c8] sm:$0xff]
        %v3040 = vld [vmem:[%s2917 + $0x3d0] sm:$0xff]
        %v3041 = vld [vmem:[%s2917 + $0x3d8] sm:$0xff]
        %v3042 = vld [vmem:[%s2917 + $0x3e0] sm:$0xff]
        %v3043 = vld [vmem:[%s2917 + $0x3e8] sm:$0xff]
        %v3044 = vld [vmem:[%s2917 + $0x3f0] sm:$0xff]
        %v3045 = vld [vmem:[%s2917 + $0x3f8] sm:$0xff]
        %v3046 = vrot.slane %v2300, 2
        %v3047 = vrot.slane %v2302, 2
        %v3048 = vsel %vm871, %v3046, %v3047
        %v3049 = vrot.slane %v2301, 2
        %v3050 = vrot.slane %v2303, 2
        %v3051 = vsel %vm871, %v3049, %v3050
        %v3052 = vrot.slane %v2304, 2
        %v3053 = vsel %vm871, %v3047, %v3052
        %v3054 = vrot.slane %v2305, 2
        %v3055 = vsel %vm871, %v3050, %v3054
        %3062 = vmatprep.subr.mxu0 %v2919
        %3063 = vmatpush1.msra.mxu0 %v2918
        %3064 = vmatprep.subr.mxu0 %v2923
        %3065 = vmatpush1.msra.mxu0 %v2922
        %3066 = vmatprep.subr.mxu0 %v2927
        %3067 = vmatpush1.msra.mxu0 %v2926
        %3068 = vmatprep.subr.mxu0 %v2931
        %3069 = vmatpush1.msra.mxu0 %v2930
        %3070 = vmatprep.subr.mxu0 %v2935
        %3071 = vmatpush1.msra.mxu0 %v2934
        %3072 = vmatprep.subr.mxu0 %v2939
        %3073 = vmatpush1.msra.mxu0 %v2938
        %3074 = vmatprep.subr.mxu0 %v2943
        %3075 = vmatpush1.msra.mxu0 %v2942
        %3076 = vmatprep.subr.mxu0 %v2947
        %3077 = vmatpush1.msra.mxu0 %v2946
        %3078 = vmatprep.subr.mxu0 %v2951
        %3079 = vmatpush1.msra.mxu0 %v2950
        %3080 = vmatprep.subr.mxu0 %v2955
        %3081 = vmatpush1.msra.mxu0 %v2954
        %3082 = vmatprep.subr.mxu0 %v2959
        %3083 = vmatpush1.msra.mxu0 %v2958
        %3084 = vmatprep.subr.mxu0 %v2963
        %3085 = vmatpush1.msra.mxu0 %v2962
        %3086 = vmatprep.subr.mxu0 %v2967
        %3087 = vmatpush1.msra.mxu0 %v2966
        %3088 = vmatprep.subr.mxu0 %v2971
        %3089 = vmatpush1.msra.mxu0 %v2970
        %3090 = vmatprep.subr.mxu0 %v2975
        %3091 = vmatpush1.msra.mxu0 %v2974
        %3092 = vmatprep.subr.mxu0 %v2979
        %3093 = vmatpush1.msra.mxu0 %v2978
        %3094 = vmatprep.subr.mxu0 %v2983
        %3095 = vmatpush1.msra.mxu0 %v2982
        %3096 = vmatprep.subr.mxu0 %v2987
        %3097 = vmatpush1.msra.mxu0 %v2986
        %3098 = vmatprep.subr.mxu0 %v2991
        %3099 = vmatpush1.msra.mxu0 %v2990
        %3100 = vmatprep.subr.mxu0 %v2995
        %3101 = vmatpush1.msra.mxu0 %v2994
        %3102 = vmatprep.subr.mxu0 %v2999
        %3103 = vmatpush1.msra.mxu0 %v2998
        %3104 = vmatprep.subr.mxu0 %v3003
        %3105 = vmatpush1.msra.mxu0 %v3002
        %3106 = vmatprep.subr.mxu0 %v3007
        %3107 = vmatpush1.msra.mxu0 %v3006
        %3108 = vmatprep.subr.mxu0 %v3011
        %3109 = vmatpush1.msra.mxu0 %v3010
        %3110 = vmatprep.subr.mxu0 %v3015
        %3111 = vmatpush1.msra.mxu0 %v3014
        %3112 = vmatprep.subr.mxu0 %v3019
        %3113 = vmatpush1.msra.mxu0 %v3018
        %3114 = vmatprep.subr.mxu0 %v3023
        %3115 = vmatpush1.msra.mxu0 %v3022
        %3116 = vmatprep.subr.mxu0 %v3027
        %3117 = vmatpush1.msra.mxu0 %v3026
        %3118 = vmatprep.subr.mxu0 %v3031
        %3119 = vmatpush1.msra.mxu0 %v3030
        %3120 = vmatprep.subr.mxu0 %v3035
        %3121 = vmatpush1.msra.mxu0 %v3034
        %3122 = vmatprep.subr.mxu0 %v3039
        %3123 = vmatpush1.msra.mxu0 %v3038
        %3124 = vmatprep.subr.mxu0 %v3043
        %3125 = vmatpush1.msra.mxu0 %v3042
        %3126 = vmatprep.mubr.f32.mxu0 %v3051
        %3127 = vmatmul.mubr.f32.gmra.mrb[0].mxu0 %v3048
        %v3128 = vpop.f32.mrb[0].mxu0
        %v3129 = vadd.f32 0.0, %v3128
        %v3130 = vpop.f32.mrb[0].mxu0
        %v3131 = vadd.f32 0.0, %v3130
        %3132 = vmatprep.mubr.f32.mxu0 %v3055
        %3133 = vmatmul.mubr.f32.gmra.mrb[0].mxu0 %v3053
        %v3134 = vpop.f32.mrb[0].mxu0
        %v3135 = vadd.f32 0.0, %v3134
        %v3136 = vpop.f32.mrb[0].mxu0
        %v3137 = vadd.f32 0.0, %v3136
        %3138 = vmatprep.mubr.f32.mxu0 %v3054
        %3139 = vmatmul.mubr.f32.gmra.mrb[0].mxu0 %v3052
        %v3140 = vpop.f32.mrb[0].mxu0
        %v3141 = vadd.f32 0.0, %v3140
        %v3142 = vpop.f32.mrb[0].mxu0
        %v3143 = vadd.f32 0.0, %v3142
        %3144 = vdwg.mxu0
        %3145 = vmatprep.subr.mxu0 %v2921
        %3146 = vmatpush1.msra.mxu0 %v2920
        %3147 = vmatprep.subr.mxu0 %v2925
        %3148 = vmatpush1.msra.mxu0 %v2924
        %3149 = vmatprep.subr.mxu0 %v2929
        %3150 = vmatpush1.msra.mxu0 %v2928
        %3151 = vmatprep.subr.mxu0 %v2933
        %3152 = vmatpush1.msra.mxu0 %v2932
        %3153 = vmatprep.subr.mxu0 %v2937
        %3154 = vmatpush1.msra.mxu0 %v2936
        %3155 = vmatprep.subr.mxu0 %v2941
        %3156 = vmatpush1.msra.mxu0 %v2940
        %3157 = vmatprep.subr.mxu0 %v2945
        %3158 = vmatpush1.msra.mxu0 %v2944
        %3159 = vmatprep.subr.mxu0 %v2949
        %3160 = vmatpush1.msra.mxu0 %v2948
        %3161 = vmatprep.subr.mxu0 %v2953
        %3162 = vmatpush1.msra.mxu0 %v2952
        %3163 = vmatprep.subr.mxu0 %v2957
        %3164 = vmatpush1.msra.mxu0 %v2956
        %3165 = vmatprep.subr.mxu0 %v2961
        %3166 = vmatpush1.msra.mxu0 %v2960
        %3167 = vmatprep.subr.mxu0 %v2965
        %3168 = vmatpush1.msra.mxu0 %v2964
        %3169 = vmatprep.subr.mxu0 %v2969
        %3170 = vmatpush1.msra.mxu0 %v2968
        %3171 = vmatprep.subr.mxu0 %v2973
        %3172 = vmatpush1.msra.mxu0 %v2972
        %3173 = vmatprep.subr.mxu0 %v2977
        %3174 = vmatpush1.msra.mxu0 %v2976
        %3175 = vmatprep.subr.mxu0 %v2981
        %3176 = vmatpush1.msra.mxu0 %v2980
        %3177 = vmatprep.subr.mxu0 %v2985
        %3178 = vmatpush1.msra.mxu0 %v2984
        %3179 = vmatprep.subr.mxu0 %v2989
        %3180 = vmatpush1.msra.mxu0 %v2988
        %3181 = vmatprep.subr.mxu0 %v2993
        %3182 = vmatpush1.msra.mxu0 %v2992
        %3183 = vmatprep.subr.mxu0 %v2997
        %3184 = vmatpush1.msra.mxu0 %v2996
        %3185 = vmatprep.subr.mxu0 %v3001
        %3186 = vmatpush1.msra.mxu0 %v3000
        %3187 = vmatprep.subr.mxu0 %v3005
        %3188 = vmatpush1.msra.mxu0 %v3004
        %3189 = vmatprep.subr.mxu0 %v3009
        %3190 = vmatpush1.msra.mxu0 %v3008
        %3191 = vmatprep.subr.mxu0 %v3013
        %3192 = vmatpush1.msra.mxu0 %v3012
        %3193 = vmatprep.subr.mxu0 %v3017
        %3194 = vmatpush1.msra.mxu0 %v3016
        %3195 = vmatprep.subr.mxu0 %v3021
        %3196 = vmatpush1.msra.mxu0 %v3020
        %3197 = vmatprep.subr.mxu0 %v3025
        %3198 = vmatpush1.msra.mxu0 %v3024
        %3199 = vmatprep.subr.mxu0 %v3029
        %3200 = vmatpush1.msra.mxu0 %v3028
        %3201 = vmatprep.subr.mxu0 %v3033
        %3202 = vmatpush1.msra.mxu0 %v3032
        %3203 = vmatprep.subr.mxu0 %v3037
        %3204 = vmatpush1.msra.mxu0 %v3036
        %3205 = vmatprep.subr.mxu0 %v3041
        %3206 = vmatpush1.msra.mxu0 %v3040
        %3207 = vmatprep.subr.mxu0 %v3045
        %3208 = vmatpush1.msra.mxu0 %v3044
        %3209 = vmatprep.mubr.f32.mxu0 %v3051
        %3210 = vmatmul.mubr.f32.gmra.mrb[0].mxu0 %v3048
        %v3211 = vpop.f32.mrb[0].mxu0
        %v3212 = vadd.f32 0.0, %v3211
        %v3213 = vpop.f32.mrb[0].mxu0
        %v3214 = vadd.f32 0.0, %v3213
        %3215 = vmatprep.mubr.f32.mxu0 %v3055
        %3216 = vmatmul.mubr.f32.gmra.mrb[0].mxu0 %v3053
        %v3217 = vpop.f32.mrb[0].mxu0
        %v3218 = vadd.f32 0.0, %v3217
        %v3219 = vpop.f32.mrb[0].mxu0
        %v3220 = vadd.f32 0.0, %v3219
        %3221 = vmatprep.mubr.f32.mxu0 %v3054
        %3222 = vmatmul.mubr.f32.gmra.mrb[0].mxu0 %v3052
        %v3223 = vpop.f32.mrb[0].mxu0
        %v3224 = vadd.f32 0.0, %v3223
        %v3225 = vpop.f32.mrb[0].mxu0
        %v3226 = vadd.f32 0.0, %v3225
        %3227 = vdwg.mxu0
        %v3228 = vadd.f32 %v2818, %v3129
        %v3229 = vadd.f32 %v2820, %v3131
        %v3230 = vadd.f32 %v2901, %v3212
        %v3231 = vadd.f32 %v2903, %v3214
        %v3232 = vadd.f32 %v2824, %v3135
        %v3233 = vadd.f32 %v2826, %v3137
        %v3234 = vadd.f32 %v2907, %v3218
        %v3235 = vadd.f32 %v2909, %v3220
        %v3236 = vadd.f32 %v2830, %v3141
        %v3237 = vadd.f32 %v2832, %v3143
        %v3238 = vadd.f32 %v2913, %v3224
        %v3239 = vadd.f32 %v2915, %v3226
        %v3240 = vld [vmem:[#allocation23] sm:$0xf]
        %v3242 = vlaneseq
        %v3243 = vshrl.u32 %v3242, 7
        %v3244 = vsub.s32 0, %v3243
        %v3245 = vrot.slane %v3240, %v3244
        %v3246 = vlaneseq
        %v3247 = vshrl.u32 %v3246, 7
        %v3248 = vsub.s32 1, %v3247
        %v3249 = vrot.slane %v3240, %v3248
        %v3250 = vlaneseq
        %v3251 = vshrl.u32 %v3250, 7
        %v3252 = vsub.s32 2, %v3251
        %v3253 = vrot.slane %v3240, %v3252
        %v3254 = vlaneseq
        %v3255 = vshrl.u32 %v3254, 7
        %v3256 = vsub.s32 3, %v3255
        %v3257 = vrot.slane %v3240, %v3256
        %v3262 = vmul.f32 %v3228, %v3245
        %v3263 = vmul.f32 %v3229, %v3249
        %v3264 = vmul.f32 %v3230, %v3253
        %v3265 = vmul.f32 %v3231, %v3257
        %v3266 = vmul.f32 %v3232, %v3245
        %v3267 = vmul.f32 %v3233, %v3249
        %v3268 = vmul.f32 %v3234, %v3253
        %v3269 = vmul.f32 %v3235, %v3257
        %v3270 = vmul.f32 %v3236, %v3245
        %v3271 = vmul.f32 %v3237, %v3249
        %v3272 = vmul.f32 %v3238, %v3253
        %v3273 = vmul.f32 %v3239, %v3257
        %v3274 = vld [vmem:[#allocation25] sm:$0xf]
        %v3276 = vlaneseq
        %v3277 = vshrl.u32 %v3276, 7
        %v3278 = vsub.s32 0, %v3277
        %v3279 = vrot.slane %v3274, %v3278
        %v3280 = vlaneseq
        %v3281 = vshrl.u32 %v3280, 7
        %v3282 = vsub.s32 1, %v3281
        %v3283 = vrot.slane %v3274, %v3282
        %v3284 = vlaneseq
        %v3285 = vshrl.u32 %v3284, 7
        %v3286 = vsub.s32 2, %v3285
        %v3287 = vrot.slane %v3274, %v3286
        %v3288 = vlaneseq
        %v3289 = vshrl.u32 %v3288, 7
        %v3290 = vsub.s32 3, %v3289
        %v3291 = vrot.slane %v3274, %v3290
        %v3296 = vadd.f32 %v3262, %v3279
        %v3297 = vadd.f32 %v3263, %v3283
        %v3298 = vadd.f32 %v3264, %v3287
        %v3299 = vadd.f32 %v3265, %v3291
        %v3300 = vadd.f32 %v3266, %v3279
        %v3301 = vadd.f32 %v3267, %v3283
        %v3302 = vadd.f32 %v3268, %v3287
        %v3303 = vadd.f32 %v3269, %v3291
        %v3304 = vadd.f32 %v3270, %v3279
        %v3305 = vadd.f32 %v3271, %v3283
        %v3306 = vadd.f32 %v3272, %v3287
        %v3307 = vadd.f32 %v3273, %v3291
        %v3308 = vmax.f32 %v3296, 0.0
        %v3309 = vmax.f32 %v3297, 0.0
        %v3310 = vmax.f32 %v3298, 0.0
        %v3311 = vmax.f32 %v3299, 0.0
        %v3312 = vmax.f32 %v3300, 0.0
        %v3313 = vmax.f32 %v3301, 0.0
        %v3314 = vmax.f32 %v3302, 0.0
        %v3315 = vmax.f32 %v3303, 0.0
        %v3316 = vmax.f32 %v3304, 0.0
        %v3317 = vmax.f32 %v3305, 0.0
        %v3318 = vmax.f32 %v3306, 0.0
        %v3319 = vmax.f32 %v3307, 0.0
        %v3320 = vlaneseq
        %v3321 = vshrl.u32 %v3320, 7
        %v3322 = vadd.s32 %v3321, 8
        %v3323 = vadd.s32 %v3321, 16
        %vm3324 = vcmp.ge.s32.totalorder %v3321, 0
        %vm3325 = vcmp.ge.s32.totalorder %v3322, 0
        %vm3326 = vcmp.ge.s32.totalorder %v3323, 0
        %vm3327 = vcmp.lt.s32.totalorder %v3321, 6
        %vm3328 = vcmp.lt.s32.totalorder %v3322, 6
        %vm3329 = vcmp.lt.s32.totalorder %v3323, 6
        %vm3330 = vmand %vm3324, %vm3327
        %vm3331 = vmand %vm3325, %vm3328
        %vm3332 = vmand %vm3326, %vm3329
        %v3333 = vsel %vm3330, %v3308, -inf
        %v3334 = vsel %vm3330, %v3309, -inf
        %v3335 = vsel %vm3330, %v3310, -inf
        %v3336 = vsel %vm3330, %v3311, -inf
        %v3337 = vsel %vm3331, %v3312, -inf
        %v3338 = vsel %vm3331, %v3313, -inf
        %v3339 = vsel %vm3331, %v3314, -inf
        %v3340 = vsel %vm3331, %v3315, -inf
        %v3341 = vsel %vm3332, %v3316, -inf
        %v3342 = vsel %vm3332, %v3317, -inf
        %v3343 = vsel %vm3332, %v3318, -inf
        %v3344 = vsel %vm3332, %v3319, -inf
        %v3345 = vmax.f32 %v3333, %v3337
        %v3346 = vsel %vm927, %v3341, -inf
        %v3347 = vmax.f32 %v3345, %v3346
        %v3348 = vrot.slane %v3347, 4
        %v3349 = vmax.f32 %v3347, %v3348
        %v3350 = vrot.slane %v3349, 2
        %v3351 = vmax.f32 %v3349, %v3350
        %v3352 = vrot.slane %v3351, 1
        %v3353 = vmax.f32 %v3351, %v3352
        %v3354 = vmax.f32 %v3334, %v3338
        %v3355 = vsel %vm927, %v3342, -inf
        %v3356 = vmax.f32 %v3354, %v3355
        %v3357 = vrot.slane %v3356, 4
        %v3358 = vmax.f32 %v3356, %v3357
        %v3359 = vrot.slane %v3358, 2
        %v3360 = vmax.f32 %v3358, %v3359
        %v3361 = vrot.slane %v3360, 1
        %v3362 = vmax.f32 %v3360, %v3361
        %v3363 = vmax.f32 %v3335, %v3339
        %v3364 = vsel %vm927, %v3343, -inf
        %v3365 = vmax.f32 %v3363, %v3364
        %v3366 = vrot.slane %v3365, 4
        %v3367 = vmax.f32 %v3365, %v3366
        %v3368 = vrot.slane %v3367, 2
        %v3369 = vmax.f32 %v3367, %v3368
        %v3370 = vrot.slane %v3369, 1
        %v3371 = vmax.f32 %v3369, %v3370
        %v3372 = vmax.f32 %v3336, %v3340
        %v3373 = vsel %vm927, %v3344, -inf
        %v3374 = vmax.f32 %v3372, %v3373
        %v3375 = vrot.slane %v3374, 4
        %v3376 = vmax.f32 %v3374, %v3375
        %v3377 = vrot.slane %v3376, 2
        %v3378 = vmax.f32 %v3376, %v3377
        %v3379 = vrot.slane %v3378, 1
        %v3380 = vmax.f32 %v3378, %v3379
        %vm3381 = vcmp.ge.s32.totalorder %v3321, 5
        %vm3382 = vcmp.ge.s32.totalorder %v3322, 5
        %vm3383 = vcmp.ge.s32.totalorder %v3323, 5
        %vm3384 = vcmp.lt.s32.totalorder %v3321, 11
        %vm3385 = vcmp.lt.s32.totalorder %v3322, 11
        %vm3386 = vcmp.lt.s32.totalorder %v3323, 11
        %vm3387 = vmand %vm3381, %vm3384
        %vm3388 = vmand %vm3382, %vm3385
        %vm3389 = vmand %vm3383, %vm3386
        %v3390 = vsel %vm3387, %v3308, -inf
        %v3391 = vsel %vm3387, %v3309, -inf
        %v3392 = vsel %vm3387, %v3310, -inf
        %v3393 = vsel %vm3387, %v3311, -inf
        %v3394 = vsel %vm3388, %v3312, -inf
        %v3395 = vsel %vm3388, %v3313, -inf
        %v3396 = vsel %vm3388, %v3314, -inf
        %v3397 = vsel %vm3388, %v3315, -inf
        %v3398 = vsel %vm3389, %v3316, -inf
        %v3399 = vsel %vm3389, %v3317, -inf
        %v3400 = vsel %vm3389, %v3318, -inf
        %v3401 = vsel %vm3389, %v3319, -inf
        %v3402 = vmax.f32 %v3390, %v3394
        %v3403 = vsel %vm927, %v3398, -inf
        %v3404 = vmax.f32 %v3402, %v3403
        %v3405 = vrot.slane %v3404, 4
        %v3406 = vmax.f32 %v3404, %v3405
        %v3407 = vrot.slane %v3406, 2
        %v3408 = vmax.f32 %v3406, %v3407
        %v3409 = vrot.slane %v3408, 1
        %v3410 = vmax.f32 %v3408, %v3409
        %v3411 = vmax.f32 %v3391, %v3395
        %v3412 = vsel %vm927, %v3399, -inf
        %v3413 = vmax.f32 %v3411, %v3412
        %v3414 = vrot.slane %v3413, 4
        %v3415 = vmax.f32 %v3413, %v3414
        %v3416 = vrot.slane %v3415, 2
        %v3417 = vmax.f32 %v3415, %v3416
        %v3418 = vrot.slane %v3417, 1
        %v3419 = vmax.f32 %v3417, %v3418
        %v3420 = vmax.f32 %v3392, %v3396
        %v3421 = vsel %vm927, %v3400, -inf
        %v3422 = vmax.f32 %v3420, %v3421
        %v3423 = vrot.slane %v3422, 4
        %v3424 = vmax.f32 %v3422, %v3423
        %v3425 = vrot.slane %v3424, 2
        %v3426 = vmax.f32 %v3424, %v3425
        %v3427 = vrot.slane %v3426, 1
        %v3428 = vmax.f32 %v3426, %v3427
        %v3429 = vmax.f32 %v3393, %v3397
        %v3430 = vsel %vm927, %v3401, -inf
        %v3431 = vmax.f32 %v3429, %v3430
        %v3432 = vrot.slane %v3431, 4
        %v3433 = vmax.f32 %v3431, %v3432
        %v3434 = vrot.slane %v3433, 2
        %v3435 = vmax.f32 %v3433, %v3434
        %v3436 = vrot.slane %v3435, 1
        %v3437 = vmax.f32 %v3435, %v3436
        %vm3438 = vcmp.ge.s32.totalorder %v3321, 10
        %vm3439 = vcmp.ge.s32.totalorder %v3322, 10
        %vm3440 = vcmp.ge.s32.totalorder %v3323, 10
        %vm3441 = vcmp.lt.s32.totalorder %v3321, 16
        %vm3442 = vcmp.lt.s32.totalorder %v3322, 16
        %vm3443 = vcmp.lt.s32.totalorder %v3323, 16
        %vm3444 = vmand %vm3438, %vm3441
        %vm3445 = vmand %vm3439, %vm3442
        %vm3446 = vmand %vm3440, %vm3443
        %v3447 = vsel %vm3444, %v3308, -inf
        %v3448 = vsel %vm3444, %v3309, -inf
        %v3449 = vsel %vm3444, %v3310, -inf
        %v3450 = vsel %vm3444, %v3311, -inf
        %v3451 = vsel %vm3445, %v3312, -inf
        %v3452 = vsel %vm3445, %v3313, -inf
        %v3453 = vsel %vm3445, %v3314, -inf
        %v3454 = vsel %vm3445, %v3315, -inf
        %v3455 = vsel %vm3446, %v3316, -inf
        %v3456 = vsel %vm3446, %v3317, -inf
        %v3457 = vsel %vm3446, %v3318, -inf
        %v3458 = vsel %vm3446, %v3319, -inf
        %v3459 = vmax.f32 %v3447, %v3451
        %v3460 = vsel %vm927, %v3455, -inf
        %v3461 = vmax.f32 %v3459, %v3460
        %v3462 = vrot.slane %v3461, 4
        %v3463 = vmax.f32 %v3461, %v3462
        %v3464 = vrot.slane %v3463, 2
        %v3465 = vmax.f32 %v3463, %v3464
        %v3466 = vrot.slane %v3465, 1
        %v3467 = vmax.f32 %v3465, %v3466
        %v3468 = vmax.f32 %v3448, %v3452
        %v3469 = vsel %vm927, %v3456, -inf
        %v3470 = vmax.f32 %v3468, %v3469
        %v3471 = vrot.slane %v3470, 4
        %v3472 = vmax.f32 %v3470, %v3471
        %v3473 = vrot.slane %v3472, 2
        %v3474 = vmax.f32 %v3472, %v3473
        %v3475 = vrot.slane %v3474, 1
        %v3476 = vmax.f32 %v3474, %v3475
        %v3477 = vmax.f32 %v3449, %v3453
        %v3478 = vsel %vm927, %v3457, -inf
        %v3479 = vmax.f32 %v3477, %v3478
        %v3480 = vrot.slane %v3479, 4
        %v3481 = vmax.f32 %v3479, %v3480
        %v3482 = vrot.slane %v3481, 2
        %v3483 = vmax.f32 %v3481, %v3482
        %v3484 = vrot.slane %v3483, 1
        %v3485 = vmax.f32 %v3483, %v3484
        %v3486 = vmax.f32 %v3450, %v3454
        %v3487 = vsel %vm927, %v3458, -inf
        %v3488 = vmax.f32 %v3486, %v3487
        %v3489 = vrot.slane %v3488, 4
        %v3490 = vmax.f32 %v3488, %v3489
        %v3491 = vrot.slane %v3490, 2
        %v3492 = vmax.f32 %v3490, %v3491
        %v3493 = vrot.slane %v3492, 1
        %v3494 = vmax.f32 %v3492, %v3493
        %vm3495 = vcmp.ge.s32.totalorder %v3321, 15
        %vm3496 = vcmp.ge.s32.totalorder %v3322, 15
        %vm3497 = vcmp.ge.s32.totalorder %v3323, 15
        %vm3498 = vcmp.lt.s32.totalorder %v3321, 21
        %vm3499 = vcmp.lt.s32.totalorder %v3322, 21
        %vm3500 = vcmp.lt.s32.totalorder %v3323, 21
        %vm3501 = vmand %vm3495, %vm3498
        %vm3502 = vmand %vm3496, %vm3499
        %vm3503 = vmand %vm3497, %vm3500
        %v3504 = vsel %vm3501, %v3308, -inf
        %v3505 = vsel %vm3501, %v3309, -inf
        %v3506 = vsel %vm3501, %v3310, -inf
        %v3507 = vsel %vm3501, %v3311, -inf
        %v3508 = vsel %vm3502, %v3312, -inf
        %v3509 = vsel %vm3502, %v3313, -inf
        %v3510 = vsel %vm3502, %v3314, -inf
        %v3511 = vsel %vm3502, %v3315, -inf
        %v3512 = vsel %vm3503, %v3316, -inf
        %v3513 = vsel %vm3503, %v3317, -inf
        %v3514 = vsel %vm3503, %v3318, -inf
        %v3515 = vsel %vm3503, %v3319, -inf
        %v3516 = vmax.f32 %v3504, %v3508
        %v3517 = vsel %vm927, %v3512, -inf
        %v3518 = vmax.f32 %v3516, %v3517
        %v3519 = vrot.slane %v3518, 4
        %v3520 = vmax.f32 %v3518, %v3519
        %v3521 = vrot.slane %v3520, 2
        %v3522 = vmax.f32 %v3520, %v3521
        %v3523 = vrot.slane %v3522, 1
        %v3524 = vmax.f32 %v3522, %v3523
        %v3525 = vmax.f32 %v3505, %v3509
        %v3526 = vsel %vm927, %v3513, -inf
        %v3527 = vmax.f32 %v3525, %v3526
        %v3528 = vrot.slane %v3527, 4
        %v3529 = vmax.f32 %v3527, %v3528
        %v3530 = vrot.slane %v3529, 2
        %v3531 = vmax.f32 %v3529, %v3530
        %v3532 = vrot.slane %v3531, 1
        %v3533 = vmax.f32 %v3531, %v3532
        %v3534 = vmax.f32 %v3506, %v3510
        %v3535 = vsel %vm927, %v3514, -inf
        %v3536 = vmax.f32 %v3534, %v3535
        %v3537 = vrot.slane %v3536, 4
        %v3538 = vmax.f32 %v3536, %v3537
        %v3539 = vrot.slane %v3538, 2
        %v3540 = vmax.f32 %v3538, %v3539
        %v3541 = vrot.slane %v3540, 1
        %v3542 = vmax.f32 %v3540, %v3541
        %v3543 = vmax.f32 %v3507, %v3511
        %v3544 = vsel %vm927, %v3515, -inf
        %v3545 = vmax.f32 %v3543, %v3544
        %v3546 = vrot.slane %v3545, 4
        %v3547 = vmax.f32 %v3545, %v3546
        %v3548 = vrot.slane %v3547, 2
        %v3549 = vmax.f32 %v3547, %v3548
        %v3550 = vrot.slane %v3549, 1
        %v3551 = vmax.f32 %v3549, %v3550
        %vm3552 = vcmask 1040384
        %v3553 = vsel %vm3552, %v3353, %v3410
        %v3554 = vsel %vm3552, %v3362, %v3419
        %v3555 = vsel %vm3552, %v3371, %v3428
        %v3556 = vsel %vm3552, %v3380, %v3437
        %v3557 = vsel %vm1095, %v3553, %v3467
        %v3558 = vsel %vm1095, %v3554, %v3476
        %v3559 = vsel %vm1095, %v3555, %v3485
        %v3560 = vsel %vm1095, %v3556, %v3494
        %v3561 = vsel %vm1039, %v3557, %v3524
        %v3562 = vsel %vm1039, %v3558, %v3533
        %v3563 = vsel %vm1039, %v3559, %v3542
        %v3564 = vsel %vm1039, %v3560, %v3551
        %v3569 = vcombine.low %v3561, %v3562
        %v3570 = vcombine.low %v3563, %v3564
        %3573 = vst [vmem:[%s719] sm:$0xff] %v3569
        %3574 = vst [vmem:[%s719 + $0x8] sm:$0xff] %v3570
        %p3575 = scmp.lt.s32.totalorder %s35, 1
        %s3576 = scalar_select %p3575, %s35, 1
        %s3577 = smul.addr %s3576, 4
        %s3578 = smul.addr %s3577, 4
        %s3579 = scalar_lea.vmem %s16, %s3578
        // Predicated region
        $region145: #{feature_extractor.1} parent=83 // pred_check
          %p3580 = pneg %p394
        $region146: #{feature_extractor.1} parent=83 // pred_check_branch
          %3582 = sbr.rel (%p3580) target = $region148
        $region147: #{feature_extractor.1} parent=83 // pred_region
          _
        $region148: #{feature_extractor.1} parent=83 // pred_fallthru
          _
      $region84: #{feature_extractor.1} parent=5 // pred_fallthru
        _
      %p3583 = scmp.le.s32.totalorder 2, %s30
      // Predicated region
      $region149: #{feature_extractor.1} parent=5 // pred_check
        %p3584 = pneg %p3583
      $region150: #{feature_extractor.1} parent=5 // pred_check_branch
        %3586 = sbr.rel (%p3584) target = $region152
      $region151: #{feature_extractor.1} parent=5 // pred_region
        %s3587 = ssub.s32 %s30, 2
        // Predicated region
        $region153: #{feature_extractor.1} parent=151 // pred_check
          %p3588 = pneg %p400
        $region154: #{feature_extractor.1} parent=151 // pred_check_branch
          %3590 = sbr.rel (%p3588) target = $region156
        $region155: #{feature_extractor.1} parent=151 // pred_region
          %p3591 = scmp.lt.s32.totalorder %s36, 1
          %s3592 = scalar_select %p3591, %s36, 1
          %s3593 = smul.addr %s3592, 4
          %s3594 = smul.addr %s3593, 4
          %s3595 = scalar_lea.vmem %s16, %s3594
        $region156: #{feature_extractor.1} parent=151 // pred_fallthru
          _
      $region152: #{feature_extractor.1} parent=5 // pred_fallthru
        _
    $region6: #{feature_extractor.1} parent=1 // loop_footer
      %s34 = sadd.s32 1, %s30
    $region7: #{feature_extractor.1} parent=1 // loop_footer_branch
      %29 = sbr.rel target = $region3
    $region8: #{feature_extractor.1} parent=1 // loop_exit
      _
    %3596 = vsyncpa [#allocation4], 1
    %s3597 = scalar_lea.sflag [#allocation4], 1
    %3598 = vsyncpa %s3597, 1
    %3599 = vsyncpa [#allocation6], 1
    %3600 = vsyncpa [#allocation9], 1
    %3601 = vsyncpa [#allocation12], 1
    %3602 = vsyncpa [#allocation15], 1
    %3603 = vsyncpa [#allocation18], 1
    %3604 = vsyncpa [#allocation21], 1
    %3605 = vsyncpa [#allocation24], 1

</llo_original>
